<compile_context>
chip_gen: v7x
topology: tpu7x:2x2x1
jax: 0.10.0
libtpu: 0.0.40
codegen_flags: <defaults>
</compile_context>

<pallas_src>
import functools

import jax
import jax.numpy as jnp
from jax import lax
from jax.experimental import pallas as pl
from jax.experimental.pallas import tpu as pltpu


# ------------------------------ small helpers -------------------------------

def _round_up(n, m):
    return ((n + m - 1) // m) * m


def _pick_block(total, cap, quantum=1):
    """Largest divisor of `total` that is <= cap and (multiple of quantum or == total)."""
    cap = max(1, min(total, cap))
    for d in range(cap, 0, -1):
        if total % d == 0 and (d % quantum == 0 or d == total):
            return d
    return total


def _pick_row_tile(H, W, target_rows=2048):
    """Row-tile TH: TH | H, TH >= 2 (two-block halo), TH*W ~<= target, TH*W % 8 == 0."""
    cap = max(2, target_rows // max(W, 1))
    for d in range(min(cap, H), 1, -1):
        if H % d == 0 and (d * W) % 8 == 0:
            return d
    for d in range(2, H + 1):
        if H % d == 0 and (d * W) % 8 == 0:
            return d
    return H


# ------------------------------ Pallas kernels ------------------------------

def _maxpool_kernel(x_ref, o_ref):
    # x_ref: (TB, 2, Wo, 2*C)  -- axis1 = the two pooled rows, lane dim = (2, C)
    # o_ref: (TB, Wo, C)
    C = o_ref.shape[-1]
    v = jnp.maximum(x_ref[:, 0], x_ref[:, 1])              # (TB, Wo, 2C) vertical max
    o_ref[...] = jnp.maximum(v[..., :C], v[..., C:]).astype(o_ref.dtype)


def _conv3x3_pass1_kernel(lo_ref, hi_ref, w_ref, o_ref, psum_ref, psq_ref, xwin_ref):
    # lo/hi: (1, TH, Wp, Cin) bf16 row blocks i and i+1 of the zero-padded input.
    # w    : (9, Cin, Cpad)   bf16 resident conv weights.
    # o    : (TH*W, Cpad)     f32 conv pre-activations (also the accumulator).
    # psum/psq: (1, 1, Cpad)  f32 per-tile partial BN statistics.
    # xwin : (TH+2, Wp, Cin)  bf16 VMEM scratch holding the halo'd row window.
    TH = lo_ref.shape[1]
    Wp = lo_ref.shape[2]
    Cin = lo_ref.shape[3]
    W = Wp - 2

    # Assemble the halo'd window (TH output rows need TH+2 padded input rows).
    xwin_ref[0:TH] = lo_ref[0]
    xwin_ref[TH:TH + 2] = hi_ref[0, 0:2]

    # 3x3 conv = 9 shifted (TH*W, Cin) @ (Cin, Cpad) bf16 MXU matmuls,
    # f32-accumulated directly in the output VMEM block.
    first = True
    for dy in range(3):
        for dx in range(3):
            tap = xwin_ref[dy:dy + TH, dx:dx + W, :].reshape(TH * W, Cin)
            contrib = jnp.dot(tap, w_ref[dy * 3 + dx],
                              preferred_element_type=jnp.float32)
            if first:
                o_ref[...] = contrib
                first = False
            else:
                o_ref[...] += contrib

    # Per-tile partial BatchNorm statistics (reduced globally outside so the
    # batch stats stay exact training-mode PyTorch semantics).
    tile = o_ref[...]
    psum_ref[0] = jnp.sum(tile, axis=0, keepdims=True)
    psq_ref[0] = jnp.sum(tile * tile, axis=0, keepdims=True)


def _bn_relu_kernel(x_ref, scale_ref, shift_ref, o_ref):
    # x: (TM, Cpad) f32 pre-activations; scale/shift: (1, Cpad) f32.
    y = x_ref[...] * scale_ref[...] + shift_ref[...]
    o_ref[...] = jnp.maximum(y, 0.0).astype(o_ref.dtype)


# -------------------------------- wrappers ----------------------------------

def maxpool2x2(x_nhwc):
    N, H, W, C = x_nhwc.shape
    assert H % 2 == 0 and W % 2 == 0, "MaxPool2d(2,2) path assumes even H, W"
    Ho, Wo = H // 2, W // 2
    # Free reshape (contiguous regrouping): (N,H,W,C) -> (N*Ho, 2, Wo, 2*C)
    xv = x_nhwc.reshape(N * Ho, 2, Wo, 2 * C)
    R = N * Ho
    TB = _pick_block(R, 512)
    out = pl.pallas_call(
        _maxpool_kernel,
        grid=(R // TB,),
        in_specs=[pl.BlockSpec((TB, 2, Wo, 2 * C), lambda i: (i, 0, 0, 0))],
        out_specs=pl.BlockSpec((TB, Wo, C), lambda i: (i, 0, 0)),
        out_shape=jax.ShapeDtypeStruct((R, Wo, C), jnp.bfloat16),
        compiler_params=pltpu.CompilerParams(dimension_semantics=("parallel",)),
    )(xv)
    return out.reshape(N, Ho, Wo, C)


def conv_bn_relu_block(x_nhwc, blk, out_dtype):
    """Conv2d(3x3, pad=1, no bias) + BatchNorm2d(training stats) + ReLU."""
    N, H, W, Cin = x_nhwc.shape
    w = blk["w"]                                   # (9, Cin, Cpad) bf16
    assert w.shape[1] == Cin
    Cpad = w.shape[2]

    TH = _pick_row_tile(H, W)                      # row tile (TH*W rows per matmul)
    nrt = H // TH
    M = N * H * W
    T = N * nrt
    Wp = W + 2

    # Zero pad: +1 row/col halo; bottom extended to TH-1 so the "next" row block
    # always exists (two-block halo trick keeps BlockSpec auto-pipelining).
    xp = jnp.pad(x_nhwc.astype(jnp.bfloat16), ((0, 0), (1, TH - 1), (1, 1), (0, 0)))

    cost = pl.CostEstimate(
        flops=2 * M * 9 * Cin * Cpad,
        transcendentals=0,
        bytes_accessed=xp.size * 2 + w.size * 2 + M * Cpad * 4,
    )

    preact, psum, psq = pl.pallas_call(
        _conv3x3_pass1_kernel,
        grid=(N, nrt),
        in_specs=[
            pl.BlockSpec((1, TH, Wp, Cin), lambda n, i: (n, i, 0, 0)),       # rows i*TH..
            pl.BlockSpec((1, TH, Wp, Cin), lambda n, i: (n, i + 1, 0, 0)),   # halo rows
            pl.BlockSpec((9, Cin, Cpad), lambda n, i: (0, 0, 0)),            # resident W
        ],
        out_specs=(
            pl.BlockSpec((TH * W, Cpad), lambda n, i: (n * nrt + i, 0)),
            pl.BlockSpec((1, 1, Cpad), lambda n, i: (n * nrt + i, 0, 0)),
            pl.BlockSpec((1, 1, Cpad), lambda n, i: (n * nrt + i, 0, 0)),
        ),
        out_shape=(
            jax.ShapeDtypeStruct((M, Cpad), jnp.float32),
            jax.ShapeDtypeStruct((T, 1, Cpad), jnp.float32),
            jax.ShapeDtypeStruct((T, 1, Cpad), jnp.float32),
        ),
        scratch_shapes=[pltpu.VMEM((TH + 2, Wp, Cin), jnp.bfloat16)],
        compiler_params=pltpu.CompilerParams(
            dimension_semantics=("parallel", "parallel"),
            vmem_limit_bytes=48 * 1024 * 1024,
        ),
        cost_estimate=cost,
    )(xp, xp, w)

    # Global BatchNorm batch statistics (training mode: biased var, eps=1e-5).
    mean = jnp.sum(psum, axis=(0, 1)) / M
    var = jnp.maximum(jnp.sum(psq, axis=(0, 1)) / M - mean * mean, 0.0)
    inv = lax.rsqrt(var + 1e-5)
    scale = (blk["gamma"] * inv).reshape(1, Cpad).astype(jnp.float32)
    shift = (blk["beta"] - mean * blk["gamma"] * inv).reshape(1, Cpad).astype(jnp.float32)

    TM2 = _pick_block(M, 2048, quantum=8)
    y = pl.pallas_call(
        _bn_relu_kernel,
        grid=(M // TM2,),
        in_specs=[
            pl.BlockSpec((TM2, Cpad), lambda i: (i, 0)),
            pl.BlockSpec((1, Cpad), lambda i: (0, 0)),
            pl.BlockSpec((1, Cpad), lambda i: (0, 0)),
        ],
        out_specs=pl.BlockSpec((TM2, Cpad), lambda i: (i, 0)),
        out_shape=jax.ShapeDtypeStruct((M, Cpad), out_dtype),
        compiler_params=pltpu.CompilerParams(dimension_semantics=("parallel",)),
    )(preact, scale, shift)
    return y.reshape(N, H, W, Cpad)


# ------------------------------ params plumbing ------------------------------

def _repack_conv_weight(w_oihw, cin_pad, cout_pad):
    # PyTorch (Cout, Cin, 3, 3) -> (3, 3, Cin, Cout) -> (9, Cin_pad, Cout_pad) bf16
    cout, cin, kh, kw = w_oihw.shape
    w = jnp.transpose(w_oihw, (2, 3, 1, 0)).reshape(kh * kw, cin, cout)
    w = jnp.pad(w, ((0, 0), (0, cin_pad - cin), (0, cout_pad - cout)))
    return w.astype(jnp.bfloat16)


def init_params(key, in_channels, out_channels):
    k1, k2 = jax.random.split(key)

    def conv_w(k, cin, cout):
        bound = 1.0 / (cin * 9) ** 0.5
        return jax.random.uniform(k, (cout, cin, 3, 3), jnp.float32, -bound, bound)

    # NOTE: Conv2d bias is intentionally omitted — a per-channel constant added
    # before training-mode BatchNorm is exactly cancelled by the mean subtraction.
    return dict(
        w1=conv_w(k1, in_channels, out_channels),
        w2=conv_w(k2, out_channels, out_channels),
        g1=jnp.ones((out_channels,), jnp.float32),
        be1=jnp.zeros((out_channels,), jnp.float32),
        g2=jnp.ones((out_channels,), jnp.float32),
        be2=jnp.zeros((out_channels,), jnp.float32),
    )


def prepare_params(raw, in_channels, out_channels):
    """Hoisted (un-jitted) weight repack + channel padding to a 128 lane-dense Cout."""
    cpad = _round_up(out_channels, 128)

    def pad_vec(v):
        return jnp.pad(v, (0, cpad - out_channels)).astype(jnp.float32)

    conv1 = dict(w=_repack_conv_weight(raw["w1"], in_channels, cpad),
                 gamma=pad_vec(raw["g1"]), beta=pad_vec(raw["be1"]))
    conv2 = dict(w=_repack_conv_weight(raw["w2"], cpad, cpad),
                 gamma=pad_vec(raw["g2"]), beta=pad_vec(raw["be2"]))
    return dict(conv1=conv1, conv2=conv2)


# --------------------------------- forward ----------------------------------

def downsample_forward(params, x_nchw, *, out_channels):
    # NCHW (PyTorch) -> NHWC for the kernels.
    # TODO(synk): boundary NCHW<->NHWC transposes and the spatial zero-pads are
    # plain XLA glue; they disappear if the surrounding model stays NHWC.
    x = jnp.transpose(x_nchw, (0, 2, 3, 1))
    p = maxpool2x2(x)                                                   # bf16
    a1 = conv_bn_relu_block(p, params["conv1"], out_dtype=jnp.bfloat16)
    a2 = conv_bn_relu_block(a1, params["conv2"], out_dtype=jnp.float32)
    y = a2[..., :out_channels]                     # drop lane padding
    return jnp.transpose(y, (0, 3, 1, 2))          # back to NCHW


if __name__ == "__main__":
    key = jax.random.PRNGKey(0)
    kx, kp = jax.random.split(key)

    N, Cin, Hs, Ws = 2, 4, 16, 16
    Cout = 8

    x = jax.random.normal(kx, (N, Cin, Hs, Ws), jnp.float32)
    params = prepare_params(init_params(kp, Cin, Cout), Cin, Cout)

    fwd = jax.jit(functools.partial(downsample_forward, params, out_channels=Cout))
    y = fwd(x)
    jax.block_until_ready(y)
    assert y.shape == (N, Cout, Hs // 2, Ws // 2), y.shape
    assert bool(jnp.all(y >= 0.0))  # ReLU output
    print("KERNEL_OK")
</pallas_src>

<mosaic_0001>
module attributes {stable_mosaic.version = 11 : i64} {
  func.func @_maxpool_kernel(%arg0: i32, %arg1: memref<16x2x8x8xf32, #tpu.memory_space<vmem>>, %arg2: memref<16x8x4xbf16, #tpu.memory_space<vmem>>) attributes {dimension_semantics = [#tpu.dimension_semantics<parallel>], iteration_bounds = array<i64: 1>, scalar_prefetch = 0 : i64, scratch_operands = 0 : i64, tpu.core_type = #tpu.core_type<tc>, window_params = [{transform_indices = @transform_0, window_bounds = array<i64: 16, 2, 8, 8>}, {transform_indices = @transform_1, window_bounds = array<i64: 16, 8, 4>}]} {
    %c0 = arith.constant 0 : index
    %c0_0 = arith.constant 0 : index
    %c0_1 = arith.constant 0 : index
    %c0_2 = arith.constant 0 : index
    %0 = vector.load %arg1[%c0, %c0_0, %c0_1, %c0_2] : memref<16x2x8x8xf32, #tpu.memory_space<vmem>>, vector<16x1x8x8xf32>
    %1 = vector.shape_cast %0 : vector<16x1x8x8xf32> to vector<16x8x8xf32>
    %c0_3 = arith.constant 0 : index
    %c1 = arith.constant 1 : index
    %c0_4 = arith.constant 0 : index
    %c0_5 = arith.constant 0 : index
    %2 = vector.load %arg1[%c0_3, %c1, %c0_4, %c0_5] : memref<16x2x8x8xf32, #tpu.memory_space<vmem>>, vector<16x1x8x8xf32>
    %3 = vector.shape_cast %2 : vector<16x1x8x8xf32> to vector<16x8x8xf32>
    %4 = arith.maximumf %1, %3 : vector<16x8x8xf32>
    %5 = vector.extract_strided_slice %4 {offsets = [0, 0, 0], sizes = [16, 8, 4], strides = [1, 1, 1]} : vector<16x8x8xf32> to vector<16x8x4xf32>
    %6 = vector.extract_strided_slice %4 {offsets = [0, 0, 4], sizes = [16, 8, 4], strides = [1, 1, 1]} : vector<16x8x8xf32> to vector<16x8x4xf32>
    %7 = arith.maximumf %5, %6 : vector<16x8x4xf32>
    %8 = arith.truncf %7 : vector<16x8x4xf32> to vector<16x8x4xbf16>
    %c0_6 = arith.constant 0 : index
    %c0_7 = arith.constant 0 : index
    %c0_8 = arith.constant 0 : index
    %9 = vector.load %arg2[%c0_6, %c0_7, %c0_8] : memref<16x8x4xbf16, #tpu.memory_space<vmem>>, vector<16x8x4xbf16>
    tpu.vector_store %arg2[%c0_6, %c0_7, %c0_8], %8 {strides = array<i32>} : memref<16x8x4xbf16, #tpu.memory_space<vmem>>, vector<16x8x4xbf16>,
    return
  }
  func.func @transform_0(%arg0: i32) -> (i32, i32, i32, i32) {
    %c0_i32 = arith.constant 0 : i32
    %c0_i32_0 = arith.constant 0 : i32
    %c0_i32_1 = arith.constant 0 : i32
    %c0_i32_2 = arith.constant 0 : i32
    return %arg0, %c0_i32, %c0_i32_0, %c0_i32_1 : i32, i32, i32, i32
  }
  func.func @transform_1(%arg0: i32) -> (i32, i32, i32) {
    %c0_i32 = arith.constant 0 : i32
    %c0_i32_0 = arith.constant 0 : i32
    %c0_i32_1 = arith.constant 0 : i32
    return %arg0, %c0_i32, %c0_i32_0 : i32, i32, i32
  }
}

module attributes {stable_mosaic.version = 11 : i64} {
  func.func @_conv3x3_pass1_kernel(%arg0: i32, %arg1: i32, %arg2: memref<1x8x10x4xbf16, #tpu.memory_space<vmem>>, %arg3: memref<1x8x10x4xbf16, #tpu.memory_space<vmem>>, %arg4: memref<9x4x128xbf16, #tpu.memory_space<vmem>>, %arg5: memref<64x128xf32, #tpu.memory_space<vmem>>, %arg6: memref<1x1x128xf32, #tpu.memory_space<vmem>>, %arg7: memref<1x1x128xf32, #tpu.memory_space<vmem>>, %arg8: memref<10x10x4xbf16, #tpu.memory_space<vmem>>) attributes {dimension_semantics = [#tpu.dimension_semantics<parallel>, #tpu.dimension_semantics<parallel>], iteration_bounds = array<i64: 2, 1>, scalar_prefetch = 0 : i64, scratch_operands = 1 : i64, tpu.core_type = #tpu.core_type<tc>, window_params = [{transform_indices = @transform_0, window_bounds = array<i64: 1, 8, 10, 4>}, {transform_indices = @transform_1, window_bounds = array<i64: 1, 8, 10, 4>}, {pipeline_mode = #tpu.pipeline_mode<synchronous>, transform_indices = @transform_2, window_bounds = array<i64: 9, 4, 128>}, {transform_indices = @transform_3, window_bounds = array<i64: 64, 128>}, {transform_indices = @transform_4, window_bounds = array<i64: 1, 1, 128>}, {transform_indices = @transform_5, window_bounds = array<i64: 1, 1, 128>}]} {
    %c0 = arith.constant 0 : index
    %c0_0 = arith.constant 0 : index
    %c0_1 = arith.constant 0 : index
    %c0_2 = arith.constant 0 : index
    %0 = vector.load %arg2[%c0, %c0_0, %c0_1, %c0_2] : memref<1x8x10x4xbf16, #tpu.memory_space<vmem>>, vector<1x8x10x4xbf16>
    %1 = vector.shape_cast %0 : vector<1x8x10x4xbf16> to vector<8x10x4xbf16>
    %c0_3 = arith.constant 0 : index
    %c0_4 = arith.constant 0 : index
    %c0_5 = arith.constant 0 : index
    %2 = vector.load %arg8[%c0_3, %c0_4, %c0_5] : memref<10x10x4xbf16, #tpu.memory_space<vmem>>, vector<8x10x4xbf16>
    tpu.vector_store %arg8[%c0_3, %c0_4, %c0_5], %1 {strides = array<i32>} : memref<10x10x4xbf16, #tpu.memory_space<vmem>>, vector<8x10x4xbf16>,
    %c0_6 = arith.constant 0 : index
    %c0_7 = arith.constant 0 : index
    %c0_8 = arith.constant 0 : index
    %c0_9 = arith.constant 0 : index
    %3 = vector.load %arg3[%c0_6, %c0_7, %c0_8, %c0_9] : memref<1x8x10x4xbf16, #tpu.memory_space<vmem>>, vector<1x2x10x4xbf16>
    %4 = vector.shape_cast %3 : vector<1x2x10x4xbf16> to vector<2x10x4xbf16>
    %c8 = arith.constant 8 : index
    %c0_10 = arith.constant 0 : index
    %c0_11 = arith.constant 0 : index
    %5 = vector.load %arg8[%c8, %c0_10, %c0_11] : memref<10x10x4xbf16, #tpu.memory_space<vmem>>, vector<2x10x4xbf16>
    tpu.vector_store %arg8[%c8, %c0_10, %c0_11], %4 {strides = array<i32>} : memref<10x10x4xbf16, #tpu.memory_space<vmem>>, vector<2x10x4xbf16>,
    %c0_12 = arith.constant 0 : index
    %c0_13 = arith.constant 0 : index
    %c0_14 = arith.constant 0 : index
    %6 = vector.load %arg8[%c0_12, %c0_13, %c0_14] : memref<10x10x4xbf16, #tpu.memory_space<vmem>>, vector<8x8x4xbf16>
    %7 = vector.shape_cast %6 : vector<8x8x4xbf16> to vector<64x4xbf16>
    %c0_15 = arith.constant 0 : index
    %c0_16 = arith.constant 0 : index
    %c0_17 = arith.constant 0 : index
    %8 = vector.load %arg4[%c0_15, %c0_16, %c0_17] : memref<9x4x128xbf16, #tpu.memory_space<vmem>>, vector<1x4x128xbf16>
    %9 = vector.shape_cast %8 : vector<1x4x128xbf16> to vector<4x128xbf16>
    %cst = arith.constant dense<0.000000e+00> : vector<64x128xf32>
    %10 = tpu.matmul %7, %9, %cst {dimension_numbers = #tpu.dot_dimension_numbers<[1], [0], [0], [1], [0, 0, 1, 1], [], []>} : vector<64x4xbf16>, vector<4x128xbf16>, vector<64x128xf32> -> vector<64x128xf32>
    %c0_18 = arith.constant 0 : index
    %c0_19 = arith.constant 0 : index
    %11 = vector.load %arg5[%c0_18, %c0_19] : memref<64x128xf32, #tpu.memory_space<vmem>>, vector<64x128xf32>
    tpu.vector_store %arg5[%c0_18, %c0_19], %10 {strides = array<i32>} : memref<64x128xf32, #tpu.memory_space<vmem>>, vector<64x128xf32>,
    %c0_20 = arith.constant 0 : index
    %c1 = arith.constant 1 : index
    %c0_21 = arith.constant 0 : index
    %12 = vector.load %arg8[%c0_20, %c1, %c0_21] : memref<10x10x4xbf16, #tpu.memory_space<vmem>>, vector<8x8x4xbf16>
    %13 = vector.shape_cast %12 : vector<8x8x4xbf16> to vector<64x4xbf16>
    %c1_22 = arith.constant 1 : index
    %c0_23 = arith.constant 0 : index
    %c0_24 = arith.constant 0 : index
    %14 = vector.load %arg4[%c1_22, %c0_23, %c0_24] : memref<9x4x128xbf16, #tpu.memory_space<vmem>>, vector<1x4x128xbf16>
    %15 = vector.shape_cast %14 : vector<1x4x128xbf16> to vector<4x128xbf16>
    %cst_25 = arith.constant dense<0.000000e+00> : vector<64x128xf32>
    %16 = tpu.matmul %13, %15, %cst_25 {dimension_numbers = #tpu.dot_dimension_numbers<[1], [0], [0], [1], [0, 0, 1, 1], [], []>} : vector<64x4xbf16>, vector<4x128xbf16>, vector<64x128xf32> -> vector<64x128xf32>
    %c0_26 = arith.constant 0 : index
    %c0_27 = arith.constant 0 : index
    %17 = vector.load %arg5[%c0_26, %c0_27] : memref<64x128xf32, #tpu.memory_space<vmem>>, vector<64x128xf32>
    %18 = arith.addf %17, %16 : vector<64x128xf32>
    %c0_28 = arith.constant 0 : index
    %c0_29 = arith.constant 0 : index
    %19 = vector.load %arg5[%c0_28, %c0_29] : memref<64x128xf32, #tpu.memory_space<vmem>>, vector<64x128xf32>
    tpu.vector_store %arg5[%c0_28, %c0_29], %18 {strides = array<i32>} : memref<64x128xf32, #tpu.memory_space<vmem>>, vector<64x128xf32>,
    %c0_30 = arith.constant 0 : index
    %c2 = arith.constant 2 : index
    %c0_31 = arith.constant 0 : index
    %20 = vector.load %arg8[%c0_30, %c2, %c0_31] : memref<10x10x4xbf16, #tpu.memory_space<vmem>>, vector<8x8x4xbf16>
    %21 = vector.shape_cast %20 : vector<8x8x4xbf16> to vector<64x4xbf16>
    %c2_32 = arith.constant 2 : index
    %c0_33 = arith.constant 0 : index
    %c0_34 = arith.constant 0 : index
    %22 = vector.load %arg4[%c2_32, %c0_33, %c0_34] : memref<9x4x128xbf16, #tpu.memory_space<vmem>>, vector<1x4x128xbf16>
    %23 = vector.shape_cast %22 : vector<1x4x128xbf16> to vector<4x128xbf16>
    %cst_35 = arith.constant dense<0.000000e+00> : vector<64x128xf32>
    %24 = tpu.matmul %21, %23, %cst_35 {dimension_numbers = #tpu.dot_dimension_numbers<[1], [0], [0], [1], [0, 0, 1, 1], [], []>} : vector<64x4xbf16>, vector<4x128xbf16>, vector<64x128xf32> -> vector<64x128xf32>
    %c0_36 = arith.constant 0 : index
    %c0_37 = arith.constant 0 : index
    %25 = vector.load %arg5[%c0_36, %c0_37] : memref<64x128xf32, #tpu.memory_space<vmem>>, vector<64x128xf32>
    %26 = arith.addf %25, %24 : vector<64x128xf32>
    %c0_38 = arith.constant 0 : index
    %c0_39 = arith.constant 0 : index
    %27 = vector.load %arg5[%c0_38, %c0_39] : memref<64x128xf32, #tpu.memory_space<vmem>>, vector<64x128xf32>
    tpu.vector_store %arg5[%c0_38, %c0_39], %26 {strides = array<i32>} : memref<64x128xf32, #tpu.memory_space<vmem>>, vector<64x128xf32>,
    %c1_40 = arith.constant 1 : index
    %c0_41 = arith.constant 0 : index
    %c0_42 = arith.constant 0 : index
    %28 = vector.load %arg8[%c1_40, %c0_41, %c0_42] : memref<10x10x4xbf16, #tpu.memory_space<vmem>>, vector<8x8x4xbf16>
    %29 = vector.shape_cast %28 : vector<8x8x4xbf16> to vector<64x4xbf16>
    %c3 = arith.constant 3 : index
    %c0_43 = arith.constant 0 : index
    %c0_44 = arith.constant 0 : index
    %30 = vector.load %arg4[%c3, %c0_43, %c0_44] : memref<9x4x128xbf16, #tpu.memory_space<vmem>>, vector<1x4x128xbf16>
    %31 = vector.shape_cast %30 : vector<1x4x128xbf16> to vector<4x128xbf16>
    %cst_45 = arith.constant dense<0.000000e+00> : vector<64x128xf32>
    %32 = tpu.matmul %29, %31, %cst_45 {dimension_numbers = #tpu.dot_dimension_numbers<[1], [0], [0], [1], [0, 0, 1, 1], [], []>} : vector<64x4xbf16>, vector<4x128xbf16>, vector<64x128xf32> -> vector<64x128xf32>
    %c0_46 = arith.constant 0 : index
    %c0_47 = arith.constant 0 : index
    %33 = vector.load %arg5[%c0_46, %c0_47] : memref<64x128xf32, #tpu.memory_space<vmem>>, vector<64x128xf32>
    %34 = arith.addf %33, %32 : vector<64x128xf32>
    %c0_48 = arith.constant 0 : index
    %c0_49 = arith.constant 0 : index
    %35 = vector.load %arg5[%c0_48, %c0_49] : memref<64x128xf32, #tpu.memory_space<vmem>>, vector<64x128xf32>
    tpu.vector_store %arg5[%c0_48, %c0_49], %34 {strides = array<i32>} : memref<64x128xf32, #tpu.memory_space<vmem>>, vector<64x128xf32>,
    %c1_50 = arith.constant 1 : index
    %c1_51 = arith.constant 1 : index
    %c0_52 = arith.constant 0 : index
    %36 = vector.load %arg8[%c1_50, %c1_51, %c0_52] : memref<10x10x4xbf16, #tpu.memory_space<vmem>>, vector<8x8x4xbf16>
    %37 = vector.shape_cast %36 : vector<8x8x4xbf16> to vector<64x4xbf16>
    %c4 = arith.constant 4 : index
    %c0_53 = arith.constant 0 : index
    %c0_54 = arith.constant 0 : index
    %38 = vector.load %arg4[%c4, %c0_53, %c0_54] : memref<9x4x128xbf16, #tpu.memory_space<vmem>>, vector<1x4x128xbf16>
    %39 = vector.shape_cast %38 : vector<1x4x128xbf16> to vector<4x128xbf16>
    %cst_55 = arith.constant dense<0.000000e+00> : vector<64x128xf32>
    %40 = tpu.matmul %37, %39, %cst_55 {dimension_numbers = #tpu.dot_dimension_numbers<[1], [0], [0], [1], [0, 0, 1, 1], [], []>} : vector<64x4xbf16>, vector<4x128xbf16>, vector<64x128xf32> -> vector<64x128xf32>
    %c0_56 = arith.constant 0 : index
    %c0_57 = arith.constant 0 : index
    %41 = vector.load %arg5[%c0_56, %c0_57] : memref<64x128xf32, #tpu.memory_space<vmem>>, vector<64x128xf32>
    %42 = arith.addf %41, %40 : vector<64x128xf32>
    %c0_58 = arith.constant 0 : index
    %c0_59 = arith.constant 0 : index
    %43 = vector.load %arg5[%c0_58, %c0_59] : memref<64x128xf32, #tpu.memory_space<vmem>>, vector<64x128xf32>
    tpu.vector_store %arg5[%c0_58, %c0_59], %42 {strides = array<i32>} : memref<64x128xf32, #tpu.memory_space<vmem>>, vector<64x128xf32>,
    %c1_60 = arith.constant 1 : index
    %c2_61 = arith.constant 2 : index
    %c0_62 = arith.constant 0 : index
    %44 = vector.load %arg8[%c1_60, %c2_61, %c0_62] : memref<10x10x4xbf16, #tpu.memory_space<vmem>>, vector<8x8x4xbf16>
    %45 = vector.shape_cast %44 : vector<8x8x4xbf16> to vector<64x4xbf16>
    %c5 = arith.constant 5 : index
    %c0_63 = arith.constant 0 : index
    %c0_64 = arith.constant 0 : index
    %46 = vector.load %arg4[%c5, %c0_63, %c0_64] : memref<9x4x128xbf16, #tpu.memory_space<vmem>>, vector<1x4x128xbf16>
    %47 = vector.shape_cast %46 : vector<1x4x128xbf16> to vector<4x128xbf16>
    %cst_65 = arith.constant dense<0.000000e+00> : vector<64x128xf32>
    %48 = tpu.matmul %45, %47, %cst_65 {dimension_numbers = #tpu.dot_dimension_numbers<[1], [0], [0], [1], [0, 0, 1, 1], [], []>} : vector<64x4xbf16>, vector<4x128xbf16>, vector<64x128xf32> -> vector<64x128xf32>
    %c0_66 = arith.constant 0 : index
    %c0_67 = arith.constant 0 : index
    %49 = vector.load %arg5[%c0_66, %c0_67] : memref<64x128xf32, #tpu.memory_space<vmem>>, vector<64x128xf32>
    %50 = arith.addf %49, %48 : vector<64x128xf32>
    %c0_68 = arith.constant 0 : index
    %c0_69 = arith.constant 0 : index
    %51 = vector.load %arg5[%c0_68, %c0_69] : memref<64x128xf32, #tpu.memory_space<vmem>>, vector<64x128xf32>
    tpu.vector_store %arg5[%c0_68, %c0_69], %50 {strides = array<i32>} : memref<64x128xf32, #tpu.memory_space<vmem>>, vector<64x128xf32>,
    %c2_70 = arith.constant 2 : index
    %c0_71 = arith.constant 0 : index
    %c0_72 = arith.constant 0 : index
    %52 = vector.load %arg8[%c2_70, %c0_71, %c0_72] : memref<10x10x4xbf16, #tpu.memory_space<vmem>>, vector<8x8x4xbf16>
    %53 = vector.shape_cast %52 : vector<8x8x4xbf16> to vector<64x4xbf16>
    %c6 = arith.constant 6 : index
    %c0_73 = arith.constant 0 : index
    %c0_74 = arith.constant 0 : index
    %54 = vector.load %arg4[%c6, %c0_73, %c0_74] : memref<9x4x128xbf16, #tpu.memory_space<vmem>>, vector<1x4x128xbf16>
    %55 = vector.shape_cast %54 : vector<1x4x128xbf16> to vector<4x128xbf16>
    %cst_75 = arith.constant dense<0.000000e+00> : vector<64x128xf32>
    %56 = tpu.matmul %53, %55, %cst_75 {dimension_numbers = #tpu.dot_dimension_numbers<[1], [0], [0], [1], [0, 0, 1, 1], [], []>} : vector<64x4xbf16>, vector<4x128xbf16>, vector<64x128xf32> -> vector<64x128xf32>
    %c0_76 = arith.constant 0 : index
    %c0_77 = arith.constant 0 : index
    %57 = vector.load %arg5[%c0_76, %c0_77] : memref<64x128xf32, #tpu.memory_space<vmem>>, vector<64x128xf32>
    %58 = arith.addf %57, %56 : vector<64x128xf32>
    %c0_78 = arith.constant 0 : index
    %c0_79 = arith.constant 0 : index
    %59 = vector.load %arg5[%c0_78, %c0_79] : memref<64x128xf32, #tpu.memory_space<vmem>>, vector<64x128xf32>
    tpu.vector_store %arg5[%c0_78, %c0_79], %58 {strides = array<i32>} : memref<64x128xf32, #tpu.memory_space<vmem>>, vector<64x128xf32>,
    %c2_80 = arith.constant 2 : index
    %c1_81 = arith.constant 1 : index
    %c0_82 = arith.constant 0 : index
    %60 = vector.load %arg8[%c2_80, %c1_81, %c0_82] : memref<10x10x4xbf16, #tpu.memory_space<vmem>>, vector<8x8x4xbf16>
    %61 = vector.shape_cast %60 : vector<8x8x4xbf16> to vector<64x4xbf16>
    %c7 = arith.constant 7 : index
    %c0_83 = arith.constant 0 : index
    %c0_84 = arith.constant 0 : index
    %62 = vector.load %arg4[%c7, %c0_83, %c0_84] : memref<9x4x128xbf16, #tpu.memory_space<vmem>>, vector<1x4x128xbf16>
    %63 = vector.shape_cast %62 : vector<1x4x128xbf16> to vector<4x128xbf16>
    %cst_85 = arith.constant dense<0.000000e+00> : vector<64x128xf32>
    %64 = tpu.matmul %61, %63, %cst_85 {dimension_numbers = #tpu.dot_dimension_numbers<[1], [0], [0], [1], [0, 0, 1, 1], [], []>} : vector<64x4xbf16>, vector<4x128xbf16>, vector<64x128xf32> -> vector<64x128xf32>
    %c0_86 = arith.constant 0 : index
    %c0_87 = arith.constant 0 : index
    %65 = vector.load %arg5[%c0_86, %c0_87] : memref<64x128xf32, #tpu.memory_space<vmem>>, vector<64x128xf32>
    %66 = arith.addf %65, %64 : vector<64x128xf32>
    %c0_88 = arith.constant 0 : index
    %c0_89 = arith.constant 0 : index
    %67 = vector.load %arg5[%c0_88, %c0_89] : memref<64x128xf32, #tpu.memory_space<vmem>>, vector<64x128xf32>
    tpu.vector_store %arg5[%c0_88, %c0_89], %66 {strides = array<i32>} : memref<64x128xf32, #tpu.memory_space<vmem>>, vector<64x128xf32>,
    %c2_90 = arith.constant 2 : index
    %c2_91 = arith.constant 2 : index
    %c0_92 = arith.constant 0 : index
    %68 = vector.load %arg8[%c2_90, %c2_91, %c0_92] : memref<10x10x4xbf16, #tpu.memory_space<vmem>>, vector<8x8x4xbf16>
    %69 = vector.shape_cast %68 : vector<8x8x4xbf16> to vector<64x4xbf16>
    %c8_93 = arith.constant 8 : index
    %c0_94 = arith.constant 0 : index
    %c0_95 = arith.constant 0 : index
    %70 = vector.load %arg4[%c8_93, %c0_94, %c0_95] : memref<9x4x128xbf16, #tpu.memory_space<vmem>>, vector<1x4x128xbf16>
    %71 = vector.shape_cast %70 : vector<1x4x128xbf16> to vector<4x128xbf16>
    %cst_96 = arith.constant dense<0.000000e+00> : vector<64x128xf32>
    %72 = tpu.matmul %69, %71, %cst_96 {dimension_numbers = #tpu.dot_dimension_numbers<[1], [0], [0], [1], [0, 0, 1, 1], [], []>} : vector<64x4xbf16>, vector<4x128xbf16>, vector<64x128xf32> -> vector<64x128xf32>
    %c0_97 = arith.constant 0 : index
    %c0_98 = arith.constant 0 : index
    %73 = vector.load %arg5[%c0_97, %c0_98] : memref<64x128xf32, #tpu.memory_space<vmem>>, vector<64x128xf32>
    %74 = arith.addf %73, %72 : vector<64x128xf32>
    %c0_99 = arith.constant 0 : index
    %c0_100 = arith.constant 0 : index
    %75 = vector.load %arg5[%c0_99, %c0_100] : memref<64x128xf32, #tpu.memory_space<vmem>>, vector<64x128xf32>
    tpu.vector_store %arg5[%c0_99, %c0_100], %74 {strides = array<i32>} : memref<64x128xf32, #tpu.memory_space<vmem>>, vector<64x128xf32>,
    %c0_101 = arith.constant 0 : index
    %c0_102 = arith.constant 0 : index
    %76 = vector.load %arg5[%c0_101, %c0_102] : memref<64x128xf32, #tpu.memory_space<vmem>>, vector<64x128xf32>
    %cst_103 = arith.constant dense<0.000000e+00> : vector<128xf32>
    %77 = vector.multi_reduction <add>, %76, %cst_103 [0] : vector<64x128xf32> to vector<128xf32>
    %78 = vector.shape_cast %77 : vector<128xf32> to vector<1x128xf32>
    %c0_104 = arith.constant 0 : index
    %c0_105 = arith.constant 0 : index
    %c0_106 = arith.constant 0 : index
    %79 = vector.load %arg6[%c0_104, %c0_105, %c0_106] : memref<1x1x128xf32, #tpu.memory_space<vmem>>, vector<1x1x128xf32>
    %80 = vector.shape_cast %79 : vector<1x1x128xf32> to vector<1x128xf32>
    %81 = vector.shape_cast %78 : vector<1x128xf32> to vector<1x1x128xf32>
    tpu.vector_store %arg6[%c0_104, %c0_105, %c0_106], %81 {strides = array<i32>} : memref<1x1x128xf32, #tpu.memory_space<vmem>>, vector<1x1x128xf32>,
    %82 = arith.mulf %76, %76 : vector<64x128xf32>
    %cst_107 = arith.constant dense<0.000000e+00> : vector<128xf32>
    %83 = vector.multi_reduction <add>, %82, %cst_107 [0] : vector<64x128xf32> to vector<128xf32>
    %84 = vector.shape_cast %83 : vector<128xf32> to vector<1x128xf32>
    %c0_108 = arith.constant 0 : index
    %c0_109 = arith.constant 0 : index
    %c0_110 = arith.constant 0 : index
    %85 = vector.load %arg7[%c0_108, %c0_109, %c0_110] : memref<1x1x128xf32, #tpu.memory_space<vmem>>, vector<1x1x128xf32>
    %86 = vector.shape_cast %85 : vector<1x1x128xf32> to vector<1x128xf32>
    %87 = vector.shape_cast %84 : vector<1x128xf32> to vector<1x1x128xf32>
    tpu.vector_store %arg7[%c0_108, %c0_109, %c0_110], %87 {strides = array<i32>} : memref<1x1x128xf32, #tpu.memory_space<vmem>>, vector<1x1x128xf32>,
    return
  }
  func.func @transform_0(%arg0: i32, %arg1: i32) -> (i32, i32, i32, i32) {
    %c0_i32 = arith.constant 0 : i32
    %c0_i32_0 = arith.constant 0 : i32
    %c0_i32_1 = arith.constant 0 : i32
    return %arg0, %arg1, %c0_i32, %c0_i32_0 : i32, i32, i32, i32
  }
  func.func @transform_1(%arg0: i32, %arg1: i32) -> (i32, i32, i32, i32) {
    %c1_i32 = arith.constant 1 : i32
    %0 = arith.addi %arg1, %c1_i32 : i32
    %c0_i32 = arith.constant 0 : i32
    %c0_i32_0 = arith.constant 0 : i32
    %c0_i32_1 = arith.constant 0 : i32
    return %arg0, %0, %c0_i32, %c0_i32_0 : i32, i32, i32, i32
  }
  func.func @transform_2(%arg0: i32, %arg1: i32) -> (i32, i32, i32) {
    %c0_i32 = arith.constant 0 : i32
    %c0_i32_0 = arith.constant 0 : i32
    %c0_i32_1 = arith.constant 0 : i32
    %c0_i32_2 = arith.constant 0 : i32
    return %c0_i32, %c0_i32_0, %c0_i32_1 : i32, i32, i32
  }
  func.func @transform_3(%arg0: i32, %arg1: i32) -> (i32, i32) {
    %c1_i32 = arith.constant 1 : i32
    %0 = arith.muli %arg0, %c1_i32 : i32
    %1 = arith.addi %0, %arg1 : i32
    %c0_i32 = arith.constant 0 : i32
    %c0_i32_0 = arith.constant 0 : i32
    return %1, %c0_i32 : i32, i32
  }
  func.func @transform_4(%arg0: i32, %arg1: i32) -> (i32, i32, i32) {
    %c1_i32 = arith.constant 1 : i32
    %0 = arith.muli %arg0, %c1_i32 : i32
    %1 = arith.addi %0, %arg1 : i32
    %c0_i32 = arith.constant 0 : i32
    %c0_i32_0 = arith.constant 0 : i32
    %c0_i32_1 = arith.constant 0 : i32
    return %1, %c0_i32, %c0_i32_0 : i32, i32, i32
  }
  func.func @transform_5(%arg0: i32, %arg1: i32) -> (i32, i32, i32) {
    %c1_i32 = arith.constant 1 : i32
    %0 = arith.muli %arg0, %c1_i32 : i32
    %1 = arith.addi %0, %arg1 : i32
    %c0_i32 = arith.constant 0 : i32
    %c0_i32_0 = arith.constant 0 : i32
    %c0_i32_1 = arith.constant 0 : i32
    return %1, %c0_i32, %c0_i32_0 : i32, i32, i32
  }
}

module attributes {stable_mosaic.version = 11 : i64} {
  func.func @_bn_relu_kernel(%arg0: i32, %arg1: memref<128x128xf32, #tpu.memory_space<vmem>>, %arg2: memref<1x128xf32, #tpu.memory_space<vmem>>, %arg3: memref<1x128xf32, #tpu.memory_space<vmem>>, %arg4: memref<128x128xbf16, #tpu.memory_space<vmem>>) attributes {dimension_semantics = [#tpu.dimension_semantics<parallel>], iteration_bounds = array<i64: 1>, scalar_prefetch = 0 : i64, scratch_operands = 0 : i64, tpu.core_type = #tpu.core_type<tc>, window_params = [{transform_indices = @transform_0, window_bounds = array<i64: 128, 128>}, {pipeline_mode = #tpu.pipeline_mode<synchronous>, transform_indices = @transform_1, window_bounds = array<i64: 1, 128>}, {pipeline_mode = #tpu.pipeline_mode<synchronous>, transform_indices = @transform_2, window_bounds = array<i64: 1, 128>}, {transform_indices = @transform_3, window_bounds = array<i64: 128, 128>}]} {
    %c0 = arith.constant 0 : index
    %c0_0 = arith.constant 0 : index
    %0 = vector.load %arg1[%c0, %c0_0] : memref<128x128xf32, #tpu.memory_space<vmem>>, vector<128x128xf32>
    %c0_1 = arith.constant 0 : index
    %c0_2 = arith.constant 0 : index
    %1 = vector.load %arg2[%c0_1, %c0_2] : memref<1x128xf32, #tpu.memory_space<vmem>>, vector<1x128xf32>
    %2 = vector.broadcast %1 : vector<1x128xf32> to vector<128x128xf32>
    %3 = arith.mulf %0, %2 : vector<128x128xf32>
    %c0_3 = arith.constant 0 : index
    %c0_4 = arith.constant 0 : index
    %4 = vector.load %arg3[%c0_3, %c0_4] : memref<1x128xf32, #tpu.memory_space<vmem>>, vector<1x128xf32>
    %5 = vector.broadcast %4 : vector<1x128xf32> to vector<128x128xf32>
    %6 = arith.addf %3, %5 : vector<128x128xf32>
    %cst = arith.constant 0.000000e+00 : f32
    %7 = vector.broadcast %cst : f32 to vector<128x128xf32>
    %8 = arith.maximumf %6, %7 : vector<128x128xf32>
    %9 = arith.truncf %8 : vector<128x128xf32> to vector<128x128xbf16>
    %c0_5 = arith.constant 0 : index
    %c0_6 = arith.constant 0 : index
    %10 = vector.load %arg4[%c0_5, %c0_6] : memref<128x128xbf16, #tpu.memory_space<vmem>>, vector<128x128xbf16>
    tpu.vector_store %arg4[%c0_5, %c0_6], %9 {strides = array<i32>} : memref<128x128xbf16, #tpu.memory_space<vmem>>, vector<128x128xbf16>,
    return
  }
  func.func @transform_0(%arg0: i32) -> (i32, i32) {
    %c0_i32 = arith.constant 0 : i32
    %c0_i32_0 = arith.constant 0 : i32
    return %arg0, %c0_i32 : i32, i32
  }
  func.func @transform_1(%arg0: i32) -> (i32, i32) {
    %c0_i32 = arith.constant 0 : i32
    %c0_i32_0 = arith.constant 0 : i32
    %c0_i32_1 = arith.constant 0 : i32
    return %c0_i32, %c0_i32_0 : i32, i32
  }
  func.func @transform_2(%arg0: i32) -> (i32, i32) {
    %c0_i32 = arith.constant 0 : i32
    %c0_i32_0 = arith.constant 0 : i32
    %c0_i32_1 = arith.constant 0 : i32
    return %c0_i32, %c0_i32_0 : i32, i32
  }
  func.func @transform_3(%arg0: i32) -> (i32, i32) {
    %c0_i32 = arith.constant 0 : i32
    %c0_i32_0 = arith.constant 0 : i32
    return %arg0, %c0_i32 : i32, i32
  }
}

module attributes {stable_mosaic.version = 11 : i64} {
  func.func @_conv3x3_pass1_kernel(%arg0: i32, %arg1: i32, %arg2: memref<1x8x10x128xbf16, #tpu.memory_space<vmem>>, %arg3: memref<1x8x10x128xbf16, #tpu.memory_space<vmem>>, %arg4: memref<9x128x128xbf16, #tpu.memory_space<vmem>>, %arg5: memref<64x128xf32, #tpu.memory_space<vmem>>, %arg6: memref<1x1x128xf32, #tpu.memory_space<vmem>>, %arg7: memref<1x1x128xf32, #tpu.memory_space<vmem>>, %arg8: memref<10x10x128xbf16, #tpu.memory_space<vmem>>) attributes {dimension_semantics = [#tpu.dimension_semantics<parallel>, #tpu.dimension_semantics<parallel>], iteration_bounds = array<i64: 2, 1>, scalar_prefetch = 0 : i64, scratch_operands = 1 : i64, tpu.core_type = #tpu.core_type<tc>, window_params = [{transform_indices = @transform_0, window_bounds = array<i64: 1, 8, 10, 128>}, {transform_indices = @transform_1, window_bounds = array<i64: 1, 8, 10, 128>}, {pipeline_mode = #tpu.pipeline_mode<synchronous>, transform_indices = @transform_2, window_bounds = array<i64: 9, 128, 128>}, {transform_indices = @transform_3, window_bounds = array<i64: 64, 128>}, {transform_indices = @transform_4, window_bounds = array<i64: 1, 1, 128>}, {transform_indices = @transform_5, window_bounds = array<i64: 1, 1, 128>}]} {
    %c0 = arith.constant 0 : index
    %c0_0 = arith.constant 0 : index
    %c0_1 = arith.constant 0 : index
    %c0_2 = arith.constant 0 : index
    %0 = vector.load %arg2[%c0, %c0_0, %c0_1, %c0_2] : memref<1x8x10x128xbf16, #tpu.memory_space<vmem>>, vector<1x8x10x128xbf16>
    %1 = vector.shape_cast %0 : vector<1x8x10x128xbf16> to vector<8x10x128xbf16>
    %c0_3 = arith.constant 0 : index
    %c0_4 = arith.constant 0 : index
    %c0_5 = arith.constant 0 : index
    %2 = vector.load %arg8[%c0_3, %c0_4, %c0_5] : memref<10x10x128xbf16, #tpu.memory_space<vmem>>, vector<8x10x128xbf16>
    tpu.vector_store %arg8[%c0_3, %c0_4, %c0_5], %1 {strides = array<i32>} : memref<10x10x128xbf16, #tpu.memory_space<vmem>>, vector<8x10x128xbf16>,
    %c0_6 = arith.constant 0 : index
    %c0_7 = arith.constant 0 : index
    %c0_8 = arith.constant 0 : index
    %c0_9 = arith.constant 0 : index
    %3 = vector.load %arg3[%c0_6, %c0_7, %c0_8, %c0_9] : memref<1x8x10x128xbf16, #tpu.memory_space<vmem>>, vector<1x2x10x128xbf16>
    %4 = vector.shape_cast %3 : vector<1x2x10x128xbf16> to vector<2x10x128xbf16>
    %c8 = arith.constant 8 : index
    %c0_10 = arith.constant 0 : index
    %c0_11 = arith.constant 0 : index
    %5 = vector.load %arg8[%c8, %c0_10, %c0_11] : memref<10x10x128xbf16, #tpu.memory_space<vmem>>, vector<2x10x128xbf16>
    tpu.vector_store %arg8[%c8, %c0_10, %c0_11], %4 {strides = array<i32>} : memref<10x10x128xbf16, #tpu.memory_space<vmem>>, vector<2x10x128xbf16>,
    %c0_12 = arith.constant 0 : index
    %c0_13 = arith.constant 0 : index
    %c0_14 = arith.constant 0 : index
    %6 = vector.load %arg8[%c0_12, %c0_13, %c0_14] : memref<10x10x128xbf16, #tpu.memory_space<vmem>>, vector<8x8x128xbf16>
    %7 = vector.shape_cast %6 : vector<8x8x128xbf16> to vector<64x128xbf16>
    %c0_15 = arith.constant 0 : index
    %c0_16 = arith.constant 0 : index
    %c0_17 = arith.constant 0 : index
    %8 = vector.load %arg4[%c0_15, %c0_16, %c0_17] : memref<9x128x128xbf16, #tpu.memory_space<vmem>>, vector<1x128x128xbf16>
    %9 = vector.shape_cast %8 : vector<1x128x128xbf16> to vector<128x128xbf16>
    %cst = arith.constant dense<0.000000e+00> : vector<64x128xf32>
    %10 = tpu.matmul %7, %9, %cst {dimension_numbers = #tpu.dot_dimension_numbers<[1], [0], [0], [1], [0, 0, 1, 1], [], []>} : vector<64x128xbf16>, vector<128x128xbf16>, vector<64x128xf32> -> vector<64x128xf32>
    %c0_18 = arith.constant 0 : index
    %c0_19 = arith.constant 0 : index
    %11 = vector.load %arg5[%c0_18, %c0_19] : memref<64x128xf32, #tpu.memory_space<vmem>>, vector<64x128xf32>
    tpu.vector_store %arg5[%c0_18, %c0_19], %10 {strides = array<i32>} : memref<64x128xf32, #tpu.memory_space<vmem>>, vector<64x128xf32>,
    %c0_20 = arith.constant 0 : index
    %c1 = arith.constant 1 : index
    %c0_21 = arith.constant 0 : index
    %12 = vector.load %arg8[%c0_20, %c1, %c0_21] : memref<10x10x128xbf16, #tpu.memory_space<vmem>>, vector<8x8x128xbf16>
    %13 = vector.shape_cast %12 : vector<8x8x128xbf16> to vector<64x128xbf16>
    %c1_22 = arith.constant 1 : index
    %c0_23 = arith.constant 0 : index
    %c0_24 = arith.constant 0 : index
    %14 = vector.load %arg4[%c1_22, %c0_23, %c0_24] : memref<9x128x128xbf16, #tpu.memory_space<vmem>>, vector<1x128x128xbf16>
    %15 = vector.shape_cast %14 : vector<1x128x128xbf16> to vector<128x128xbf16>
    %cst_25 = arith.constant dense<0.000000e+00> : vector<64x128xf32>
    %16 = tpu.matmul %13, %15, %cst_25 {dimension_numbers = #tpu.dot_dimension_numbers<[1], [0], [0], [1], [0, 0, 1, 1], [], []>} : vector<64x128xbf16>, vector<128x128xbf16>, vector<64x128xf32> -> vector<64x128xf32>
    %c0_26 = arith.constant 0 : index
    %c0_27 = arith.constant 0 : index
    %17 = vector.load %arg5[%c0_26, %c0_27] : memref<64x128xf32, #tpu.memory_space<vmem>>, vector<64x128xf32>
    %18 = arith.addf %17, %16 : vector<64x128xf32>
    %c0_28 = arith.constant 0 : index
    %c0_29 = arith.constant 0 : index
    %19 = vector.load %arg5[%c0_28, %c0_29] : memref<64x128xf32, #tpu.memory_space<vmem>>, vector<64x128xf32>
    tpu.vector_store %arg5[%c0_28, %c0_29], %18 {strides = array<i32>} : memref<64x128xf32, #tpu.memory_space<vmem>>, vector<64x128xf32>,
    %c0_30 = arith.constant 0 : index
    %c2 = arith.constant 2 : index
    %c0_31 = arith.constant 0 : index
    %20 = vector.load %arg8[%c0_30, %c2, %c0_31] : memref<10x10x128xbf16, #tpu.memory_space<vmem>>, vector<8x8x128xbf16>
    %21 = vector.shape_cast %20 : vector<8x8x128xbf16> to vector<64x128xbf16>
    %c2_32 = arith.constant 2 : index
    %c0_33 = arith.constant 0 : index
    %c0_34 = arith.constant 0 : index
    %22 = vector.load %arg4[%c2_32, %c0_33, %c0_34] : memref<9x128x128xbf16, #tpu.memory_space<vmem>>, vector<1x128x128xbf16>
    %23 = vector.shape_cast %22 : vector<1x128x128xbf16> to vector<128x128xbf16>
    %cst_35 = arith.constant dense<0.000000e+00> : vector<64x128xf32>
    %24 = tpu.matmul %21, %23, %cst_35 {dimension_numbers = #tpu.dot_dimension_numbers<[1], [0], [0], [1], [0, 0, 1, 1], [], []>} : vector<64x128xbf16>, vector<128x128xbf16>, vector<64x128xf32> -> vector<64x128xf32>
    %c0_36 = arith.constant 0 : index
    %c0_37 = arith.constant 0 : index
    %25 = vector.load %arg5[%c0_36, %c0_37] : memref<64x128xf32, #tpu.memory_space<vmem>>, vector<64x128xf32>
    %26 = arith.addf %25, %24 : vector<64x128xf32>
    %c0_38 = arith.constant 0 : index
    %c0_39 = arith.constant 0 : index
    %27 = vector.load %arg5[%c0_38, %c0_39] : memref<64x128xf32, #tpu.memory_space<vmem>>, vector<64x128xf32>
    tpu.vector_store %arg5[%c0_38, %c0_39], %26 {strides = array<i32>} : memref<64x128xf32, #tpu.memory_space<vmem>>, vector<64x128xf32>,
    %c1_40 = arith.constant 1 : index
    %c0_41 = arith.constant 0 : index
    %c0_42 = arith.constant 0 : index
    %28 = vector.load %arg8[%c1_40, %c0_41, %c0_42] : memref<10x10x128xbf16, #tpu.memory_space<vmem>>, vector<8x8x128xbf16>
    %29 = vector.shape_cast %28 : vector<8x8x128xbf16> to vector<64x128xbf16>
    %c3 = arith.constant 3 : index
    %c0_43 = arith.constant 0 : index
    %c0_44 = arith.constant 0 : index
    %30 = vector.load %arg4[%c3, %c0_43, %c0_44] : memref<9x128x128xbf16, #tpu.memory_space<vmem>>, vector<1x128x128xbf16>
    %31 = vector.shape_cast %30 : vector<1x128x128xbf16> to vector<128x128xbf16>
    %cst_45 = arith.constant dense<0.000000e+00> : vector<64x128xf32>
    %32 = tpu.matmul %29, %31, %cst_45 {dimension_numbers = #tpu.dot_dimension_numbers<[1], [0], [0], [1], [0, 0, 1, 1], [], []>} : vector<64x128xbf16>, vector<128x128xbf16>, vector<64x128xf32> -> vector<64x128xf32>
    %c0_46 = arith.constant 0 : index
    %c0_47 = arith.constant 0 : index
    %33 = vector.load %arg5[%c0_46, %c0_47] : memref<64x128xf32, #tpu.memory_space<vmem>>, vector<64x128xf32>
    %34 = arith.addf %33, %32 : vector<64x128xf32>
    %c0_48 = arith.constant 0 : index
    %c0_49 = arith.constant 0 : index
    %35 = vector.load %arg5[%c0_48, %c0_49] : memref<64x128xf32, #tpu.memory_space<vmem>>, vector<64x128xf32>
    tpu.vector_store %arg5[%c0_48, %c0_49], %34 {strides = array<i32>} : memref<64x128xf32, #tpu.memory_space<vmem>>, vector<64x128xf32>,
    %c1_50 = arith.constant 1 : index
    %c1_51 = arith.constant 1 : index
    %c0_52 = arith.constant 0 : index
    %36 = vector.load %arg8[%c1_50, %c1_51, %c0_52] : memref<10x10x128xbf16, #tpu.memory_space<vmem>>, vector<8x8x128xbf16>
    %37 = vector.shape_cast %36 : vector<8x8x128xbf16> to vector<64x128xbf16>
    %c4 = arith.constant 4 : index
    %c0_53 = arith.constant 0 : index
    %c0_54 = arith.constant 0 : index
    %38 = vector.load %arg4[%c4, %c0_53, %c0_54] : memref<9x128x128xbf16, #tpu.memory_space<vmem>>, vector<1x128x128xbf16>
    %39 = vector.shape_cast %38 : vector<1x128x128xbf16> to vector<128x128xbf16>
    %cst_55 = arith.constant dense<0.000000e+00> : vector<64x128xf32>
    %40 = tpu.matmul %37, %39, %cst_55 {dimension_numbers = #tpu.dot_dimension_numbers<[1], [0], [0], [1], [0, 0, 1, 1], [], []>} : vector<64x128xbf16>, vector<128x128xbf16>, vector<64x128xf32> -> vector<64x128xf32>
    %c0_56 = arith.constant 0 : index
    %c0_57 = arith.constant 0 : index
    %41 = vector.load %arg5[%c0_56, %c0_57] : memref<64x128xf32, #tpu.memory_space<vmem>>, vector<64x128xf32>
    %42 = arith.addf %41, %40 : vector<64x128xf32>
    %c0_58 = arith.constant 0 : index
    %c0_59 = arith.constant 0 : index
    %43 = vector.load %arg5[%c0_58, %c0_59] : memref<64x128xf32, #tpu.memory_space<vmem>>, vector<64x128xf32>
    tpu.vector_store %arg5[%c0_58, %c0_59], %42 {strides = array<i32>} : memref<64x128xf32, #tpu.memory_space<vmem>>, vector<64x128xf32>,
    %c1_60 = arith.constant 1 : index
    %c2_61 = arith.constant 2 : index
    %c0_62 = arith.constant 0 : index
    %44 = vector.load %arg8[%c1_60, %c2_61, %c0_62] : memref<10x10x128xbf16, #tpu.memory_space<vmem>>, vector<8x8x128xbf16>
    %45 = vector.shape_cast %44 : vector<8x8x128xbf16> to vector<64x128xbf16>
    %c5 = arith.constant 5 : index
    %c0_63 = arith.constant 0 : index
    %c0_64 = arith.constant 0 : index
    %46 = vector.load %arg4[%c5, %c0_63, %c0_64] : memref<9x128x128xbf16, #tpu.memory_space<vmem>>, vector<1x128x128xbf16>
    %47 = vector.shape_cast %46 : vector<1x128x128xbf16> to vector<128x128xbf16>
    %cst_65 = arith.constant dense<0.000000e+00> : vector<64x128xf32>
    %48 = tpu.matmul %45, %47, %cst_65 {dimension_numbers = #tpu.dot_dimension_numbers<[1], [0], [0], [1], [0, 0, 1, 1], [], []>} : vector<64x128xbf16>, vector<128x128xbf16>, vector<64x128xf32> -> vector<64x128xf32>
    %c0_66 = arith.constant 0 : index
    %c0_67 = arith.constant 0 : index
    %49 = vector.load %arg5[%c0_66, %c0_67] : memref<64x128xf32, #tpu.memory_space<vmem>>, vector<64x128xf32>
    %50 = arith.addf %49, %48 : vector<64x128xf32>
    %c0_68 = arith.constant 0 : index
    %c0_69 = arith.constant 0 : index
    %51 = vector.load %arg5[%c0_68, %c0_69] : memref<64x128xf32, #tpu.memory_space<vmem>>, vector<64x128xf32>
    tpu.vector_store %arg5[%c0_68, %c0_69], %50 {strides = array<i32>} : memref<64x128xf32, #tpu.memory_space<vmem>>, vector<64x128xf32>,
    %c2_70 = arith.constant 2 : index
    %c0_71 = arith.constant 0 : index
    %c0_72 = arith.constant 0 : index
    %52 = vector.load %arg8[%c2_70, %c0_71, %c0_72] : memref<10x10x128xbf16, #tpu.memory_space<vmem>>, vector<8x8x128xbf16>
    %53 = vector.shape_cast %52 : vector<8x8x128xbf16> to vector<64x128xbf16>
    %c6 = arith.constant 6 : index
    %c0_73 = arith.constant 0 : index
    %c0_74 = arith.constant 0 : index
    %54 = vector.load %arg4[%c6, %c0_73, %c0_74] : memref<9x128x128xbf16, #tpu.memory_space<vmem>>, vector<1x128x128xbf16>
    %55 = vector.shape_cast %54 : vector<1x128x128xbf16> to vector<128x128xbf16>
    %cst_75 = arith.constant dense<0.000000e+00> : vector<64x128xf32>
    %56 = tpu.matmul %53, %55, %cst_75 {dimension_numbers = #tpu.dot_dimension_numbers<[1], [0], [0], [1], [0, 0, 1, 1], [], []>} : vector<64x128xbf16>, vector<128x128xbf16>, vector<64x128xf32> -> vector<64x128xf32>
    %c0_76 = arith.constant 0 : index
    %c0_77 = arith.constant 0 : index
    %57 = vector.load %arg5[%c0_76, %c0_77] : memref<64x128xf32, #tpu.memory_space<vmem>>, vector<64x128xf32>
    %58 = arith.addf %57, %56 : vector<64x128xf32>
    %c0_78 = arith.constant 0 : index
    %c0_79 = arith.constant 0 : index
    %59 = vector.load %arg5[%c0_78, %c0_79] : memref<64x128xf32, #tpu.memory_space<vmem>>, vector<64x128xf32>
    tpu.vector_store %arg5[%c0_78, %c0_79], %58 {strides = array<i32>} : memref<64x128xf32, #tpu.memory_space<vmem>>, vector<64x128xf32>,
    %c2_80 = arith.constant 2 : index
    %c1_81 = arith.constant 1 : index
    %c0_82 = arith.constant 0 : index
    %60 = vector.load %arg8[%c2_80, %c1_81, %c0_82] : memref<10x10x128xbf16, #tpu.memory_space<vmem>>, vector<8x8x128xbf16>
    %61 = vector.shape_cast %60 : vector<8x8x128xbf16> to vector<64x128xbf16>
    %c7 = arith.constant 7 : index
    %c0_83 = arith.constant 0 : index
    %c0_84 = arith.constant 0 : index
    %62 = vector.load %arg4[%c7, %c0_83, %c0_84] : memref<9x128x128xbf16, #tpu.memory_space<vmem>>, vector<1x128x128xbf16>
    %63 = vector.shape_cast %62 : vector<1x128x128xbf16> to vector<128x128xbf16>
    %cst_85 = arith.constant dense<0.000000e+00> : vector<64x128xf32>
    %64 = tpu.matmul %61, %63, %cst_85 {dimension_numbers = #tpu.dot_dimension_numbers<[1], [0], [0], [1], [0, 0, 1, 1], [], []>} : vector<64x128xbf16>, vector<128x128xbf16>, vector<64x128xf32> -> vector<64x128xf32>
    %c0_86 = arith.constant 0 : index
    %c0_87 = arith.constant 0 : index
    %65 = vector.load %arg5[%c0_86, %c0_87] : memref<64x128xf32, #tpu.memory_space<vmem>>, vector<64x128xf32>
    %66 = arith.addf %65, %64 : vector<64x128xf32>
    %c0_88 = arith.constant 0 : index
    %c0_89 = arith.constant 0 : index
    %67 = vector.load %arg5[%c0_88, %c0_89] : memref<64x128xf32, #tpu.memory_space<vmem>>, vector<64x128xf32>
    tpu.vector_store %arg5[%c0_88, %c0_89], %66 {strides = array<i32>} : memref<64x128xf32, #tpu.memory_space<vmem>>, vector<64x128xf32>,
    %c2_90 = arith.constant 2 : index
    %c2_91 = arith.constant 2 : index
    %c0_92 = arith.constant 0 : index
    %68 = vector.load %arg8[%c2_90, %c2_91, %c0_92] : memref<10x10x128xbf16, #tpu.memory_space<vmem>>, vector<8x8x128xbf16>
    %69 = vector.shape_cast %68 : vector<8x8x128xbf16> to vector<64x128xbf16>
    %c8_93 = arith.constant 8 : index
    %c0_94 = arith.constant 0 : index
    %c0_95 = arith.constant 0 : index
    %70 = vector.load %arg4[%c8_93, %c0_94, %c0_95] : memref<9x128x128xbf16, #tpu.memory_space<vmem>>, vector<1x128x128xbf16>
    %71 = vector.shape_cast %70 : vector<1x128x128xbf16> to vector<128x128xbf16>
    %cst_96 = arith.constant dense<0.000000e+00> : vector<64x128xf32>
    %72 = tpu.matmul %69, %71, %cst_96 {dimension_numbers = #tpu.dot_dimension_numbers<[1], [0], [0], [1], [0, 0, 1, 1], [], []>} : vector<64x128xbf16>, vector<128x128xbf16>, vector<64x128xf32> -> vector<64x128xf32>
    %c0_97 = arith.constant 0 : index
    %c0_98 = arith.constant 0 : index
    %73 = vector.load %arg5[%c0_97, %c0_98] : memref<64x128xf32, #tpu.memory_space<vmem>>, vector<64x128xf32>
    %74 = arith.addf %73, %72 : vector<64x128xf32>
    %c0_99 = arith.constant 0 : index
    %c0_100 = arith.constant 0 : index
    %75 = vector.load %arg5[%c0_99, %c0_100] : memref<64x128xf32, #tpu.memory_space<vmem>>, vector<64x128xf32>
    tpu.vector_store %arg5[%c0_99, %c0_100], %74 {strides = array<i32>} : memref<64x128xf32, #tpu.memory_space<vmem>>, vector<64x128xf32>,
    %c0_101 = arith.constant 0 : index
    %c0_102 = arith.constant 0 : index
    %76 = vector.load %arg5[%c0_101, %c0_102] : memref<64x128xf32, #tpu.memory_space<vmem>>, vector<64x128xf32>
    %cst_103 = arith.constant dense<0.000000e+00> : vector<128xf32>
    %77 = vector.multi_reduction <add>, %76, %cst_103 [0] : vector<64x128xf32> to vector<128xf32>
    %78 = vector.shape_cast %77 : vector<128xf32> to vector<1x128xf32>
    %c0_104 = arith.constant 0 : index
    %c0_105 = arith.constant 0 : index
    %c0_106 = arith.constant 0 : index
    %79 = vector.load %arg6[%c0_104, %c0_105, %c0_106] : memref<1x1x128xf32, #tpu.memory_space<vmem>>, vector<1x1x128xf32>
    %80 = vector.shape_cast %79 : vector<1x1x128xf32> to vector<1x128xf32>
    %81 = vector.shape_cast %78 : vector<1x128xf32> to vector<1x1x128xf32>
    tpu.vector_store %arg6[%c0_104, %c0_105, %c0_106], %81 {strides = array<i32>} : memref<1x1x128xf32, #tpu.memory_space<vmem>>, vector<1x1x128xf32>,
    %82 = arith.mulf %76, %76 : vector<64x128xf32>
    %cst_107 = arith.constant dense<0.000000e+00> : vector<128xf32>
    %83 = vector.multi_reduction <add>, %82, %cst_107 [0] : vector<64x128xf32> to vector<128xf32>
    %84 = vector.shape_cast %83 : vector<128xf32> to vector<1x128xf32>
    %c0_108 = arith.constant 0 : index
    %c0_109 = arith.constant 0 : index
    %c0_110 = arith.constant 0 : index
    %85 = vector.load %arg7[%c0_108, %c0_109, %c0_110] : memref<1x1x128xf32, #tpu.memory_space<vmem>>, vector<1x1x128xf32>
    %86 = vector.shape_cast %85 : vector<1x1x128xf32> to vector<1x128xf32>
    %87 = vector.shape_cast %84 : vector<1x128xf32> to vector<1x1x128xf32>
    tpu.vector_store %arg7[%c0_108, %c0_109, %c0_110], %87 {strides = array<i32>} : memref<1x1x128xf32, #tpu.memory_space<vmem>>, vector<1x1x128xf32>,
    return
  }
  func.func @transform_0(%arg0: i32, %arg1: i32) -> (i32, i32, i32, i32) {
    %c0_i32 = arith.constant 0 : i32
    %c0_i32_0 = arith.constant 0 : i32
    %c0_i32_1 = arith.constant 0 : i32
    return %arg0, %arg1, %c0_i32, %c0_i32_0 : i32, i32, i32, i32
  }
  func.func @transform_1(%arg0: i32, %arg1: i32) -> (i32, i32, i32, i32) {
    %c1_i32 = arith.constant 1 : i32
    %0 = arith.addi %arg1, %c1_i32 : i32
    %c0_i32 = arith.constant 0 : i32
    %c0_i32_0 = arith.constant 0 : i32
    %c0_i32_1 = arith.constant 0 : i32
    return %arg0, %0, %c0_i32, %c0_i32_0 : i32, i32, i32, i32
  }
  func.func @transform_2(%arg0: i32, %arg1: i32) -> (i32, i32, i32) {
    %c0_i32 = arith.constant 0 : i32
    %c0_i32_0 = arith.constant 0 : i32
    %c0_i32_1 = arith.constant 0 : i32
    %c0_i32_2 = arith.constant 0 : i32
    return %c0_i32, %c0_i32_0, %c0_i32_1 : i32, i32, i32
  }
  func.func @transform_3(%arg0: i32, %arg1: i32) -> (i32, i32) {
    %c1_i32 = arith.constant 1 : i32
    %0 = arith.muli %arg0, %c1_i32 : i32
    %1 = arith.addi %0, %arg1 : i32
    %c0_i32 = arith.constant 0 : i32
    %c0_i32_0 = arith.constant 0 : i32
    return %1, %c0_i32 : i32, i32
  }
  func.func @transform_4(%arg0: i32, %arg1: i32) -> (i32, i32, i32) {
    %c1_i32 = arith.constant 1 : i32
    %0 = arith.muli %arg0, %c1_i32 : i32
    %1 = arith.addi %0, %arg1 : i32
    %c0_i32 = arith.constant 0 : i32
    %c0_i32_0 = arith.constant 0 : i32
    %c0_i32_1 = arith.constant 0 : i32
    return %1, %c0_i32, %c0_i32_0 : i32, i32, i32
  }
  func.func @transform_5(%arg0: i32, %arg1: i32) -> (i32, i32, i32) {
    %c1_i32 = arith.constant 1 : i32
    %0 = arith.muli %arg0, %c1_i32 : i32
    %1 = arith.addi %0, %arg1 : i32
    %c0_i32 = arith.constant 0 : i32
    %c0_i32_0 = arith.constant 0 : i32
    %c0_i32_1 = arith.constant 0 : i32
    return %1, %c0_i32, %c0_i32_0 : i32, i32, i32
  }
}

module attributes {stable_mosaic.version = 11 : i64} {
  func.func @_bn_relu_kernel(%arg0: i32, %arg1: memref<128x128xf32, #tpu.memory_space<vmem>>, %arg2: memref<1x128xf32, #tpu.memory_space<vmem>>, %arg3: memref<1x128xf32, #tpu.memory_space<vmem>>, %arg4: memref<128x128xf32, #tpu.memory_space<vmem>>) attributes {dimension_semantics = [#tpu.dimension_semantics<parallel>], iteration_bounds = array<i64: 1>, scalar_prefetch = 0 : i64, scratch_operands = 0 : i64, tpu.core_type = #tpu.core_type<tc>, window_params = [{transform_indices = @transform_0, window_bounds = array<i64: 128, 128>}, {pipeline_mode = #tpu.pipeline_mode<synchronous>, transform_indices = @transform_1, window_bounds = array<i64: 1, 128>}, {pipeline_mode = #tpu.pipeline_mode<synchronous>, transform_indices = @transform_2, window_bounds = array<i64: 1, 128>}, {transform_indices = @transform_3, window_bounds = array<i64: 128, 128>}]} {
    %c0 = arith.constant 0 : index
    %c0_0 = arith.constant 0 : index
    %0 = vector.load %arg1[%c0, %c0_0] : memref<128x128xf32, #tpu.memory_space<vmem>>, vector<128x128xf32>
    %c0_1 = arith.constant 0 : index
    %c0_2 = arith.constant 0 : index
    %1 = vector.load %arg2[%c0_1, %c0_2] : memref<1x128xf32, #tpu.memory_space<vmem>>, vector<1x128xf32>
    %2 = vector.broadcast %1 : vector<1x128xf32> to vector<128x128xf32>
    %3 = arith.mulf %0, %2 : vector<128x128xf32>
    %c0_3 = arith.constant 0 : index
    %c0_4 = arith.constant 0 : index
    %4 = vector.load %arg3[%c0_3, %c0_4] : memref<1x128xf32, #tpu.memory_space<vmem>>, vector<1x128xf32>
    %5 = vector.broadcast %4 : vector<1x128xf32> to vector<128x128xf32>
    %6 = arith.addf %3, %5 : vector<128x128xf32>
    %cst = arith.constant 0.000000e+00 : f32
    %7 = vector.broadcast %cst : f32 to vector<128x128xf32>
    %8 = arith.maximumf %6, %7 : vector<128x128xf32>
    %c0_5 = arith.constant 0 : index
    %c0_6 = arith.constant 0 : index
    %9 = vector.load %arg4[%c0_5, %c0_6] : memref<128x128xf32, #tpu.memory_space<vmem>>, vector<128x128xf32>
    tpu.vector_store %arg4[%c0_5, %c0_6], %8 {strides = array<i32>} : memref<128x128xf32, #tpu.memory_space<vmem>>, vector<128x128xf32>,
    return
  }
  func.func @transform_0(%arg0: i32) -> (i32, i32) {
    %c0_i32 = arith.constant 0 : i32
    %c0_i32_0 = arith.constant 0 : i32
    return %arg0, %c0_i32 : i32, i32
  }
  func.func @transform_1(%arg0: i32) -> (i32, i32) {
    %c0_i32 = arith.constant 0 : i32
    %c0_i32_0 = arith.constant 0 : i32
    %c0_i32_1 = arith.constant 0 : i32
    return %c0_i32, %c0_i32_0 : i32, i32
  }
  func.func @transform_2(%arg0: i32) -> (i32, i32) {
    %c0_i32 = arith.constant 0 : i32
    %c0_i32_0 = arith.constant 0 : i32
    %c0_i32_1 = arith.constant 0 : i32
    return %c0_i32, %c0_i32_0 : i32, i32
  }
  func.func @transform_3(%arg0: i32) -> (i32, i32) {
    %c0_i32 = arith.constant 0 : i32
    %c0_i32_0 = arith.constant 0 : i32
    return %arg0, %c0_i32 : i32, i32
  }
}

</mosaic_0001>

<llo_original>
// kernel: downsample_forward.5
$region0: #{downsample_forward.5}
  #allocation0 [shape = 'u32[]', space=smem, size = 0x4, offset = 0x4, fixed_abs, tag = 'smem constant byte address 0x4 - core index']
  #allocation1 [shape = 'u32[144,128]{1,0:T(1,128)}', space=vmem, size = 0x12000, scoped, tag = 'internal scratch']
  %s0 = inlined_call_operand.vmem [shape: f32[16,2,8,8], index: 0, kind: input, shape index: {}]
  %s1 = inlined_call_operand.vmem [shape: bf16[16,8,4], index: 1, kind: output, shape index: {}]
  %s2 = sld [smem:[#allocation0]]
  $region14: #{downsample_forward.5} parent=0
    _
  %s4 = ssub.s32 1, %s2
  %s5 = scalar_select 0, %s4, %s2
  // Predicated region
  $region2: #{downsample_forward.5} parent=0 // pred_check
    _
  $region3: #{downsample_forward.5} parent=0 // pred_check_branch
    %7 = sbr.rel (0) target = $region5
  $region4: #{downsample_forward.5} parent=0 // pred_region
    _
  $region5: #{downsample_forward.5} parent=0 // pred_fallthru
    _
  %v8 = vld [vmem:[%s0] sm:$0xff]
  %v9 = vld [vmem:[%s0 + $0x10] sm:$0xff]
  %v10 = vld [vmem:[%s0 + $0x20] sm:$0xff]
  %v11 = vld [vmem:[%s0 + $0x30] sm:$0xff]
  %v12 = vld [vmem:[%s0 + $0x40] sm:$0xff]
  %v13 = vld [vmem:[%s0 + $0x50] sm:$0xff]
  %v14 = vld [vmem:[%s0 + $0x60] sm:$0xff]
  %v15 = vld [vmem:[%s0 + $0x70] sm:$0xff]
  %v16 = vld [vmem:[%s0 + $0x80] sm:$0xff]
  %v17 = vld [vmem:[%s0 + $0x90] sm:$0xff]
  %v18 = vld [vmem:[%s0 + $0xa0] sm:$0xff]
  %v19 = vld [vmem:[%s0 + $0xb0] sm:$0xff]
  %v20 = vld [vmem:[%s0 + $0xc0] sm:$0xff]
  %v21 = vld [vmem:[%s0 + $0xd0] sm:$0xff]
  %v22 = vld [vmem:[%s0 + $0xe0] sm:$0xff]
  %v23 = vld [vmem:[%s0 + $0xf0] sm:$0xff]
  %s24 = scalar_lea.vmem %s0, 8
  %v25 = vld [vmem:[%s24] sm:$0xff]
  %v26 = vld [vmem:[%s24 + $0x10] sm:$0xff]
  %v27 = vld [vmem:[%s24 + $0x20] sm:$0xff]
  %v28 = vld [vmem:[%s24 + $0x30] sm:$0xff]
  %v29 = vld [vmem:[%s24 + $0x40] sm:$0xff]
  %v30 = vld [vmem:[%s24 + $0x50] sm:$0xff]
  %v31 = vld [vmem:[%s24 + $0x60] sm:$0xff]
  %v32 = vld [vmem:[%s24 + $0x70] sm:$0xff]
  %v33 = vld [vmem:[%s24 + $0x80] sm:$0xff]
  %v34 = vld [vmem:[%s24 + $0x90] sm:$0xff]
  %v35 = vld [vmem:[%s24 + $0xa0] sm:$0xff]
  %v36 = vld [vmem:[%s24 + $0xb0] sm:$0xff]
  %v37 = vld [vmem:[%s24 + $0xc0] sm:$0xff]
  %v38 = vld [vmem:[%s24 + $0xd0] sm:$0xff]
  %v39 = vld [vmem:[%s24 + $0xe0] sm:$0xff]
  %v40 = vld [vmem:[%s24 + $0xf0] sm:$0xff]
  %v41 = vmax.f32 %v8, %v25
  %v42 = vmax.f32 %v9, %v26
  %v43 = vmax.f32 %v10, %v27
  %v44 = vmax.f32 %v11, %v28
  %v45 = vmax.f32 %v12, %v29
  %v46 = vmax.f32 %v13, %v30
  %v47 = vmax.f32 %v14, %v31
  %v48 = vmax.f32 %v15, %v32
  %v49 = vmax.f32 %v16, %v33
  %v50 = vmax.f32 %v17, %v34
  %v51 = vmax.f32 %v18, %v35
  %v52 = vmax.f32 %v19, %v36
  %v53 = vmax.f32 %v20, %v37
  %v54 = vmax.f32 %v21, %v38
  %v55 = vmax.f32 %v22, %v39
  %v56 = vmax.f32 %v23, %v40
  %73 = vrot.lane.b32.xlu0 %v41, 124
  %v74 = vpop.permute.xlu0 %73
  %75 = vrot.lane.b32.xlu0 %v42, 124
  %v76 = vpop.permute.xlu0 %75
  %77 = vrot.lane.b32.xlu0 %v43, 124
  %v78 = vpop.permute.xlu0 %77
  %79 = vrot.lane.b32.xlu0 %v44, 124
  %v80 = vpop.permute.xlu0 %79
  %81 = vrot.lane.b32.xlu0 %v45, 124
  %v82 = vpop.permute.xlu0 %81
  %83 = vrot.lane.b32.xlu0 %v46, 124
  %v84 = vpop.permute.xlu0 %83
  %85 = vrot.lane.b32.xlu0 %v47, 124
  %v86 = vpop.permute.xlu0 %85
  %87 = vrot.lane.b32.xlu0 %v48, 124
  %v88 = vpop.permute.xlu0 %87
  %89 = vrot.lane.b32.xlu0 %v49, 124
  %v90 = vpop.permute.xlu0 %89
  %91 = vrot.lane.b32.xlu0 %v50, 124
  %v92 = vpop.permute.xlu0 %91
  %93 = vrot.lane.b32.xlu0 %v51, 124
  %v94 = vpop.permute.xlu0 %93
  %95 = vrot.lane.b32.xlu0 %v52, 124
  %v96 = vpop.permute.xlu0 %95
  %97 = vrot.lane.b32.xlu0 %v53, 124
  %v98 = vpop.permute.xlu0 %97
  %99 = vrot.lane.b32.xlu0 %v54, 124
  %v100 = vpop.permute.xlu0 %99
  %101 = vrot.lane.b32.xlu0 %v55, 124
  %v102 = vpop.permute.xlu0 %101
  %103 = vrot.lane.b32.xlu0 %v56, 124
  %v104 = vpop.permute.xlu0 %103
  %v121 = vmax.f32 %v41, %v74
  %v122 = vmax.f32 %v42, %v76
  %v123 = vmax.f32 %v43, %v78
  %v124 = vmax.f32 %v44, %v80
  %v125 = vmax.f32 %v45, %v82
  %v126 = vmax.f32 %v46, %v84
  %v127 = vmax.f32 %v47, %v86
  %v128 = vmax.f32 %v48, %v88
  %v129 = vmax.f32 %v49, %v90
  %v130 = vmax.f32 %v50, %v92
  %v131 = vmax.f32 %v51, %v94
  %v132 = vmax.f32 %v52, %v96
  %v133 = vmax.f32 %v53, %v98
  %v134 = vmax.f32 %v54, %v100
  %v135 = vmax.f32 %v55, %v102
  %v136 = vmax.f32 %v56, %v104
  %v137 = vpack.c.bf16 %v121, %v121
  %v138 = vpack.c.bf16 %v122, %v122
  %v139 = vpack.c.bf16 %v123, %v123
  %v140 = vpack.c.bf16 %v124, %v124
  %v141 = vpack.c.bf16 %v125, %v125
  %v142 = vpack.c.bf16 %v126, %v126
  %v143 = vpack.c.bf16 %v127, %v127
  %v144 = vpack.c.bf16 %v128, %v128
  %v145 = vpack.c.bf16 %v129, %v129
  %v146 = vpack.c.bf16 %v130, %v130
  %v147 = vpack.c.bf16 %v131, %v131
  %v148 = vpack.c.bf16 %v132, %v132
  %v149 = vpack.c.bf16 %v133, %v133
  %v150 = vpack.c.bf16 %v134, %v134
  %v151 = vpack.c.bf16 %v135, %v135
  %v152 = vpack.c.bf16 %v136, %v136
  %vm153 = vcmask 27648
  %154 = vst.msk [vmem:[%s1] sm:$0xf] %vm153, %v137
  %155 = vst.msk [vmem:[%s1 + $0x4] sm:$0xf] %vm153, %v138
  %156 = vst.msk [vmem:[%s1 + $0x8] sm:$0xf] %vm153, %v139
  %157 = vst.msk [vmem:[%s1 + $0xc] sm:$0xf] %vm153, %v140
  %158 = vst.msk [vmem:[%s1 + $0x10] sm:$0xf] %vm153, %v141
  %159 = vst.msk [vmem:[%s1 + $0x14] sm:$0xf] %vm153, %v142
  %160 = vst.msk [vmem:[%s1 + $0x18] sm:$0xf] %vm153, %v143
  %161 = vst.msk [vmem:[%s1 + $0x1c] sm:$0xf] %vm153, %v144
  %162 = vst.msk [vmem:[%s1 + $0x20] sm:$0xf] %vm153, %v145
  %163 = vst.msk [vmem:[%s1 + $0x24] sm:$0xf] %vm153, %v146
  %164 = vst.msk [vmem:[%s1 + $0x28] sm:$0xf] %vm153, %v147
  %165 = vst.msk [vmem:[%s1 + $0x2c] sm:$0xf] %vm153, %v148
  %166 = vst.msk [vmem:[%s1 + $0x30] sm:$0xf] %vm153, %v149
  %167 = vst.msk [vmem:[%s1 + $0x34] sm:$0xf] %vm153, %v150
  %168 = vst.msk [vmem:[%s1 + $0x38] sm:$0xf] %vm153, %v151
  %169 = vst.msk [vmem:[%s1 + $0x3c] sm:$0xf] %vm153, %v152
  // Predicated region
  $region6: #{downsample_forward.5} parent=0 // pred_check
    _
  $region7: #{downsample_forward.5} parent=0 // pred_check_branch
    %171 = sbr.rel (0) target = $region9
  $region8: #{downsample_forward.5} parent=0 // pred_region
    _
  $region9: #{downsample_forward.5} parent=0 // pred_fallthru
    _
  // Predicated region
  $region10: #{downsample_forward.5} parent=0 // pred_check
    _
  $region11: #{downsample_forward.5} parent=0 // pred_check_branch
    %173 = sbr.rel (0) target = $region13
  $region12: #{downsample_forward.5} parent=0 // pred_region
    _
  $region13: #{downsample_forward.5} parent=0 // pred_fallthru
    _

// kernel: downsample_forward.7
$region0: #{downsample_forward.7}
  #allocation0 [shape = 'u32[]', space=smem, size = 0x4, offset = 0x4, fixed_abs, tag = 'smem constant byte address 0x4 - core index']
  #allocation1 [shape = 'u32[144,128]{1,0:T(1,128)}', space=vmem, size = 0x12000, scoped, tag = 'internal scratch']
  %s0 = inlined_call_operand.vmem [shape: f32[128,128], index: 0, kind: input, shape index: {}]
  %s1 = inlined_call_operand.vmem [shape: f32[1,128], index: 1, kind: input, shape index: {}]
  %s2 = inlined_call_operand.vmem [shape: f32[1,128], index: 2, kind: input, shape index: {}]
  %s3 = inlined_call_operand.vmem [shape: bf16[128,128], index: 3, kind: output, shape index: {}]
  %s4 = sld [smem:[#allocation0]]
  $region22: #{downsample_forward.7} parent=0
    _
  %s6 = ssub.s32 1, %s4
  %s7 = scalar_select 0, %s6, %s4
  // Predicated region
  $region2: #{downsample_forward.7} parent=0 // pred_check
    _
  $region3: #{downsample_forward.7} parent=0 // pred_check_branch
    %9 = sbr.rel (0) target = $region5
  $region4: #{downsample_forward.7} parent=0 // pred_region
    _
  $region5: #{downsample_forward.7} parent=0 // pred_fallthru
    _
  // Predicated region
  $region6: #{downsample_forward.7} parent=0 // pred_check
    _
  $region7: #{downsample_forward.7} parent=0 // pred_check_branch
    %11 = sbr.rel (0) target = $region9
  $region8: #{downsample_forward.7} parent=0 // pred_region
    _
  $region9: #{downsample_forward.7} parent=0 // pred_fallthru
    _
  // Predicated region
  $region10: #{downsample_forward.7} parent=0 // pred_check
    _
  $region11: #{downsample_forward.7} parent=0 // pred_check_branch
    %13 = sbr.rel (0) target = $region13
  $region12: #{downsample_forward.7} parent=0 // pred_region
    _
  $region13: #{downsample_forward.7} parent=0 // pred_fallthru
    _
  %v14 = vld [vmem:[%s0] sm:$0xff]
  %v15 = vld [vmem:[%s0 + $0x8] sm:$0xff]
  %v16 = vld [vmem:[%s0 + $0x10] sm:$0xff]
  %v17 = vld [vmem:[%s0 + $0x18] sm:$0xff]
  %v18 = vld [vmem:[%s0 + $0x20] sm:$0xff]
  %v19 = vld [vmem:[%s0 + $0x28] sm:$0xff]
  %v20 = vld [vmem:[%s0 + $0x30] sm:$0xff]
  %v21 = vld [vmem:[%s0 + $0x38] sm:$0xff]
  %v22 = vld [vmem:[%s0 + $0x40] sm:$0xff]
  %v23 = vld [vmem:[%s0 + $0x48] sm:$0xff]
  %v24 = vld [vmem:[%s0 + $0x50] sm:$0xff]
  %v25 = vld [vmem:[%s0 + $0x58] sm:$0xff]
  %v26 = vld [vmem:[%s0 + $0x60] sm:$0xff]
  %v27 = vld [vmem:[%s0 + $0x68] sm:$0xff]
  %v28 = vld [vmem:[%s0 + $0x70] sm:$0xff]
  %v29 = vld [vmem:[%s0 + $0x78] sm:$0xff]
  %v30 = vld [vmem:[%s1] sm:$0x1]
  %v32 = vlaneseq
  %v33 = vshrl.u32 %v32, 7
  %v34 = vsub.s32 0, %v33
  %v35 = vrot.slane %v30, %v34
  %v37 = vmul.f32 %v14, %v35
  %v38 = vmul.f32 %v15, %v35
  %v39 = vmul.f32 %v16, %v35
  %v40 = vmul.f32 %v17, %v35
  %v41 = vmul.f32 %v18, %v35
  %v42 = vmul.f32 %v19, %v35
  %v43 = vmul.f32 %v20, %v35
  %v44 = vmul.f32 %v21, %v35
  %v45 = vmul.f32 %v22, %v35
  %v46 = vmul.f32 %v23, %v35
  %v47 = vmul.f32 %v24, %v35
  %v48 = vmul.f32 %v25, %v35
  %v49 = vmul.f32 %v26, %v35
  %v50 = vmul.f32 %v27, %v35
  %v51 = vmul.f32 %v28, %v35
  %v52 = vmul.f32 %v29, %v35
  %v53 = vld [vmem:[%s2] sm:$0x1]
  %v55 = vlaneseq
  %v56 = vshrl.u32 %v55, 7
  %v57 = vsub.s32 0, %v56
  %v58 = vrot.slane %v53, %v57
  %v60 = vadd.f32 %v37, %v58
  %v61 = vadd.f32 %v38, %v58
  %v62 = vadd.f32 %v39, %v58
  %v63 = vadd.f32 %v40, %v58
  %v64 = vadd.f32 %v41, %v58
  %v65 = vadd.f32 %v42, %v58
  %v66 = vadd.f32 %v43, %v58
  %v67 = vadd.f32 %v44, %v58
  %v68 = vadd.f32 %v45, %v58
  %v69 = vadd.f32 %v46, %v58
  %v70 = vadd.f32 %v47, %v58
  %v71 = vadd.f32 %v48, %v58
  %v72 = vadd.f32 %v49, %v58
  %v73 = vadd.f32 %v50, %v58
  %v74 = vadd.f32 %v51, %v58
  %v75 = vadd.f32 %v52, %v58
  %v76 = vmax.f32 %v60, 0.0
  %v77 = vmax.f32 %v61, 0.0
  %v78 = vmax.f32 %v62, 0.0
  %v79 = vmax.f32 %v63, 0.0
  %v80 = vmax.f32 %v64, 0.0
  %v81 = vmax.f32 %v65, 0.0
  %v82 = vmax.f32 %v66, 0.0
  %v83 = vmax.f32 %v67, 0.0
  %v84 = vmax.f32 %v68, 0.0
  %v85 = vmax.f32 %v69, 0.0
  %v86 = vmax.f32 %v70, 0.0
  %v87 = vmax.f32 %v71, 0.0
  %v88 = vmax.f32 %v72, 0.0
  %v89 = vmax.f32 %v73, 0.0
  %v90 = vmax.f32 %v74, 0.0
  %v91 = vmax.f32 %v75, 0.0
  %v92 = vpack.c.bf16 %v77, %v76
  %v93 = vpack.c.bf16 %v79, %v78
  %v94 = vpack.c.bf16 %v81, %v80
  %v95 = vpack.c.bf16 %v83, %v82
  %v96 = vpack.c.bf16 %v85, %v84
  %v97 = vpack.c.bf16 %v87, %v86
  %v98 = vpack.c.bf16 %v89, %v88
  %v99 = vpack.c.bf16 %v91, %v90
  %v108 = vunpack.c.l.b16 %v92
  %v109 = vunpack.c.h.b16 %v92
  %v110 = vunpack.c.l.b16 %v93
  %v111 = vunpack.c.h.b16 %v93
  %v112 = vunpack.c.l.b16 %v94
  %v113 = vunpack.c.h.b16 %v94
  %v114 = vunpack.c.l.b16 %v95
  %v115 = vunpack.c.h.b16 %v95
  %v116 = vunpack.c.l.b16 %v96
  %v117 = vunpack.c.h.b16 %v96
  %v118 = vunpack.c.l.b16 %v97
  %v119 = vunpack.c.h.b16 %v97
  %v120 = vunpack.c.l.b16 %v98
  %v121 = vunpack.c.h.b16 %v98
  %v122 = vunpack.c.l.b16 %v99
  %v123 = vunpack.c.h.b16 %v99
  %v124 = vpack.c.b16 %v108, %v108
  %v125 = vpack.c.b16 %v109, %v109
  %v126 = vpack.c.b16 %v110, %v110
  %v127 = vpack.c.b16 %v111, %v111
  %v128 = vpack.c.b16 %v112, %v112
  %v129 = vpack.c.b16 %v113, %v113
  %v130 = vpack.c.b16 %v114, %v114
  %v131 = vpack.c.b16 %v115, %v115
  %v132 = vpack.c.b16 %v116, %v116
  %v133 = vpack.c.b16 %v117, %v117
  %v134 = vpack.c.b16 %v118, %v118
  %v135 = vpack.c.b16 %v119, %v119
  %v136 = vpack.c.b16 %v120, %v120
  %v137 = vpack.c.b16 %v121, %v121
  %v138 = vpack.c.b16 %v122, %v122
  %v139 = vpack.c.b16 %v123, %v123
  %156 = vst [vmem:[%s3] sm:$0xf] %v124
  %157 = vst [vmem:[%s3 + $0x4] sm:$0xf] %v125
  %158 = vst [vmem:[%s3 + $0x8] sm:$0xf] %v126
  %159 = vst [vmem:[%s3 + $0xc] sm:$0xf] %v127
  %160 = vst [vmem:[%s3 + $0x10] sm:$0xf] %v128
  %161 = vst [vmem:[%s3 + $0x14] sm:$0xf] %v129
  %162 = vst [vmem:[%s3 + $0x18] sm:$0xf] %v130
  %163 = vst [vmem:[%s3 + $0x1c] sm:$0xf] %v131
  %164 = vst [vmem:[%s3 + $0x20] sm:$0xf] %v132
  %165 = vst [vmem:[%s3 + $0x24] sm:$0xf] %v133
  %166 = vst [vmem:[%s3 + $0x28] sm:$0xf] %v134
  %167 = vst [vmem:[%s3 + $0x2c] sm:$0xf] %v135
  %168 = vst [vmem:[%s3 + $0x30] sm:$0xf] %v136
  %169 = vst [vmem:[%s3 + $0x34] sm:$0xf] %v137
  %170 = vst [vmem:[%s3 + $0x38] sm:$0xf] %v138
  %171 = vst [vmem:[%s3 + $0x3c] sm:$0xf] %v139
  // Predicated region
  $region14: #{downsample_forward.7} parent=0 // pred_check
    _
  $region15: #{downsample_forward.7} parent=0 // pred_check_branch
    %173 = sbr.rel (0) target = $region17
  $region16: #{downsample_forward.7} parent=0 // pred_region
    _
  $region17: #{downsample_forward.7} parent=0 // pred_fallthru
    _
  // Predicated region
  $region18: #{downsample_forward.7} parent=0 // pred_check
    _
  $region19: #{downsample_forward.7} parent=0 // pred_check_branch
    %175 = sbr.rel (0) target = $region21
  $region20: #{downsample_forward.7} parent=0 // pred_region
    _
  $region21: #{downsample_forward.7} parent=0 // pred_fallthru
    _

// kernel: downsample_forward.9
$region0: #{downsample_forward.9}
  #allocation0 [shape = 'u32[]', space=smem, size = 0x4, offset = 0x4, fixed_abs, tag = 'smem constant byte address 0x4 - core index']
  #allocation1 [shape = 'u32[144,128]{1,0:T(1,128)}', space=vmem, size = 0x12000, scoped, tag = 'internal scratch']
  %s0 = inlined_call_operand.vmem [shape: f32[128,128], index: 0, kind: input, shape index: {}]
  %s1 = inlined_call_operand.vmem [shape: f32[1,128], index: 1, kind: input, shape index: {}]
  %s2 = inlined_call_operand.vmem [shape: f32[1,128], index: 2, kind: input, shape index: {}]
  %s3 = inlined_call_operand.vmem [shape: f32[128,128], index: 3, kind: output, shape index: {}]
  %s4 = sld [smem:[#allocation0]]
  $region22: #{downsample_forward.9} parent=0
    _
  %s6 = ssub.s32 1, %s4
  %s7 = scalar_select 0, %s6, %s4
  // Predicated region
  $region2: #{downsample_forward.9} parent=0 // pred_check
    _
  $region3: #{downsample_forward.9} parent=0 // pred_check_branch
    %9 = sbr.rel (0) target = $region5
  $region4: #{downsample_forward.9} parent=0 // pred_region
    _
  $region5: #{downsample_forward.9} parent=0 // pred_fallthru
    _
  // Predicated region
  $region6: #{downsample_forward.9} parent=0 // pred_check
    _
  $region7: #{downsample_forward.9} parent=0 // pred_check_branch
    %11 = sbr.rel (0) target = $region9
  $region8: #{downsample_forward.9} parent=0 // pred_region
    _
  $region9: #{downsample_forward.9} parent=0 // pred_fallthru
    _
  // Predicated region
  $region10: #{downsample_forward.9} parent=0 // pred_check
    _
  $region11: #{downsample_forward.9} parent=0 // pred_check_branch
    %13 = sbr.rel (0) target = $region13
  $region12: #{downsample_forward.9} parent=0 // pred_region
    _
  $region13: #{downsample_forward.9} parent=0 // pred_fallthru
    _
  %v14 = vld [vmem:[%s0] sm:$0xff]
  %v15 = vld [vmem:[%s0 + $0x8] sm:$0xff]
  %v16 = vld [vmem:[%s0 + $0x10] sm:$0xff]
  %v17 = vld [vmem:[%s0 + $0x18] sm:$0xff]
  %v18 = vld [vmem:[%s0 + $0x20] sm:$0xff]
  %v19 = vld [vmem:[%s0 + $0x28] sm:$0xff]
  %v20 = vld [vmem:[%s0 + $0x30] sm:$0xff]
  %v21 = vld [vmem:[%s0 + $0x38] sm:$0xff]
  %v22 = vld [vmem:[%s0 + $0x40] sm:$0xff]
  %v23 = vld [vmem:[%s0 + $0x48] sm:$0xff]
  %v24 = vld [vmem:[%s0 + $0x50] sm:$0xff]
  %v25 = vld [vmem:[%s0 + $0x58] sm:$0xff]
  %v26 = vld [vmem:[%s0 + $0x60] sm:$0xff]
  %v27 = vld [vmem:[%s0 + $0x68] sm:$0xff]
  %v28 = vld [vmem:[%s0 + $0x70] sm:$0xff]
  %v29 = vld [vmem:[%s0 + $0x78] sm:$0xff]
  %v30 = vld [vmem:[%s1] sm:$0x1]
  %v32 = vlaneseq
  %v33 = vshrl.u32 %v32, 7
  %v34 = vsub.s32 0, %v33
  %v35 = vrot.slane %v30, %v34
  %v37 = vmul.f32 %v14, %v35
  %v38 = vmul.f32 %v15, %v35
  %v39 = vmul.f32 %v16, %v35
  %v40 = vmul.f32 %v17, %v35
  %v41 = vmul.f32 %v18, %v35
  %v42 = vmul.f32 %v19, %v35
  %v43 = vmul.f32 %v20, %v35
  %v44 = vmul.f32 %v21, %v35
  %v45 = vmul.f32 %v22, %v35
  %v46 = vmul.f32 %v23, %v35
  %v47 = vmul.f32 %v24, %v35
  %v48 = vmul.f32 %v25, %v35
  %v49 = vmul.f32 %v26, %v35
  %v50 = vmul.f32 %v27, %v35
  %v51 = vmul.f32 %v28, %v35
  %v52 = vmul.f32 %v29, %v35
  %v53 = vld [vmem:[%s2] sm:$0x1]
  %v55 = vlaneseq
  %v56 = vshrl.u32 %v55, 7
  %v57 = vsub.s32 0, %v56
  %v58 = vrot.slane %v53, %v57
  %v60 = vadd.f32 %v37, %v58
  %v61 = vadd.f32 %v38, %v58
  %v62 = vadd.f32 %v39, %v58
  %v63 = vadd.f32 %v40, %v58
  %v64 = vadd.f32 %v41, %v58
  %v65 = vadd.f32 %v42, %v58
  %v66 = vadd.f32 %v43, %v58
  %v67 = vadd.f32 %v44, %v58
  %v68 = vadd.f32 %v45, %v58
  %v69 = vadd.f32 %v46, %v58
  %v70 = vadd.f32 %v47, %v58
  %v71 = vadd.f32 %v48, %v58
  %v72 = vadd.f32 %v49, %v58
  %v73 = vadd.f32 %v50, %v58
  %v74 = vadd.f32 %v51, %v58
  %v75 = vadd.f32 %v52, %v58
  %v76 = vmax.f32 %v60, 0.0
  %v77 = vmax.f32 %v61, 0.0
  %v78 = vmax.f32 %v62, 0.0
  %v79 = vmax.f32 %v63, 0.0
  %v80 = vmax.f32 %v64, 0.0
  %v81 = vmax.f32 %v65, 0.0
  %v82 = vmax.f32 %v66, 0.0
  %v83 = vmax.f32 %v67, 0.0
  %v84 = vmax.f32 %v68, 0.0
  %v85 = vmax.f32 %v69, 0.0
  %v86 = vmax.f32 %v70, 0.0
  %v87 = vmax.f32 %v71, 0.0
  %v88 = vmax.f32 %v72, 0.0
  %v89 = vmax.f32 %v73, 0.0
  %v90 = vmax.f32 %v74, 0.0
  %v91 = vmax.f32 %v75, 0.0
  %92 = vst [vmem:[%s3] sm:$0xff] %v76
  %93 = vst [vmem:[%s3 + $0x8] sm:$0xff] %v77
  %94 = vst [vmem:[%s3 + $0x10] sm:$0xff] %v78
  %95 = vst [vmem:[%s3 + $0x18] sm:$0xff] %v79
  %96 = vst [vmem:[%s3 + $0x20] sm:$0xff] %v80
  %97 = vst [vmem:[%s3 + $0x28] sm:$0xff] %v81
  %98 = vst [vmem:[%s3 + $0x30] sm:$0xff] %v82
  %99 = vst [vmem:[%s3 + $0x38] sm:$0xff] %v83
  %100 = vst [vmem:[%s3 + $0x40] sm:$0xff] %v84
  %101 = vst [vmem:[%s3 + $0x48] sm:$0xff] %v85
  %102 = vst [vmem:[%s3 + $0x50] sm:$0xff] %v86
  %103 = vst [vmem:[%s3 + $0x58] sm:$0xff] %v87
  %104 = vst [vmem:[%s3 + $0x60] sm:$0xff] %v88
  %105 = vst [vmem:[%s3 + $0x68] sm:$0xff] %v89
  %106 = vst [vmem:[%s3 + $0x70] sm:$0xff] %v90
  %107 = vst [vmem:[%s3 + $0x78] sm:$0xff] %v91
  // Predicated region
  $region14: #{downsample_forward.9} parent=0 // pred_check
    _
  $region15: #{downsample_forward.9} parent=0 // pred_check_branch
    %109 = sbr.rel (0) target = $region17
  $region16: #{downsample_forward.9} parent=0 // pred_region
    _
  $region17: #{downsample_forward.9} parent=0 // pred_fallthru
    _
  // Predicated region
  $region18: #{downsample_forward.9} parent=0 // pred_check
    _
  $region19: #{downsample_forward.9} parent=0 // pred_check_branch
    %111 = sbr.rel (0) target = $region21
  $region20: #{downsample_forward.9} parent=0 // pred_region
    _
  $region21: #{downsample_forward.9} parent=0 // pred_fallthru
    _

// kernel: downsample_forward.6
$region0: #{downsample_forward.6}
  #allocation0 [shape = 'u32[]', space=smem, size = 0x4, offset = 0x4, fixed_abs, tag = 'smem constant byte address 0x4 - core index']
  #allocation1 [shape = 'u32[144,128]{1,0:T(1,128)}', space=vmem, size = 0x12000, scoped, tag = 'internal scratch']
  #allocation2 [shape = 'bf16[10,10,4]{2,1,0:T(8,128)(2,1)}', space=vmem, size = 0xa000, scoped, tag = 'scratch operand']
  %s0 = inlined_call_operand.vmem [shape: bf16[2,16,10,4], index: 0, kind: input, shape index: {}, may-alias: {0,1}]
  %s1 = inlined_call_operand.vmem [shape: bf16[2,16,10,4], index: 1, kind: input, shape index: {}, may-alias: {0,1}]
  %s2 = inlined_call_operand.vmem [shape: bf16[9,4,128], index: 2, kind: input, shape index: {}]
  %s3 = inlined_call_operand.vmem [shape: f32[128,128], index: 3, kind: output, shape index: {0}]
  %s4 = inlined_call_operand.vmem [shape: f32[2,1,128], index: 4, kind: output, shape index: {1}]
  %s5 = inlined_call_operand.vmem [shape: f32[2,1,128], index: 5, kind: output, shape index: {2}]
  %6 = xla_tuple %s3, %s4, %s5
  %s7 = sld [smem:[#allocation0]]
  $region61: #{downsample_forward.6} parent=0
    _
  %s9 = ssub.s32 1, %s7
  %s10 = scalar_select 0, %s9, %s7
  loop: start=0, step=1, limit=4
  $region2: #{downsample_forward.6} parent=0 // loop_pre_header
    _
  $region3: #{downsample_forward.6} parent=0 // loop_header
    %s12 = sphi 0, %s16
    %p13 = scmp.ge.s32.totalorder %s12, 4
    %s19 = sphi 0, %s31
    %s20 = sphi 0, %s27
    %s21 = sphi 0, %s19
    %s22 = sphi 0, %s20
    %s23 = sphi 0, %s21
    %s24 = sphi 0, %s22
    %s36 = sphi 0, %s38
    %s39 = sphi 0, %s36
    %s40 = sphi 0, %s39
    %s56 = sphi 0, %s40
    %s66 = sphi 0, %s68
    %s69 = sphi 0, %s66
    %s70 = sphi 0, %s69
    %s86 = sphi 0, %s70
    %s90 = sphi 0, %s90
    %s92 = sphi 0, %s90
    %s93 = sphi 0, %s92
    %s107 = sphi 0, %s93
    %s115 = sphi 0, %s117
    %s118 = sphi 0, %s115
    %s119 = sphi 0, %s118
    %s135 = sphi 0, %s119
    %s143 = sphi 0, %s145
    %s146 = sphi 0, %s143
    %s147 = sphi 0, %s146
    %s163 = sphi 0, %s147
    %s171 = sphi 0, %s173
    %s174 = sphi 0, %s171
    %s175 = sphi 0, %s174
    %s191 = sphi 0, %s175
  $region4: #{downsample_forward.6} parent=0 // loop_header_branch
    %15 = sbr.rel (%p13) target = $region8
  $region5: #{downsample_forward.6} parent=0 // loop_body
    %s17 = ssub.s32 %s12, 1
    %s18 = ssub.s32 %s12, 2
    %s25 = sadd.s32 1, %s20
    %p26 = scmp.ge.s32.totalorder %s25, 1
    %s27 = scalar_select %p26, 0, %s25
    %s28 = sadd.s32 1, %s19
    %s29 = scalar_select %p26, %s28, %s19
    %p30 = scmp.ge.s32.totalorder %s29, 2
    %s31 = scalar_select %p30, 0, %s29
    %s32 = ssub.s32 %s19, %s31
    %s33 = ssub.s32 %s20, %s27
    %s34 = sor.u32 %s32, %s33
    %p35 = scmp.eq.s32.totalorder %s34, 0
    %s37 = sadd.s32 %s36, 1
    %s38 = scalar_select %p35, %s36, %s37
    %p41 = pneg %p35
    %p42 = scmp.eq.s32.totalorder %s12, 1
    %p43 = por %p41, %p42
    %p44 = scmp.ne.s32.totalorder %s36, %s39
    %p45 = scmp.eq.s32.totalorder %s12, 0
    %p46 = por %p44, %p45
    %p47 = scmp.ne.s32.totalorder %s36, %s39
    %p48 = scmp.eq.s32.totalorder %s17, 1
    %p49 = por %p47, %p48
    %p50 = scmp.ne.s32.totalorder %s39, %s40
    %p51 = scmp.eq.s32.totalorder %s17, 0
    %p52 = por %p50, %p51
    %p53 = scmp.ne.s32.totalorder %s39, %s40
    %p54 = scmp.eq.s32.totalorder %s18, 1
    %p55 = por %p53, %p54
    %p57 = scmp.ne.s32.totalorder %s40, %s56
    %p58 = scmp.eq.s32.totalorder %s18, 0
    %p59 = por %p57, %p58
    %s60 = sadd.s32 %s20, 1
    %s61 = sadd.s32 %s27, 1
    %s62 = ssub.s32 %s19, %s31
    %s63 = ssub.s32 %s60, %s61
    %s64 = sor.u32 %s62, %s63
    %p65 = scmp.eq.s32.totalorder %s64, 0
    %s67 = sadd.s32 %s66, 1
    %s68 = scalar_select %p65, %s66, %s67
    %p71 = pneg %p65
    %p72 = scmp.eq.s32.totalorder %s12, 1
    %p73 = por %p71, %p72
    %p74 = scmp.ne.s32.totalorder %s66, %s69
    %p75 = scmp.eq.s32.totalorder %s12, 0
    %p76 = por %p74, %p75
    %p77 = scmp.ne.s32.totalorder %s66, %s69
    %p78 = scmp.eq.s32.totalorder %s17, 1
    %p79 = por %p77, %p78
    %p80 = scmp.ne.s32.totalorder %s69, %s70
    %p81 = scmp.eq.s32.totalorder %s17, 0
    %p82 = por %p80, %p81
    %p83 = scmp.ne.s32.totalorder %s69, %s70
    %p84 = scmp.eq.s32.totalorder %s18, 1
    %p85 = por %p83, %p84
    %p87 = scmp.ne.s32.totalorder %s70, %s86
    %p88 = scmp.eq.s32.totalorder %s18, 0
    %p89 = por %p87, %p88
    %s91 = sadd.s32 %s90, 1
    %p94 = scmp.eq.s32.totalorder %s12, 1
    %p95 = scmp.ne.s32.totalorder %s90, %s92
    %p96 = scmp.eq.s32.totalorder %s12, 0
    %p97 = por %p95, %p96
    %p98 = scmp.ne.s32.totalorder %s90, %s92
    %p99 = scmp.eq.s32.totalorder %s17, 1
    %p100 = por %p98, %p99
    %p101 = scmp.ne.s32.totalorder %s92, %s93
    %p102 = scmp.eq.s32.totalorder %s17, 0
    %p103 = por %p101, %p102
    %p104 = scmp.ne.s32.totalorder %s92, %s93
    %p105 = scmp.eq.s32.totalorder %s18, 1
    %p106 = por %p104, %p105
    %p108 = scmp.ne.s32.totalorder %s93, %s107
    %p109 = scmp.eq.s32.totalorder %s18, 0
    %p110 = por %p108, %p109
    %s111 = sadd.s32 %s19, %s20
    %s112 = sadd.s32 %s31, %s27
    %s113 = ssub.s32 %s111, %s112
    %p114 = scmp.eq.s32.totalorder %s113, 0
    %s116 = sadd.s32 %s115, 1
    %s117 = scalar_select %p114, %s115, %s116
    %p120 = pneg %p114
    %p121 = scmp.eq.s32.totalorder %s12, 1
    %p122 = por %p120, %p121
    %p123 = scmp.ne.s32.totalorder %s115, %s118
    %p124 = scmp.eq.s32.totalorder %s12, 0
    %p125 = por %p123, %p124
    %p126 = scmp.ne.s32.totalorder %s115, %s118
    %p127 = scmp.eq.s32.totalorder %s17, 1
    %p128 = por %p126, %p127
    %p129 = scmp.ne.s32.totalorder %s118, %s119
    %p130 = scmp.eq.s32.totalorder %s17, 0
    %p131 = por %p129, %p130
    %p132 = scmp.ne.s32.totalorder %s118, %s119
    %p133 = scmp.eq.s32.totalorder %s18, 1
    %p134 = por %p132, %p133
    %p136 = scmp.ne.s32.totalorder %s119, %s135
    %p137 = scmp.eq.s32.totalorder %s18, 0
    %p138 = por %p136, %p137
    %s139 = sadd.s32 %s19, %s20
    %s140 = sadd.s32 %s31, %s27
    %s141 = ssub.s32 %s139, %s140
    %p142 = scmp.eq.s32.totalorder %s141, 0
    %s144 = sadd.s32 %s143, 1
    %s145 = scalar_select %p142, %s143, %s144
    %p148 = pneg %p142
    %p149 = scmp.eq.s32.totalorder %s12, 1
    %p150 = por %p148, %p149
    %p151 = scmp.ne.s32.totalorder %s143, %s146
    %p152 = scmp.eq.s32.totalorder %s12, 0
    %p153 = por %p151, %p152
    %p154 = scmp.ne.s32.totalorder %s143, %s146
    %p155 = scmp.eq.s32.totalorder %s17, 1
    %p156 = por %p154, %p155
    %p157 = scmp.ne.s32.totalorder %s146, %s147
    %p158 = scmp.eq.s32.totalorder %s17, 0
    %p159 = por %p157, %p158
    %p160 = scmp.ne.s32.totalorder %s146, %s147
    %p161 = scmp.eq.s32.totalorder %s18, 1
    %p162 = por %p160, %p161
    %p164 = scmp.ne.s32.totalorder %s147, %s163
    %p165 = scmp.eq.s32.totalorder %s18, 0
    %p166 = por %p164, %p165
    %s167 = sadd.s32 %s19, %s20
    %s168 = sadd.s32 %s31, %s27
    %s169 = ssub.s32 %s167, %s168
    %p170 = scmp.eq.s32.totalorder %s169, 0
    %s172 = sadd.s32 %s171, 1
    %s173 = scalar_select %p170, %s171, %s172
    %p176 = pneg %p170
    %p177 = scmp.eq.s32.totalorder %s12, 1
    %p178 = por %p176, %p177
    %p179 = scmp.ne.s32.totalorder %s171, %s174
    %p180 = scmp.eq.s32.totalorder %s12, 0
    %p181 = por %p179, %p180
    %p182 = scmp.ne.s32.totalorder %s171, %s174
    %p183 = scmp.eq.s32.totalorder %s17, 1
    %p184 = por %p182, %p183
    %p185 = scmp.ne.s32.totalorder %s174, %s175
    %p186 = scmp.eq.s32.totalorder %s17, 0
    %p187 = por %p185, %p186
    %p188 = scmp.ne.s32.totalorder %s174, %s175
    %p189 = scmp.eq.s32.totalorder %s18, 1
    %p190 = por %p188, %p189
    %p192 = scmp.ne.s32.totalorder %s175, %s191
    %p193 = scmp.eq.s32.totalorder %s18, 0
    %p194 = por %p192, %p193
    %p195 = scmp.le.s32.totalorder 1, %s12
    %p196 = scmp.lt.s32.totalorder %s12, 3
    %p197 = pnand %p195, %p196
    %p198 = pneg %p197
    // Predicated region
    $region9: #{downsample_forward.6} parent=5 // pred_check
      _
    $region10: #{downsample_forward.6} parent=5 // pred_check_branch
      %200 = sbr.rel (%p197) target = $region12
    $region11: #{downsample_forward.6} parent=5 // pred_region
      %s201 = ssub.s32 %s12, 1
      // Predicated region
      $region13: #{downsample_forward.6} parent=11 // pred_check
        %p202 = pneg %p103
      $region14: #{downsample_forward.6} parent=11 // pred_check_branch
        %204 = sbr.rel (%p202) target = $region16
      $region15: #{downsample_forward.6} parent=11 // pred_region
        _
      $region16: #{downsample_forward.6} parent=11 // pred_fallthru
        _
    $region12: #{downsample_forward.6} parent=5 // pred_fallthru
      _
    %p205 = scmp.lt.s32.totalorder %s12, 2
    // Predicated region
    $region17: #{downsample_forward.6} parent=5 // pred_check
      %p206 = pneg %p205
    $region18: #{downsample_forward.6} parent=5 // pred_check_branch
      %208 = sbr.rel (%p206) target = $region20
    $region19: #{downsample_forward.6} parent=5 // pred_region
      // Predicated region
      $region21: #{downsample_forward.6} parent=19 // pred_check
        %p209 = pneg %p46
      $region22: #{downsample_forward.6} parent=19 // pred_check_branch
        %211 = sbr.rel (%p209) target = $region24
      $region23: #{downsample_forward.6} parent=19 // pred_region
        %s212 = smul.u32 8, %s20
        %p213 = scmp.lt.s32.totalorder %s19, 1
        %s214 = scalar_select %p213, %s19, 1
        %p215 = scmp.lt.s32.totalorder %s212, 15
        %s216 = scalar_select %p215, %s212, 15
        %s217 = smul.addr %s216, 2
        %s218 = smul.addr %s214, 32
        %s219 = sadd.s32 %s217, %s218
        %s220 = smul.addr %s219, 4
        %s221 = scalar_lea.vmem %s0, %s220
        %s222 = smul.u32 8, %s20
      $region24: #{downsample_forward.6} parent=19 // pred_fallthru
        _
      // Predicated region
      $region25: #{downsample_forward.6} parent=19 // pred_check
        %p223 = pneg %p76
      $region26: #{downsample_forward.6} parent=19 // pred_check_branch
        %225 = sbr.rel (%p223) target = $region28
      $region27: #{downsample_forward.6} parent=19 // pred_region
        %s226 = sadd.s32 %s20, 1
        %s227 = smul.u32 8, %s226
        %p228 = scmp.lt.s32.totalorder %s19, 1
        %s229 = scalar_select %p228, %s19, 1
        %p230 = scmp.lt.s32.totalorder %s227, 15
        %s231 = scalar_select %p230, %s227, 15
        %s232 = smul.addr %s231, 2
        %s233 = smul.addr %s229, 32
        %s234 = sadd.s32 %s232, %s233
        %s235 = smul.addr %s234, 4
        %s236 = scalar_lea.vmem %s1, %s235
        %s237 = sadd.s32 %s20, 1
        %s238 = smul.u32 8, %s237
      $region28: #{downsample_forward.6} parent=19 // pred_fallthru
        _
    $region20: #{downsample_forward.6} parent=5 // pred_fallthru
      _
    %p239 = scmp.le.s32.totalorder 1, %s12
    %p240 = scmp.lt.s32.totalorder %s12, 3
    %p241 = pnand %p239, %p240
    %p242 = pneg %p241
    // Predicated region
    $region29: #{downsample_forward.6} parent=5 // pred_check
      _
    $region30: #{downsample_forward.6} parent=5 // pred_check_branch
      %244 = sbr.rel (%p241) target = $region32
    $region31: #{downsample_forward.6} parent=5 // pred_region
      %s245 = ssub.s32 %s12, 1
      %s246 = smul.u32 8, %s22
      %p247 = scmp.lt.s32.totalorder %s21, 1
      %s248 = scalar_select %p247, %s21, 1
      %p249 = scmp.lt.s32.totalorder %s246, 15
      %s250 = scalar_select %p249, %s246, 15
      %s251 = smul.addr %s250, 2
      %s252 = smul.addr %s248, 32
      %s253 = sadd.s32 %s251, %s252
      %s254 = smul.addr %s253, 4
      %s255 = scalar_lea.vmem %s0, %s254
      %p256 = pneg %p52
      %p257 = pneg %p49
      %s258 = sadd.s32 %s22, 1
      %s259 = smul.u32 8, %s258
      %p260 = scmp.lt.s32.totalorder %s21, 1
      %s261 = scalar_select %p260, %s21, 1
      %p262 = scmp.lt.s32.totalorder %s259, 15
      %s263 = scalar_select %p262, %s259, 15
      %s264 = smul.addr %s263, 2
      %s265 = smul.addr %s261, 32
      %s266 = sadd.s32 %s264, %s265
      %s267 = smul.addr %s266, 4
      %s268 = scalar_lea.vmem %s1, %s267
      %p269 = pneg %p82
      %p270 = pneg %p79
      %p271 = pneg %p103
      %p272 = pneg %p100
      %p273 = pneg %p131
      %p274 = pneg %p128
      %s275 = sadd.s32 %s21, %s22
      %s276 = smul.u32 8, %s275
      %p277 = scmp.lt.s32.totalorder %s276, 15
      %s278 = scalar_select %p277, %s276, 15
      %s279 = smul.addr %s278, 8
      %s280 = scalar_lea.vmem %s3, %s279
      %p281 = pneg %p159
      %p282 = pneg %p156
      %s283 = sadd.s32 %s21, %s22
      %p284 = scmp.lt.s32.totalorder %s283, 1
      %s285 = scalar_select %p284, %s283, 1
      %s286 = scalar_lea.vmem %s4, %s285
      %p287 = pneg %p187
      %p288 = pneg %p184
      %s289 = sadd.s32 %s21, %s22
      %p290 = scmp.lt.s32.totalorder %s289, 1
      %s291 = scalar_select %p290, %s289, 1
      %s292 = scalar_lea.vmem %s5, %s291
      %s293 = smul.u32 8, %s22
      %p294 = scmp.lt.s32.totalorder %s21, 1
      %s295 = scalar_select %p294, %s21, 1
      %p296 = scmp.lt.s32.totalorder %s293, 15
      %s297 = scalar_select %p296, %s293, 15
      %s298 = smul.addr %s297, 2
      %s299 = smul.addr %s295, 32
      %s300 = sadd.s32 %s298, %s299
      %s301 = smul.addr %s300, 4
      %s302 = scalar_lea.vmem %s0, %s301
      %s303 = smul.u32 8, %s22
      %s304 = sadd.s32 %s22, 1
      %s305 = smul.u32 8, %s304
      %p306 = scmp.lt.s32.totalorder %s21, 1
      %s307 = scalar_select %p306, %s21, 1
      %p308 = scmp.lt.s32.totalorder %s305, 15
      %s309 = scalar_select %p308, %s305, 15
      %s310 = smul.addr %s309, 2
      %s311 = smul.addr %s307, 32
      %s312 = sadd.s32 %s310, %s311
      %s313 = smul.addr %s312, 4
      %s314 = scalar_lea.vmem %s1, %s313
      %s315 = sadd.s32 %s22, 1
      %s316 = smul.u32 8, %s315
      %s317 = sadd.s32 %s21, %s22
      %s318 = smul.u32 8, %s317
      %p319 = scmp.lt.s32.totalorder %s318, 15
      %s320 = scalar_select %p319, %s318, 15
      %s321 = smul.addr %s320, 8
      %s322 = scalar_lea.vmem %s3, %s321
      %s323 = sadd.s32 %s21, %s22
      %s324 = smul.u32 8, %s323
      %s325 = sadd.s32 %s21, %s22
      %p326 = scmp.lt.s32.totalorder %s325, 1
      %s327 = scalar_select %p326, %s325, 1
      %s328 = scalar_lea.vmem %s4, %s327
      %s329 = sadd.s32 %s21, %s22
      %s330 = sadd.s32 %s21, %s22
      %p331 = scmp.lt.s32.totalorder %s330, 1
      %s332 = scalar_select %p331, %s330, 1
      %s333 = scalar_lea.vmem %s5, %s332
      %s334 = sadd.s32 %s21, %s22
      %v336 = vld [vmem:[%s302] sm:$0xf]
      %v337 = vld [vmem:[%s302 + $0x4] sm:$0x1]
      %v338 = vld [vmem:[%s302 + $0x8] sm:$0xf]
      %v339 = vld [vmem:[%s302 + $0xc] sm:$0x1]
      %v340 = vld [vmem:[%s302 + $0x10] sm:$0xf]
      %v341 = vld [vmem:[%s302 + $0x14] sm:$0x1]
      %v342 = vld [vmem:[%s302 + $0x18] sm:$0xf]
      %v343 = vld [vmem:[%s302 + $0x1c] sm:$0x1]
      %v344 = vld [vmem:[%s302 + $0x20] sm:$0xf]
      %v345 = vld [vmem:[%s302 + $0x24] sm:$0x1]
      %v346 = vld [vmem:[%s302 + $0x28] sm:$0xf]
      %v347 = vld [vmem:[%s302 + $0x2c] sm:$0x1]
      %v348 = vld [vmem:[%s302 + $0x30] sm:$0xf]
      %v349 = vld [vmem:[%s302 + $0x34] sm:$0x1]
      %v350 = vld [vmem:[%s302 + $0x38] sm:$0xf]
      %v351 = vld [vmem:[%s302 + $0x3c] sm:$0x1]
      %vm352 = vcmask 27648
      %353 = vst.msk [vmem:[#allocation2] sm:$0xf] %vm352, %v336
      %vm354 = vcmask 24576
      %355 = vst.msk [vmem:[#allocation2 + $0x4] sm:$0x1] %vm354, %v337
      %356 = vst.msk [vmem:[#allocation2 + $0x8] sm:$0xf] %vm352, %v338
      %357 = vst.msk [vmem:[#allocation2 + $0xc] sm:$0x1] %vm354, %v339
      %358 = vst.msk [vmem:[#allocation2 + $0x10] sm:$0xf] %vm352, %v340
      %359 = vst.msk [vmem:[#allocation2 + $0x14] sm:$0x1] %vm354, %v341
      %360 = vst.msk [vmem:[#allocation2 + $0x18] sm:$0xf] %vm352, %v342
      %361 = vst.msk [vmem:[#allocation2 + $0x1c] sm:$0x1] %vm354, %v343
      %362 = vst.msk [vmem:[#allocation2 + $0x20] sm:$0xf] %vm352, %v344
      %363 = vst.msk [vmem:[#allocation2 + $0x24] sm:$0x1] %vm354, %v345
      %364 = vst.msk [vmem:[#allocation2 + $0x28] sm:$0xf] %vm352, %v346
      %365 = vst.msk [vmem:[#allocation2 + $0x2c] sm:$0x1] %vm354, %v347
      %366 = vst.msk [vmem:[#allocation2 + $0x30] sm:$0xf] %vm352, %v348
      %367 = vst.msk [vmem:[#allocation2 + $0x34] sm:$0x1] %vm354, %v349
      %368 = vst.msk [vmem:[#allocation2 + $0x38] sm:$0xf] %vm352, %v350
      %369 = vst.msk [vmem:[#allocation2 + $0x3c] sm:$0x1] %vm354, %v351
      %v370 = vld [vmem:[%s314] sm:$0xf]
      %v371 = vld [vmem:[%s314 + $0x4] sm:$0x1]
      %v372 = vld [vmem:[%s314 + $0x8] sm:$0xf]
      %v373 = vld [vmem:[%s314 + $0xc] sm:$0x1]
      %s374 = scalar_lea.vmem [#allocation2], 64
      %375 = vst.msk [vmem:[%s374] sm:$0xf] %vm352, %v370
      %376 = vst.msk [vmem:[%s374 + $0x4] sm:$0x1] %vm354, %v371
      %377 = vst.msk [vmem:[%s374 + $0x8] sm:$0xf] %vm352, %v372
      %378 = vst.msk [vmem:[%s374 + $0xc] sm:$0x1] %vm354, %v373
      %v379 = vld [vmem:[#allocation2] sm:$0xf]
      %v380 = vld [vmem:[#allocation2 + $0x8] sm:$0xf]
      %v381 = vld [vmem:[#allocation2 + $0x10] sm:$0xf]
      %v382 = vld [vmem:[#allocation2 + $0x18] sm:$0xf]
      %v383 = vld [vmem:[#allocation2 + $0x20] sm:$0xf]
      %v384 = vld [vmem:[#allocation2 + $0x28] sm:$0xf]
      %v385 = vld [vmem:[#allocation2 + $0x30] sm:$0xf]
      %v386 = vld [vmem:[#allocation2 + $0x38] sm:$0xf]
      %v387 = vld [vmem:[%s2] sm:$0x3]
      %v396 = vunpack.c.l.b16 %v379
      %v397 = vunpack.c.l.b16 %v380
      %v398 = vunpack.c.l.b16 %v381
      %v399 = vunpack.c.l.b16 %v382
      %v400 = vunpack.c.l.b16 %v383
      %v401 = vunpack.c.l.b16 %v384
      %v402 = vunpack.c.l.b16 %v385
      %v403 = vunpack.c.l.b16 %v386
      %v404 = vpack.c.b16 %v397, %v396
      %v405 = vpack.c.b16 %v399, %v398
      %v406 = vpack.c.b16 %v401, %v400
      %v407 = vpack.c.b16 %v403, %v402
      %vm408 = vcmask 31744
      %v410 = vsel %vm408, %v404, 0
      %v413 = vsel %vm408, %v405, 0
      %v416 = vsel %vm408, %v406, 0
      %v419 = vsel %vm408, %v407, 0
      %vm421 = vcmask 1041408
      %v423 = vsel %vm421, %v387, 0
      %425 = vmatprep.subr.bf16.mxu0 0
      %426 = vmatpush1.bf16.msra.mxu0 %v423
      %427 = vmatprep.subr.bf16.mxu0 0
      %428 = vmatpush1.bf16.msra.mxu0 0
      %429 = vmatprep.subr.bf16.mxu0 0
      %430 = vmatpush1.bf16.msra.mxu0 0
      %431 = vmatprep.subr.bf16.mxu0 0
      %432 = vmatpush1.bf16.msra.mxu0 0
      %433 = vmatprep.subr.bf16.mxu0 0
      %434 = vmatpush1.bf16.msra.mxu0 0
      %435 = vmatprep.subr.bf16.mxu0 0
      %436 = vmatpush1.bf16.msra.mxu0 0
      %437 = vmatprep.subr.bf16.mxu0 0
      %438 = vmatpush1.bf16.msra.mxu0 0
      %439 = vmatprep.subr.bf16.mxu0 0
      %440 = vmatpush1.bf16.msra.mxu0 0
      %441 = vmatprep.subr.bf16.mxu0 0
      %442 = vmatpush1.bf16.msra.mxu0 0
      %443 = vmatprep.subr.bf16.mxu0 0
      %444 = vmatpush1.bf16.msra.mxu0 0
      %445 = vmatprep.subr.bf16.mxu0 0
      %446 = vmatpush1.bf16.msra.mxu0 0
      %447 = vmatprep.subr.bf16.mxu0 0
      %448 = vmatpush1.bf16.msra.mxu0 0
      %449 = vmatprep.subr.bf16.mxu0 0
      %450 = vmatpush1.bf16.msra.mxu0 0
      %451 = vmatprep.subr.bf16.mxu0 0
      %452 = vmatpush1.bf16.msra.mxu0 0
      %453 = vmatprep.subr.bf16.mxu0 0
      %454 = vmatpush1.bf16.msra.mxu0 0
      %455 = vmatprep.subr.bf16.mxu0 0
      %456 = vmatpush1.bf16.msra.mxu0 0
      %457 = vmatprep.mubr.bf16.mxu0 0
      %458 = vmatmul.mubr.bf16.gmra.mrb[0].mxu0 %v410
      %v459 = vpop.f32.mrb[0].mxu0
      %v460 = vadd.f32 0.0, %v459
      %v461 = vpop.f32.mrb[0].mxu0
      %v462 = vpop.f32.mrb[0].mxu0
      %v463 = vadd.f32 0.0, %v462
      %v464 = vpop.f32.mrb[0].mxu0
      %465 = vmatprep.mubr.bf16.mxu0 0
      %466 = vmatmul.mubr.bf16.gmra.mrb[0].mxu0 %v413
      %v467 = vpop.f32.mrb[0].mxu0
      %v468 = vadd.f32 0.0, %v467
      %v469 = vpop.f32.mrb[0].mxu0
      %v470 = vpop.f32.mrb[0].mxu0
      %v471 = vadd.f32 0.0, %v470
      %v472 = vpop.f32.mrb[0].mxu0
      %473 = vmatprep.mubr.bf16.mxu0 0
      %474 = vmatmul.mubr.bf16.gmra.mrb[0].mxu0 %v416
      %v475 = vpop.f32.mrb[0].mxu0
      %v476 = vadd.f32 0.0, %v475
      %v477 = vpop.f32.mrb[0].mxu0
      %v478 = vpop.f32.mrb[0].mxu0
      %v479 = vadd.f32 0.0, %v478
      %v480 = vpop.f32.mrb[0].mxu0
      %481 = vmatprep.mubr.bf16.mxu0 0
      %482 = vmatmul.mubr.bf16.gmra.mrb[0].mxu0 %v419
      %v483 = vpop.f32.mrb[0].mxu0
      %v484 = vadd.f32 0.0, %v483
      %v485 = vpop.f32.mrb[0].mxu0
      %v486 = vpop.f32.mrb[0].mxu0
      %v487 = vadd.f32 0.0, %v486
      %v488 = vpop.f32.mrb[0].mxu0
      %489 = vdwg.mxu0
      %490 = vst [vmem:[%s322] sm:$0xff] %v460
      %491 = vst [vmem:[%s322 + $0x8] sm:$0xff] %v463
      %492 = vst [vmem:[%s322 + $0x10] sm:$0xff] %v468
      %493 = vst [vmem:[%s322 + $0x18] sm:$0xff] %v471
      %494 = vst [vmem:[%s322 + $0x20] sm:$0xff] %v476
      %495 = vst [vmem:[%s322 + $0x28] sm:$0xff] %v479
      %496 = vst [vmem:[%s322 + $0x30] sm:$0xff] %v484
      %497 = vst [vmem:[%s322 + $0x38] sm:$0xff] %v487
      %v498 = vld [vmem:[#allocation2] sm:$0xf]
      %v499 = vld [vmem:[#allocation2 + $0x4] sm:$0x1]
      %v500 = vld [vmem:[#allocation2 + $0x8] sm:$0xf]
      %v501 = vld [vmem:[#allocation2 + $0xc] sm:$0x1]
      %v502 = vld [vmem:[#allocation2 + $0x10] sm:$0xf]
      %v503 = vld [vmem:[#allocation2 + $0x14] sm:$0x1]
      %v504 = vld [vmem:[#allocation2 + $0x18] sm:$0xf]
      %v505 = vld [vmem:[#allocation2 + $0x1c] sm:$0x1]
      %v506 = vld [vmem:[#allocation2 + $0x20] sm:$0xf]
      %v507 = vld [vmem:[#allocation2 + $0x24] sm:$0x1]
      %v508 = vld [vmem:[#allocation2 + $0x28] sm:$0xf]
      %v509 = vld [vmem:[#allocation2 + $0x2c] sm:$0x1]
      %v510 = vld [vmem:[#allocation2 + $0x30] sm:$0xf]
      %v511 = vld [vmem:[#allocation2 + $0x34] sm:$0x1]
      %v512 = vld [vmem:[#allocation2 + $0x38] sm:$0xf]
      %v513 = vld [vmem:[#allocation2 + $0x3c] sm:$0x1]
      %vm514 = vsmask.f32 3328
      %vm515 = vsmask.f32 7440
      %vm516 = vmor %vm514, %vm515
      %v518 = vshrl.u32 %v498, 16
      %v520 = vrot.slane %v518, 4
      %v521 = vshll.u32 %v498, 16
      %v523 = vrot.slane %v521, 5
      %v524 = vor.u32 %v520, %v523
      %v525 = vrot.slane %v524, 4
      %v527 = vshll.u32 %v499, 16
      %v529 = vrot.slane %v527, 5
      %v530 = vsel %vm516, %v525, %v529
      %v532 = vshrl.u32 %v500, 16
      %v534 = vrot.slane %v532, 4
      %v535 = vshll.u32 %v500, 16
      %v537 = vrot.slane %v535, 5
      %v538 = vor.u32 %v534, %v537
      %v539 = vrot.slane %v538, 4
      %v541 = vshll.u32 %v501, 16
      %v543 = vrot.slane %v541, 5
      %v544 = vsel %vm516, %v539, %v543
      %v546 = vshrl.u32 %v502, 16
      %v548 = vrot.slane %v546, 4
      %v549 = vshll.u32 %v502, 16
      %v551 = vrot.slane %v549, 5
      %v552 = vor.u32 %v548, %v551
      %v553 = vrot.slane %v552, 4
      %v555 = vshll.u32 %v503, 16
      %v557 = vrot.slane %v555, 5
      %v558 = vsel %vm516, %v553, %v557
      %v560 = vshrl.u32 %v504, 16
      %v562 = vrot.slane %v560, 4
      %v563 = vshll.u32 %v504, 16
      %v565 = vrot.slane %v563, 5
      %v566 = vor.u32 %v562, %v565
      %v567 = vrot.slane %v566, 4
      %v569 = vshll.u32 %v505, 16
      %v571 = vrot.slane %v569, 5
      %v572 = vsel %vm516, %v567, %v571
      %v574 = vshrl.u32 %v506, 16
      %v576 = vrot.slane %v574, 4
      %v577 = vshll.u32 %v506, 16
      %v579 = vrot.slane %v577, 5
      %v580 = vor.u32 %v576, %v579
      %v581 = vrot.slane %v580, 4
      %v583 = vshll.u32 %v507, 16
      %v585 = vrot.slane %v583, 5
      %v586 = vsel %vm516, %v581, %v585
      %v588 = vshrl.u32 %v508, 16
      %v590 = vrot.slane %v588, 4
      %v591 = vshll.u32 %v508, 16
      %v593 = vrot.slane %v591, 5
      %v594 = vor.u32 %v590, %v593
      %v595 = vrot.slane %v594, 4
      %v597 = vshll.u32 %v509, 16
      %v599 = vrot.slane %v597, 5
      %v600 = vsel %vm516, %v595, %v599
      %v602 = vshrl.u32 %v510, 16
      %v604 = vrot.slane %v602, 4
      %v605 = vshll.u32 %v510, 16
      %v607 = vrot.slane %v605, 5
      %v608 = vor.u32 %v604, %v607
      %v609 = vrot.slane %v608, 4
      %v611 = vshll.u32 %v511, 16
      %v613 = vrot.slane %v611, 5
      %v614 = vsel %vm516, %v609, %v613
      %v616 = vshrl.u32 %v512, 16
      %v618 = vrot.slane %v616, 4
      %v619 = vshll.u32 %v512, 16
      %v621 = vrot.slane %v619, 5
      %v622 = vor.u32 %v618, %v621
      %v623 = vrot.slane %v622, 4
      %v625 = vshll.u32 %v513, 16
      %v627 = vrot.slane %v625, 5
      %v628 = vsel %vm516, %v623, %v627
      %s629 = scalar_lea.vmem %s2, 2
      %v630 = vld [vmem:[%s629] sm:$0x3]
      %v631 = vunpack.c.l.b16 %v530
      %v632 = vunpack.c.l.b16 %v544
      %v633 = vunpack.c.l.b16 %v558
      %v634 = vunpack.c.l.b16 %v572
      %v635 = vunpack.c.l.b16 %v586
      %v636 = vunpack.c.l.b16 %v600
      %v637 = vunpack.c.l.b16 %v614
      %v638 = vunpack.c.l.b16 %v628
      %v639 = vpack.c.b16 %v632, %v631
      %v640 = vpack.c.b16 %v634, %v633
      %v641 = vpack.c.b16 %v636, %v635
      %v642 = vpack.c.b16 %v638, %v637
      %v644 = vsel %vm408, %v639, 0
      %v647 = vsel %vm408, %v640, 0
      %v650 = vsel %vm408, %v641, 0
      %v653 = vsel %vm408, %v642, 0
      %v656 = vsel %vm421, %v630, 0
      %658 = vmatprep.subr.bf16.mxu0 0
      %659 = vmatpush1.bf16.msra.mxu0 %v656
      %660 = vmatprep.subr.bf16.mxu0 0
      %661 = vmatpush1.bf16.msra.mxu0 0
      %662 = vmatprep.subr.bf16.mxu0 0
      %663 = vmatpush1.bf16.msra.mxu0 0
      %664 = vmatprep.subr.bf16.mxu0 0
      %665 = vmatpush1.bf16.msra.mxu0 0
      %666 = vmatprep.subr.bf16.mxu0 0
      %667 = vmatpush1.bf16.msra.mxu0 0
      %668 = vmatprep.subr.bf16.mxu0 0
      %669 = vmatpush1.bf16.msra.mxu0 0
      %670 = vmatprep.subr.bf16.mxu0 0
      %671 = vmatpush1.bf16.msra.mxu0 0
      %672 = vmatprep.subr.bf16.mxu0 0
      %673 = vmatpush1.bf16.msra.mxu0 0
      %674 = vmatprep.subr.bf16.mxu0 0
      %675 = vmatpush1.bf16.msra.mxu0 0
      %676 = vmatprep.subr.bf16.mxu0 0
      %677 = vmatpush1.bf16.msra.mxu0 0
      %678 = vmatprep.subr.bf16.mxu0 0
      %679 = vmatpush1.bf16.msra.mxu0 0
      %680 = vmatprep.subr.bf16.mxu0 0
      %681 = vmatpush1.bf16.msra.mxu0 0
      %682 = vmatprep.subr.bf16.mxu0 0
      %683 = vmatpush1.bf16.msra.mxu0 0
      %684 = vmatprep.subr.bf16.mxu0 0
      %685 = vmatpush1.bf16.msra.mxu0 0
      %686 = vmatprep.subr.bf16.mxu0 0
      %687 = vmatpush1.bf16.msra.mxu0 0
      %688 = vmatprep.subr.bf16.mxu0 0
      %689 = vmatpush1.bf16.msra.mxu0 0
      %690 = vmatprep.mubr.bf16.mxu0 0
      %691 = vmatmul.mubr.bf16.gmra.mrb[0].mxu0 %v644
      %v692 = vpop.f32.mrb[0].mxu0
      %v693 = vadd.f32 0.0, %v692
      %v694 = vpop.f32.mrb[0].mxu0
      %v695 = vpop.f32.mrb[0].mxu0
      %v696 = vadd.f32 0.0, %v695
      %v697 = vpop.f32.mrb[0].mxu0
      %698 = vmatprep.mubr.bf16.mxu0 0
      %699 = vmatmul.mubr.bf16.gmra.mrb[0].mxu0 %v647
      %v700 = vpop.f32.mrb[0].mxu0
      %v701 = vadd.f32 0.0, %v700
      %v702 = vpop.f32.mrb[0].mxu0
      %v703 = vpop.f32.mrb[0].mxu0
      %v704 = vadd.f32 0.0, %v703
      %v705 = vpop.f32.mrb[0].mxu0
      %706 = vmatprep.mubr.bf16.mxu0 0
      %707 = vmatmul.mubr.bf16.gmra.mrb[0].mxu0 %v650
      %v708 = vpop.f32.mrb[0].mxu0
      %v709 = vadd.f32 0.0, %v708
      %v710 = vpop.f32.mrb[0].mxu0
      %v711 = vpop.f32.mrb[0].mxu0
      %v712 = vadd.f32 0.0, %v711
      %v713 = vpop.f32.mrb[0].mxu0
      %714 = vmatprep.mubr.bf16.mxu0 0
      %715 = vmatmul.mubr.bf16.gmra.mrb[0].mxu0 %v653
      %v716 = vpop.f32.mrb[0].mxu0
      %v717 = vadd.f32 0.0, %v716
      %v718 = vpop.f32.mrb[0].mxu0
      %v719 = vpop.f32.mrb[0].mxu0
      %v720 = vadd.f32 0.0, %v719
      %v721 = vpop.f32.mrb[0].mxu0
      %722 = vdwg.mxu0
      %v723 = vld [vmem:[%s322] sm:$0xff]
      %v724 = vld [vmem:[%s322 + $0x8] sm:$0xff]
      %v725 = vld [vmem:[%s322 + $0x10] sm:$0xff]
      %v726 = vld [vmem:[%s322 + $0x18] sm:$0xff]
      %v727 = vld [vmem:[%s322 + $0x20] sm:$0xff]
      %v728 = vld [vmem:[%s322 + $0x28] sm:$0xff]
      %v729 = vld [vmem:[%s322 + $0x30] sm:$0xff]
      %v730 = vld [vmem:[%s322 + $0x38] sm:$0xff]
      %v731 = vadd.f32 %v723, %v693
      %v732 = vadd.f32 %v724, %v696
      %v733 = vadd.f32 %v725, %v701
      %v734 = vadd.f32 %v726, %v704
      %v735 = vadd.f32 %v727, %v709
      %v736 = vadd.f32 %v728, %v712
      %v737 = vadd.f32 %v729, %v717
      %v738 = vadd.f32 %v730, %v720
      %739 = vst [vmem:[%s322] sm:$0xff] %v731
      %740 = vst [vmem:[%s322 + $0x8] sm:$0xff] %v732
      %741 = vst [vmem:[%s322 + $0x10] sm:$0xff] %v733
      %742 = vst [vmem:[%s322 + $0x18] sm:$0xff] %v734
      %743 = vst [vmem:[%s322 + $0x20] sm:$0xff] %v735
      %744 = vst [vmem:[%s322 + $0x28] sm:$0xff] %v736
      %745 = vst [vmem:[%s322 + $0x30] sm:$0xff] %v737
      %746 = vst [vmem:[%s322 + $0x38] sm:$0xff] %v738
      %v747 = vld [vmem:[#allocation2] sm:$0xe]
      %v748 = vld [vmem:[#allocation2 + $0x4] sm:$0x1]
      %v749 = vld [vmem:[#allocation2 + $0x8] sm:$0xe]
      %v750 = vld [vmem:[#allocation2 + $0xc] sm:$0x1]
      %v751 = vld [vmem:[#allocation2 + $0x10] sm:$0xe]
      %v752 = vld [vmem:[#allocation2 + $0x14] sm:$0x1]
      %v753 = vld [vmem:[#allocation2 + $0x18] sm:$0xe]
      %v754 = vld [vmem:[#allocation2 + $0x1c] sm:$0x1]
      %v755 = vld [vmem:[#allocation2 + $0x20] sm:$0xe]
      %v756 = vld [vmem:[#allocation2 + $0x24] sm:$0x1]
      %v757 = vld [vmem:[#allocation2 + $0x28] sm:$0xe]
      %v758 = vld [vmem:[#allocation2 + $0x2c] sm:$0x1]
      %v759 = vld [vmem:[#allocation2 + $0x30] sm:$0xe]
      %v760 = vld [vmem:[#allocation2 + $0x34] sm:$0x1]
      %v761 = vld [vmem:[#allocation2 + $0x38] sm:$0xe]
      %v762 = vld [vmem:[#allocation2 + $0x3c] sm:$0x1]
      %vm779 = vcmask 1042432
      %vm780 = vcmask 1046532
      %vm781 = vmor %vm779, %vm780
      %v782 = vrot.slane %v747, 5
      %v783 = vrot.slane %v782, 4
      %v784 = vrot.slane %v748, 5
      %v785 = vsel %vm781, %v783, %v784
      %v786 = vrot.slane %v749, 5
      %v787 = vrot.slane %v786, 4
      %v788 = vrot.slane %v750, 5
      %v789 = vsel %vm781, %v787, %v788
      %v790 = vrot.slane %v751, 5
      %v791 = vrot.slane %v790, 4
      %v792 = vrot.slane %v752, 5
      %v793 = vsel %vm781, %v791, %v792
      %v794 = vrot.slane %v753, 5
      %v795 = vrot.slane %v794, 4
      %v796 = vrot.slane %v754, 5
      %v797 = vsel %vm781, %v795, %v796
      %v798 = vrot.slane %v755, 5
      %v799 = vrot.slane %v798, 4
      %v800 = vrot.slane %v756, 5
      %v801 = vsel %vm781, %v799, %v800
      %v802 = vrot.slane %v757, 5
      %v803 = vrot.slane %v802, 4
      %v804 = vrot.slane %v758, 5
      %v805 = vsel %vm781, %v803, %v804
      %v806 = vrot.slane %v759, 5
      %v807 = vrot.slane %v806, 4
      %v808 = vrot.slane %v760, 5
      %v809 = vsel %vm781, %v807, %v808
      %v810 = vrot.slane %v761, 5
      %v811 = vrot.slane %v810, 4
      %v812 = vrot.slane %v762, 5
      %v813 = vsel %vm781, %v811, %v812
      %s814 = scalar_lea.vmem %s2, 4
      %v815 = vld [vmem:[%s814] sm:$0x3]
      %v816 = vunpack.c.l.b16 %v785
      %v817 = vunpack.c.l.b16 %v789
      %v818 = vunpack.c.l.b16 %v793
      %v819 = vunpack.c.l.b16 %v797
      %v820 = vunpack.c.l.b16 %v801
      %v821 = vunpack.c.l.b16 %v805
      %v822 = vunpack.c.l.b16 %v809
      %v823 = vunpack.c.l.b16 %v813
      %v824 = vpack.c.b16 %v817, %v816
      %v825 = vpack.c.b16 %v819, %v818
      %v826 = vpack.c.b16 %v821, %v820
      %v827 = vpack.c.b16 %v823, %v822
      %v829 = vsel %vm408, %v824, 0
      %v832 = vsel %vm408, %v825, 0
      %v835 = vsel %vm408, %v826, 0
      %v838 = vsel %vm408, %v827, 0
      %v841 = vsel %vm421, %v815, 0
      %843 = vmatprep.subr.bf16.mxu0 0
      %844 = vmatpush1.bf16.msra.mxu0 %v841
      %845 = vmatprep.subr.bf16.mxu0 0
      %846 = vmatpush1.bf16.msra.mxu0 0
      %847 = vmatprep.subr.bf16.mxu0 0
      %848 = vmatpush1.bf16.msra.mxu0 0
      %849 = vmatprep.subr.bf16.mxu0 0
      %850 = vmatpush1.bf16.msra.mxu0 0
      %851 = vmatprep.subr.bf16.mxu0 0
      %852 = vmatpush1.bf16.msra.mxu0 0
      %853 = vmatprep.subr.bf16.mxu0 0
      %854 = vmatpush1.bf16.msra.mxu0 0
      %855 = vmatprep.subr.bf16.mxu0 0
      %856 = vmatpush1.bf16.msra.mxu0 0
      %857 = vmatprep.subr.bf16.mxu0 0
      %858 = vmatpush1.bf16.msra.mxu0 0
      %859 = vmatprep.subr.bf16.mxu0 0
      %860 = vmatpush1.bf16.msra.mxu0 0
      %861 = vmatprep.subr.bf16.mxu0 0
      %862 = vmatpush1.bf16.msra.mxu0 0
      %863 = vmatprep.subr.bf16.mxu0 0
      %864 = vmatpush1.bf16.msra.mxu0 0
      %865 = vmatprep.subr.bf16.mxu0 0
      %866 = vmatpush1.bf16.msra.mxu0 0
      %867 = vmatprep.subr.bf16.mxu0 0
      %868 = vmatpush1.bf16.msra.mxu0 0
      %869 = vmatprep.subr.bf16.mxu0 0
      %870 = vmatpush1.bf16.msra.mxu0 0
      %871 = vmatprep.subr.bf16.mxu0 0
      %872 = vmatpush1.bf16.msra.mxu0 0
      %873 = vmatprep.subr.bf16.mxu0 0
      %874 = vmatpush1.bf16.msra.mxu0 0
      %875 = vmatprep.mubr.bf16.mxu0 0
      %876 = vmatmul.mubr.bf16.gmra.mrb[0].mxu0 %v829
      %v877 = vpop.f32.mrb[0].mxu0
      %v878 = vadd.f32 0.0, %v877
      %v879 = vpop.f32.mrb[0].mxu0
      %v880 = vpop.f32.mrb[0].mxu0
      %v881 = vadd.f32 0.0, %v880
      %v882 = vpop.f32.mrb[0].mxu0
      %883 = vmatprep.mubr.bf16.mxu0 0
      %884 = vmatmul.mubr.bf16.gmra.mrb[0].mxu0 %v832
      %v885 = vpop.f32.mrb[0].mxu0
      %v886 = vadd.f32 0.0, %v885
      %v887 = vpop.f32.mrb[0].mxu0
      %v888 = vpop.f32.mrb[0].mxu0
      %v889 = vadd.f32 0.0, %v888
      %v890 = vpop.f32.mrb[0].mxu0
      %891 = vmatprep.mubr.bf16.mxu0 0
      %892 = vmatmul.mubr.bf16.gmra.mrb[0].mxu0 %v835
      %v893 = vpop.f32.mrb[0].mxu0
      %v894 = vadd.f32 0.0, %v893
      %v895 = vpop.f32.mrb[0].mxu0
      %v896 = vpop.f32.mrb[0].mxu0
      %v897 = vadd.f32 0.0, %v896
      %v898 = vpop.f32.mrb[0].mxu0
      %899 = vmatprep.mubr.bf16.mxu0 0
      %900 = vmatmul.mubr.bf16.gmra.mrb[0].mxu0 %v838
      %v901 = vpop.f32.mrb[0].mxu0
      %v902 = vadd.f32 0.0, %v901
      %v903 = vpop.f32.mrb[0].mxu0
      %v904 = vpop.f32.mrb[0].mxu0
      %v905 = vadd.f32 0.0, %v904
      %v906 = vpop.f32.mrb[0].mxu0
      %907 = vdwg.mxu0
      %v908 = vld [vmem:[%s322] sm:$0xff]
      %v909 = vld [vmem:[%s322 + $0x8] sm:$0xff]
      %v910 = vld [vmem:[%s322 + $0x10] sm:$0xff]
      %v911 = vld [vmem:[%s322 + $0x18] sm:$0xff]
      %v912 = vld [vmem:[%s322 + $0x20] sm:$0xff]
      %v913 = vld [vmem:[%s322 + $0x28] sm:$0xff]
      %v914 = vld [vmem:[%s322 + $0x30] sm:$0xff]
      %v915 = vld [vmem:[%s322 + $0x38] sm:$0xff]
      %v916 = vadd.f32 %v908, %v878
      %v917 = vadd.f32 %v909, %v881
      %v918 = vadd.f32 %v910, %v886
      %v919 = vadd.f32 %v911, %v889
      %v920 = vadd.f32 %v912, %v894
      %v921 = vadd.f32 %v913, %v897
      %v922 = vadd.f32 %v914, %v902
      %v923 = vadd.f32 %v915, %v905
      %924 = vst [vmem:[%s322] sm:$0xff] %v916
      %925 = vst [vmem:[%s322 + $0x8] sm:$0xff] %v917
      %926 = vst [vmem:[%s322 + $0x10] sm:$0xff] %v918
      %927 = vst [vmem:[%s322 + $0x18] sm:$0xff] %v919
      %928 = vst [vmem:[%s322 + $0x20] sm:$0xff] %v920
      %929 = vst [vmem:[%s322 + $0x28] sm:$0xff] %v921
      %930 = vst [vmem:[%s322 + $0x30] sm:$0xff] %v922
      %931 = vst [vmem:[%s322 + $0x38] sm:$0xff] %v923
      %s932 = scalar_lea.vmem [#allocation2], 8
      %v933 = vld [vmem:[%s932] sm:$0xf]
      %v934 = vld [vmem:[%s932 + $0x8] sm:$0xf]
      %v935 = vld [vmem:[%s932 + $0x10] sm:$0xf]
      %v936 = vld [vmem:[%s932 + $0x18] sm:$0xf]
      %v937 = vld [vmem:[%s932 + $0x20] sm:$0xf]
      %v938 = vld [vmem:[%s932 + $0x28] sm:$0xf]
      %v939 = vld [vmem:[%s932 + $0x30] sm:$0xf]
      %v940 = vld [vmem:[%s932 + $0x38] sm:$0xf]
      %s941 = scalar_lea.vmem %s2, 6
      %v942 = vld [vmem:[%s941] sm:$0x3]
      %v951 = vunpack.c.l.b16 %v933
      %v952 = vunpack.c.l.b16 %v934
      %v953 = vunpack.c.l.b16 %v935
      %v954 = vunpack.c.l.b16 %v936
      %v955 = vunpack.c.l.b16 %v937
      %v956 = vunpack.c.l.b16 %v938
      %v957 = vunpack.c.l.b16 %v939
      %v958 = vunpack.c.l.b16 %v940
      %v959 = vpack.c.b16 %v952, %v951
      %v960 = vpack.c.b16 %v954, %v953
      %v961 = vpack.c.b16 %v956, %v955
      %v962 = vpack.c.b16 %v958, %v957
      %v964 = vsel %vm408, %v959, 0
      %v967 = vsel %vm408, %v960, 0
      %v970 = vsel %vm408, %v961, 0
      %v973 = vsel %vm408, %v962, 0
      %v976 = vsel %vm421, %v942, 0
      %978 = vmatprep.subr.bf16.mxu0 0
      %979 = vmatpush1.bf16.msra.mxu0 %v976
      %980 = vmatprep.subr.bf16.mxu0 0
      %981 = vmatpush1.bf16.msra.mxu0 0
      %982 = vmatprep.subr.bf16.mxu0 0
      %983 = vmatpush1.bf16.msra.mxu0 0
      %984 = vmatprep.subr.bf16.mxu0 0
      %985 = vmatpush1.bf16.msra.mxu0 0
      %986 = vmatprep.subr.bf16.mxu0 0
      %987 = vmatpush1.bf16.msra.mxu0 0
      %988 = vmatprep.subr.bf16.mxu0 0
      %989 = vmatpush1.bf16.msra.mxu0 0
      %990 = vmatprep.subr.bf16.mxu0 0
      %991 = vmatpush1.bf16.msra.mxu0 0
      %992 = vmatprep.subr.bf16.mxu0 0
      %993 = vmatpush1.bf16.msra.mxu0 0
      %994 = vmatprep.subr.bf16.mxu0 0
      %995 = vmatpush1.bf16.msra.mxu0 0
      %996 = vmatprep.subr.bf16.mxu0 0
      %997 = vmatpush1.bf16.msra.mxu0 0
      %998 = vmatprep.subr.bf16.mxu0 0
      %999 = vmatpush1.bf16.msra.mxu0 0
      %1000 = vmatprep.subr.bf16.mxu0 0
      %1001 = vmatpush1.bf16.msra.mxu0 0
      %1002 = vmatprep.subr.bf16.mxu0 0
      %1003 = vmatpush1.bf16.msra.mxu0 0
      %1004 = vmatprep.subr.bf16.mxu0 0
      %1005 = vmatpush1.bf16.msra.mxu0 0
      %1006 = vmatprep.subr.bf16.mxu0 0
      %1007 = vmatpush1.bf16.msra.mxu0 0
      %1008 = vmatprep.subr.bf16.mxu0 0
      %1009 = vmatpush1.bf16.msra.mxu0 0
      %1010 = vmatprep.mubr.bf16.mxu0 0
      %1011 = vmatmul.mubr.bf16.gmra.mrb[0].mxu0 %v964
      %v1012 = vpop.f32.mrb[0].mxu0
      %v1013 = vadd.f32 0.0, %v1012
      %v1014 = vpop.f32.mrb[0].mxu0
      %v1015 = vpop.f32.mrb[0].mxu0
      %v1016 = vadd.f32 0.0, %v1015
      %v1017 = vpop.f32.mrb[0].mxu0
      %1018 = vmatprep.mubr.bf16.mxu0 0
      %1019 = vmatmul.mubr.bf16.gmra.mrb[0].mxu0 %v967
      %v1020 = vpop.f32.mrb[0].mxu0
      %v1021 = vadd.f32 0.0, %v1020
      %v1022 = vpop.f32.mrb[0].mxu0
      %v1023 = vpop.f32.mrb[0].mxu0
      %v1024 = vadd.f32 0.0, %v1023
      %v1025 = vpop.f32.mrb[0].mxu0
      %1026 = vmatprep.mubr.bf16.mxu0 0
      %1027 = vmatmul.mubr.bf16.gmra.mrb[0].mxu0 %v970
      %v1028 = vpop.f32.mrb[0].mxu0
      %v1029 = vadd.f32 0.0, %v1028
      %v1030 = vpop.f32.mrb[0].mxu0
      %v1031 = vpop.f32.mrb[0].mxu0
      %v1032 = vadd.f32 0.0, %v1031
      %v1033 = vpop.f32.mrb[0].mxu0
      %1034 = vmatprep.mubr.bf16.mxu0 0
      %1035 = vmatmul.mubr.bf16.gmra.mrb[0].mxu0 %v973
      %v1036 = vpop.f32.mrb[0].mxu0
      %v1037 = vadd.f32 0.0, %v1036
      %v1038 = vpop.f32.mrb[0].mxu0
      %v1039 = vpop.f32.mrb[0].mxu0
      %v1040 = vadd.f32 0.0, %v1039
      %v1041 = vpop.f32.mrb[0].mxu0
      %1042 = vdwg.mxu0
      %v1043 = vld [vmem:[%s322] sm:$0xff]
      %v1044 = vld [vmem:[%s322 + $0x8] sm:$0xff]
      %v1045 = vld [vmem:[%s322 + $0x10] sm:$0xff]
      %v1046 = vld [vmem:[%s322 + $0x18] sm:$0xff]
      %v1047 = vld [vmem:[%s322 + $0x20] sm:$0xff]
      %v1048 = vld [vmem:[%s322 + $0x28] sm:$0xff]
      %v1049 = vld [vmem:[%s322 + $0x30] sm:$0xff]
      %v1050 = vld [vmem:[%s322 + $0x38] sm:$0xff]
      %v1051 = vadd.f32 %v1043, %v1013
      %v1052 = vadd.f32 %v1044, %v1016
      %v1053 = vadd.f32 %v1045, %v1021
      %v1054 = vadd.f32 %v1046, %v1024
      %v1055 = vadd.f32 %v1047, %v1029
      %v1056 = vadd.f32 %v1048, %v1032
      %v1057 = vadd.f32 %v1049, %v1037
      %v1058 = vadd.f32 %v1050, %v1040
      %1059 = vst [vmem:[%s322] sm:$0xff] %v1051
      %1060 = vst [vmem:[%s322 + $0x8] sm:$0xff] %v1052
      %1061 = vst [vmem:[%s322 + $0x10] sm:$0xff] %v1053
      %1062 = vst [vmem:[%s322 + $0x18] sm:$0xff] %v1054
      %1063 = vst [vmem:[%s322 + $0x20] sm:$0xff] %v1055
      %1064 = vst [vmem:[%s322 + $0x28] sm:$0xff] %v1056
      %1065 = vst [vmem:[%s322 + $0x30] sm:$0xff] %v1057
      %1066 = vst [vmem:[%s322 + $0x38] sm:$0xff] %v1058
      %v1067 = vld [vmem:[%s932] sm:$0xf]
      %v1068 = vld [vmem:[%s932 + $0x4] sm:$0x1]
      %v1069 = vld [vmem:[%s932 + $0x8] sm:$0xf]
      %v1070 = vld [vmem:[%s932 + $0xc] sm:$0x1]
      %v1071 = vld [vmem:[%s932 + $0x10] sm:$0xf]
      %v1072 = vld [vmem:[%s932 + $0x14] sm:$0x1]
      %v1073 = vld [vmem:[%s932 + $0x18] sm:$0xf]
      %v1074 = vld [vmem:[%s932 + $0x1c] sm:$0x1]
      %v1075 = vld [vmem:[%s932 + $0x20] sm:$0xf]
      %v1076 = vld [vmem:[%s932 + $0x24] sm:$0x1]
      %v1077 = vld [vmem:[%s932 + $0x28] sm:$0xf]
      %v1078 = vld [vmem:[%s932 + $0x2c] sm:$0x1]
      %v1079 = vld [vmem:[%s932 + $0x30] sm:$0xf]
      %v1080 = vld [vmem:[%s932 + $0x34] sm:$0x1]
      %v1081 = vld [vmem:[%s932 + $0x38] sm:$0xf]
      %v1082 = vld [vmem:[%s932 + $0x3c] sm:$0x1]
      %v1084 = vshrl.u32 %v1067, 16
      %v1086 = vrot.slane %v1084, 4
      %v1087 = vshll.u32 %v1067, 16
      %v1089 = vrot.slane %v1087, 5
      %v1090 = vor.u32 %v1086, %v1089
      %v1091 = vrot.slane %v1090, 4
      %v1093 = vshll.u32 %v1068, 16
      %v1095 = vrot.slane %v1093, 5
      %v1096 = vsel %vm516, %v1091, %v1095
      %v1098 = vshrl.u32 %v1069, 16
      %v1100 = vrot.slane %v1098, 4
      %v1101 = vshll.u32 %v1069, 16
      %v1103 = vrot.slane %v1101, 5
      %v1104 = vor.u32 %v1100, %v1103
      %v1105 = vrot.slane %v1104, 4
      %v1107 = vshll.u32 %v1070, 16
      %v1109 = vrot.slane %v1107, 5
      %v1110 = vsel %vm516, %v1105, %v1109
      %v1112 = vshrl.u32 %v1071, 16
      %v1114 = vrot.slane %v1112, 4
      %v1115 = vshll.u32 %v1071, 16
      %v1117 = vrot.slane %v1115, 5
      %v1118 = vor.u32 %v1114, %v1117
      %v1119 = vrot.slane %v1118, 4
      %v1121 = vshll.u32 %v1072, 16
      %v1123 = vrot.slane %v1121, 5
      %v1124 = vsel %vm516, %v1119, %v1123
      %v1126 = vshrl.u32 %v1073, 16
      %v1128 = vrot.slane %v1126, 4
      %v1129 = vshll.u32 %v1073, 16
      %v1131 = vrot.slane %v1129, 5
      %v1132 = vor.u32 %v1128, %v1131
      %v1133 = vrot.slane %v1132, 4
      %v1135 = vshll.u32 %v1074, 16
      %v1137 = vrot.slane %v1135, 5
      %v1138 = vsel %vm516, %v1133, %v1137
      %v1140 = vshrl.u32 %v1075, 16
      %v1142 = vrot.slane %v1140, 4
      %v1143 = vshll.u32 %v1075, 16
      %v1145 = vrot.slane %v1143, 5
      %v1146 = vor.u32 %v1142, %v1145
      %v1147 = vrot.slane %v1146, 4
      %v1149 = vshll.u32 %v1076, 16
      %v1151 = vrot.slane %v1149, 5
      %v1152 = vsel %vm516, %v1147, %v1151
      %v1154 = vshrl.u32 %v1077, 16
      %v1156 = vrot.slane %v1154, 4
      %v1157 = vshll.u32 %v1077, 16
      %v1159 = vrot.slane %v1157, 5
      %v1160 = vor.u32 %v1156, %v1159
      %v1161 = vrot.slane %v1160, 4
      %v1163 = vshll.u32 %v1078, 16
      %v1165 = vrot.slane %v1163, 5
      %v1166 = vsel %vm516, %v1161, %v1165
      %v1168 = vshrl.u32 %v1079, 16
      %v1170 = vrot.slane %v1168, 4
      %v1171 = vshll.u32 %v1079, 16
      %v1173 = vrot.slane %v1171, 5
      %v1174 = vor.u32 %v1170, %v1173
      %v1175 = vrot.slane %v1174, 4
      %v1177 = vshll.u32 %v1080, 16
      %v1179 = vrot.slane %v1177, 5
      %v1180 = vsel %vm516, %v1175, %v1179
      %v1182 = vshrl.u32 %v1081, 16
      %v1184 = vrot.slane %v1182, 4
      %v1185 = vshll.u32 %v1081, 16
      %v1187 = vrot.slane %v1185, 5
      %v1188 = vor.u32 %v1184, %v1187
      %v1189 = vrot.slane %v1188, 4
      %v1191 = vshll.u32 %v1082, 16
      %v1193 = vrot.slane %v1191, 5
      %v1194 = vsel %vm516, %v1189, %v1193
      %s1195 = scalar_lea.vmem %s2, 8
      %v1196 = vld [vmem:[%s1195] sm:$0x3]
      %v1197 = vunpack.c.l.b16 %v1096
      %v1198 = vunpack.c.l.b16 %v1110
      %v1199 = vunpack.c.l.b16 %v1124
      %v1200 = vunpack.c.l.b16 %v1138
      %v1201 = vunpack.c.l.b16 %v1152
      %v1202 = vunpack.c.l.b16 %v1166
      %v1203 = vunpack.c.l.b16 %v1180
      %v1204 = vunpack.c.l.b16 %v1194
      %v1205 = vpack.c.b16 %v1198, %v1197
      %v1206 = vpack.c.b16 %v1200, %v1199
      %v1207 = vpack.c.b16 %v1202, %v1201
      %v1208 = vpack.c.b16 %v1204, %v1203
      %v1210 = vsel %vm408, %v1205, 0
      %v1213 = vsel %vm408, %v1206, 0
      %v1216 = vsel %vm408, %v1207, 0
      %v1219 = vsel %vm408, %v1208, 0
      %v1222 = vsel %vm421, %v1196, 0
      %1224 = vmatprep.subr.bf16.mxu0 0
      %1225 = vmatpush1.bf16.msra.mxu0 %v1222
      %1226 = vmatprep.subr.bf16.mxu0 0
      %1227 = vmatpush1.bf16.msra.mxu0 0
      %1228 = vmatprep.subr.bf16.mxu0 0
      %1229 = vmatpush1.bf16.msra.mxu0 0
      %1230 = vmatprep.subr.bf16.mxu0 0
      %1231 = vmatpush1.bf16.msra.mxu0 0
      %1232 = vmatprep.subr.bf16.mxu0 0
      %1233 = vmatpush1.bf16.msra.mxu0 0
      %1234 = vmatprep.subr.bf16.mxu0 0
      %1235 = vmatpush1.bf16.msra.mxu0 0
      %1236 = vmatprep.subr.bf16.mxu0 0
      %1237 = vmatpush1.bf16.msra.mxu0 0
      %1238 = vmatprep.subr.bf16.mxu0 0
      %1239 = vmatpush1.bf16.msra.mxu0 0
      %1240 = vmatprep.subr.bf16.mxu0 0
      %1241 = vmatpush1.bf16.msra.mxu0 0
      %1242 = vmatprep.subr.bf16.mxu0 0
      %1243 = vmatpush1.bf16.msra.mxu0 0
      %1244 = vmatprep.subr.bf16.mxu0 0
      %1245 = vmatpush1.bf16.msra.mxu0 0
      %1246 = vmatprep.subr.bf16.mxu0 0
      %1247 = vmatpush1.bf16.msra.mxu0 0
      %1248 = vmatprep.subr.bf16.mxu0 0
      %1249 = vmatpush1.bf16.msra.mxu0 0
      %1250 = vmatprep.subr.bf16.mxu0 0
      %1251 = vmatpush1.bf16.msra.mxu0 0
      %1252 = vmatprep.subr.bf16.mxu0 0
      %1253 = vmatpush1.bf16.msra.mxu0 0
      %1254 = vmatprep.subr.bf16.mxu0 0
      %1255 = vmatpush1.bf16.msra.mxu0 0
      %1256 = vmatprep.mubr.bf16.mxu0 0
      %1257 = vmatmul.mubr.bf16.gmra.mrb[0].mxu0 %v1210
      %v1258 = vpop.f32.mrb[0].mxu0
      %v1259 = vadd.f32 0.0, %v1258
      %v1260 = vpop.f32.mrb[0].mxu0
      %v1261 = vpop.f32.mrb[0].mxu0
      %v1262 = vadd.f32 0.0, %v1261
      %v1263 = vpop.f32.mrb[0].mxu0
      %1264 = vmatprep.mubr.bf16.mxu0 0
      %1265 = vmatmul.mubr.bf16.gmra.mrb[0].mxu0 %v1213
      %v1266 = vpop.f32.mrb[0].mxu0
      %v1267 = vadd.f32 0.0, %v1266
      %v1268 = vpop.f32.mrb[0].mxu0
      %v1269 = vpop.f32.mrb[0].mxu0
      %v1270 = vadd.f32 0.0, %v1269
      %v1271 = vpop.f32.mrb[0].mxu0
      %1272 = vmatprep.mubr.bf16.mxu0 0
      %1273 = vmatmul.mubr.bf16.gmra.mrb[0].mxu0 %v1216
      %v1274 = vpop.f32.mrb[0].mxu0
      %v1275 = vadd.f32 0.0, %v1274
      %v1276 = vpop.f32.mrb[0].mxu0
      %v1277 = vpop.f32.mrb[0].mxu0
      %v1278 = vadd.f32 0.0, %v1277
      %v1279 = vpop.f32.mrb[0].mxu0
      %1280 = vmatprep.mubr.bf16.mxu0 0
      %1281 = vmatmul.mubr.bf16.gmra.mrb[0].mxu0 %v1219
      %v1282 = vpop.f32.mrb[0].mxu0
      %v1283 = vadd.f32 0.0, %v1282
      %v1284 = vpop.f32.mrb[0].mxu0
      %v1285 = vpop.f32.mrb[0].mxu0
      %v1286 = vadd.f32 0.0, %v1285
      %v1287 = vpop.f32.mrb[0].mxu0
      %1288 = vdwg.mxu0
      %v1289 = vld [vmem:[%s322] sm:$0xff]
      %v1290 = vld [vmem:[%s322 + $0x8] sm:$0xff]
      %v1291 = vld [vmem:[%s322 + $0x10] sm:$0xff]
      %v1292 = vld [vmem:[%s322 + $0x18] sm:$0xff]
      %v1293 = vld [vmem:[%s322 + $0x20] sm:$0xff]
      %v1294 = vld [vmem:[%s322 + $0x28] sm:$0xff]
      %v1295 = vld [vmem:[%s322 + $0x30] sm:$0xff]
      %v1296 = vld [vmem:[%s322 + $0x38] sm:$0xff]
      %v1297 = vadd.f32 %v1289, %v1259
      %v1298 = vadd.f32 %v1290, %v1262
      %v1299 = vadd.f32 %v1291, %v1267
      %v1300 = vadd.f32 %v1292, %v1270
      %v1301 = vadd.f32 %v1293, %v1275
      %v1302 = vadd.f32 %v1294, %v1278
      %v1303 = vadd.f32 %v1295, %v1283
      %v1304 = vadd.f32 %v1296, %v1286
      %1305 = vst [vmem:[%s322] sm:$0xff] %v1297
      %1306 = vst [vmem:[%s322 + $0x8] sm:$0xff] %v1298
      %1307 = vst [vmem:[%s322 + $0x10] sm:$0xff] %v1299
      %1308 = vst [vmem:[%s322 + $0x18] sm:$0xff] %v1300
      %1309 = vst [vmem:[%s322 + $0x20] sm:$0xff] %v1301
      %1310 = vst [vmem:[%s322 + $0x28] sm:$0xff] %v1302
      %1311 = vst [vmem:[%s322 + $0x30] sm:$0xff] %v1303
      %1312 = vst [vmem:[%s322 + $0x38] sm:$0xff] %v1304
      %v1313 = vld [vmem:[%s932] sm:$0xe]
      %v1314 = vld [vmem:[%s932 + $0x4] sm:$0x1]
      %v1315 = vld [vmem:[%s932 + $0x8] sm:$0xe]
      %v1316 = vld [vmem:[%s932 + $0xc] sm:$0x1]
      %v1317 = vld [vmem:[%s932 + $0x10] sm:$0xe]
      %v1318 = vld [vmem:[%s932 + $0x14] sm:$0x1]
      %v1319 = vld [vmem:[%s932 + $0x18] sm:$0xe]
      %v1320 = vld [vmem:[%s932 + $0x1c] sm:$0x1]
      %v1321 = vld [vmem:[%s932 + $0x20] sm:$0xe]
      %v1322 = vld [vmem:[%s932 + $0x24] sm:$0x1]
      %v1323 = vld [vmem:[%s932 + $0x28] sm:$0xe]
      %v1324 = vld [vmem:[%s932 + $0x2c] sm:$0x1]
      %v1325 = vld [vmem:[%s932 + $0x30] sm:$0xe]
      %v1326 = vld [vmem:[%s932 + $0x34] sm:$0x1]
      %v1327 = vld [vmem:[%s932 + $0x38] sm:$0xe]
      %v1328 = vld [vmem:[%s932 + $0x3c] sm:$0x1]
      %v1345 = vrot.slane %v1313, 5
      %v1346 = vrot.slane %v1345, 4
      %v1347 = vrot.slane %v1314, 5
      %v1348 = vsel %vm781, %v1346, %v1347
      %v1349 = vrot.slane %v1315, 5
      %v1350 = vrot.slane %v1349, 4
      %v1351 = vrot.slane %v1316, 5
      %v1352 = vsel %vm781, %v1350, %v1351
      %v1353 = vrot.slane %v1317, 5
      %v1354 = vrot.slane %v1353, 4
      %v1355 = vrot.slane %v1318, 5
      %v1356 = vsel %vm781, %v1354, %v1355
      %v1357 = vrot.slane %v1319, 5
      %v1358 = vrot.slane %v1357, 4
      %v1359 = vrot.slane %v1320, 5
      %v1360 = vsel %vm781, %v1358, %v1359
      %v1361 = vrot.slane %v1321, 5
      %v1362 = vrot.slane %v1361, 4
      %v1363 = vrot.slane %v1322, 5
      %v1364 = vsel %vm781, %v1362, %v1363
      %v1365 = vrot.slane %v1323, 5
      %v1366 = vrot.slane %v1365, 4
      %v1367 = vrot.slane %v1324, 5
      %v1368 = vsel %vm781, %v1366, %v1367
      %v1369 = vrot.slane %v1325, 5
      %v1370 = vrot.slane %v1369, 4
      %v1371 = vrot.slane %v1326, 5
      %v1372 = vsel %vm781, %v1370, %v1371
      %v1373 = vrot.slane %v1327, 5
      %v1374 = vrot.slane %v1373, 4
      %v1375 = vrot.slane %v1328, 5
      %v1376 = vsel %vm781, %v1374, %v1375
      %s1377 = scalar_lea.vmem %s2, 10
      %v1378 = vld [vmem:[%s1377] sm:$0x3]
      %v1379 = vunpack.c.l.b16 %v1348
      %v1380 = vunpack.c.l.b16 %v1352
      %v1381 = vunpack.c.l.b16 %v1356
      %v1382 = vunpack.c.l.b16 %v1360
      %v1383 = vunpack.c.l.b16 %v1364
      %v1384 = vunpack.c.l.b16 %v1368
      %v1385 = vunpack.c.l.b16 %v1372
      %v1386 = vunpack.c.l.b16 %v1376
      %v1387 = vpack.c.b16 %v1380, %v1379
      %v1388 = vpack.c.b16 %v1382, %v1381
      %v1389 = vpack.c.b16 %v1384, %v1383
      %v1390 = vpack.c.b16 %v1386, %v1385
      %v1392 = vsel %vm408, %v1387, 0
      %v1395 = vsel %vm408, %v1388, 0
      %v1398 = vsel %vm408, %v1389, 0
      %v1401 = vsel %vm408, %v1390, 0
      %v1404 = vsel %vm421, %v1378, 0
      %1406 = vmatprep.subr.bf16.mxu0 0
      %1407 = vmatpush1.bf16.msra.mxu0 %v1404
      %1408 = vmatprep.subr.bf16.mxu0 0
      %1409 = vmatpush1.bf16.msra.mxu0 0
      %1410 = vmatprep.subr.bf16.mxu0 0
      %1411 = vmatpush1.bf16.msra.mxu0 0
      %1412 = vmatprep.subr.bf16.mxu0 0
      %1413 = vmatpush1.bf16.msra.mxu0 0
      %1414 = vmatprep.subr.bf16.mxu0 0
      %1415 = vmatpush1.bf16.msra.mxu0 0
      %1416 = vmatprep.subr.bf16.mxu0 0
      %1417 = vmatpush1.bf16.msra.mxu0 0
      %1418 = vmatprep.subr.bf16.mxu0 0
      %1419 = vmatpush1.bf16.msra.mxu0 0
      %1420 = vmatprep.subr.bf16.mxu0 0
      %1421 = vmatpush1.bf16.msra.mxu0 0
      %1422 = vmatprep.subr.bf16.mxu0 0
      %1423 = vmatpush1.bf16.msra.mxu0 0
      %1424 = vmatprep.subr.bf16.mxu0 0
      %1425 = vmatpush1.bf16.msra.mxu0 0
      %1426 = vmatprep.subr.bf16.mxu0 0
      %1427 = vmatpush1.bf16.msra.mxu0 0
      %1428 = vmatprep.subr.bf16.mxu0 0
      %1429 = vmatpush1.bf16.msra.mxu0 0
      %1430 = vmatprep.subr.bf16.mxu0 0
      %1431 = vmatpush1.bf16.msra.mxu0 0
      %1432 = vmatprep.subr.bf16.mxu0 0
      %1433 = vmatpush1.bf16.msra.mxu0 0
      %1434 = vmatprep.subr.bf16.mxu0 0
      %1435 = vmatpush1.bf16.msra.mxu0 0
      %1436 = vmatprep.subr.bf16.mxu0 0
      %1437 = vmatpush1.bf16.msra.mxu0 0
      %1438 = vmatprep.mubr.bf16.mxu0 0
      %1439 = vmatmul.mubr.bf16.gmra.mrb[0].mxu0 %v1392
      %v1440 = vpop.f32.mrb[0].mxu0
      %v1441 = vadd.f32 0.0, %v1440
      %v1442 = vpop.f32.mrb[0].mxu0
      %v1443 = vpop.f32.mrb[0].mxu0
      %v1444 = vadd.f32 0.0, %v1443
      %v1445 = vpop.f32.mrb[0].mxu0
      %1446 = vmatprep.mubr.bf16.mxu0 0
      %1447 = vmatmul.mubr.bf16.gmra.mrb[0].mxu0 %v1395
      %v1448 = vpop.f32.mrb[0].mxu0
      %v1449 = vadd.f32 0.0, %v1448
      %v1450 = vpop.f32.mrb[0].mxu0
      %v1451 = vpop.f32.mrb[0].mxu0
      %v1452 = vadd.f32 0.0, %v1451
      %v1453 = vpop.f32.mrb[0].mxu0
      %1454 = vmatprep.mubr.bf16.mxu0 0
      %1455 = vmatmul.mubr.bf16.gmra.mrb[0].mxu0 %v1398
      %v1456 = vpop.f32.mrb[0].mxu0
      %v1457 = vadd.f32 0.0, %v1456
      %v1458 = vpop.f32.mrb[0].mxu0
      %v1459 = vpop.f32.mrb[0].mxu0
      %v1460 = vadd.f32 0.0, %v1459
      %v1461 = vpop.f32.mrb[0].mxu0
      %1462 = vmatprep.mubr.bf16.mxu0 0
      %1463 = vmatmul.mubr.bf16.gmra.mrb[0].mxu0 %v1401
      %v1464 = vpop.f32.mrb[0].mxu0
      %v1465 = vadd.f32 0.0, %v1464
      %v1466 = vpop.f32.mrb[0].mxu0
      %v1467 = vpop.f32.mrb[0].mxu0
      %v1468 = vadd.f32 0.0, %v1467
      %v1469 = vpop.f32.mrb[0].mxu0
      %1470 = vdwg.mxu0
      %v1471 = vld [vmem:[%s322] sm:$0xff]
      %v1472 = vld [vmem:[%s322 + $0x8] sm:$0xff]
      %v1473 = vld [vmem:[%s322 + $0x10] sm:$0xff]
      %v1474 = vld [vmem:[%s322 + $0x18] sm:$0xff]
      %v1475 = vld [vmem:[%s322 + $0x20] sm:$0xff]
      %v1476 = vld [vmem:[%s322 + $0x28] sm:$0xff]
      %v1477 = vld [vmem:[%s322 + $0x30] sm:$0xff]
      %v1478 = vld [vmem:[%s322 + $0x38] sm:$0xff]
      %v1479 = vadd.f32 %v1471, %v1441
      %v1480 = vadd.f32 %v1472, %v1444
      %v1481 = vadd.f32 %v1473, %v1449
      %v1482 = vadd.f32 %v1474, %v1452
      %v1483 = vadd.f32 %v1475, %v1457
      %v1484 = vadd.f32 %v1476, %v1460
      %v1485 = vadd.f32 %v1477, %v1465
      %v1486 = vadd.f32 %v1478, %v1468
      %1487 = vst [vmem:[%s322] sm:$0xff] %v1479
      %1488 = vst [vmem:[%s322 + $0x8] sm:$0xff] %v1480
      %1489 = vst [vmem:[%s322 + $0x10] sm:$0xff] %v1481
      %1490 = vst [vmem:[%s322 + $0x18] sm:$0xff] %v1482
      %1491 = vst [vmem:[%s322 + $0x20] sm:$0xff] %v1483
      %1492 = vst [vmem:[%s322 + $0x28] sm:$0xff] %v1484
      %1493 = vst [vmem:[%s322 + $0x30] sm:$0xff] %v1485
      %1494 = vst [vmem:[%s322 + $0x38] sm:$0xff] %v1486
      %s1495 = scalar_lea.vmem [#allocation2], 16
      %v1496 = vld [vmem:[%s1495] sm:$0xf]
      %v1497 = vld [vmem:[%s1495 + $0x8] sm:$0xf]
      %v1498 = vld [vmem:[%s1495 + $0x10] sm:$0xf]
      %v1499 = vld [vmem:[%s1495 + $0x18] sm:$0xf]
      %v1500 = vld [vmem:[%s1495 + $0x20] sm:$0xf]
      %v1501 = vld [vmem:[%s1495 + $0x28] sm:$0xf]
      %v1502 = vld [vmem:[%s1495 + $0x30] sm:$0xf]
      %v1503 = vld [vmem:[%s1495 + $0x38] sm:$0xf]
      %s1504 = scalar_lea.vmem %s2, 12
      %v1505 = vld [vmem:[%s1504] sm:$0x3]
      %v1514 = vunpack.c.l.b16 %v1496
      %v1515 = vunpack.c.l.b16 %v1497
      %v1516 = vunpack.c.l.b16 %v1498
      %v1517 = vunpack.c.l.b16 %v1499
      %v1518 = vunpack.c.l.b16 %v1500
      %v1519 = vunpack.c.l.b16 %v1501
      %v1520 = vunpack.c.l.b16 %v1502
      %v1521 = vunpack.c.l.b16 %v1503
      %v1522 = vpack.c.b16 %v1515, %v1514
      %v1523 = vpack.c.b16 %v1517, %v1516
      %v1524 = vpack.c.b16 %v1519, %v1518
      %v1525 = vpack.c.b16 %v1521, %v1520
      %v1527 = vsel %vm408, %v1522, 0
      %v1530 = vsel %vm408, %v1523, 0
      %v1533 = vsel %vm408, %v1524, 0
      %v1536 = vsel %vm408, %v1525, 0
      %v1539 = vsel %vm421, %v1505, 0
      %1541 = vmatprep.subr.bf16.mxu0 0
      %1542 = vmatpush1.bf16.msra.mxu0 %v1539
      %1543 = vmatprep.subr.bf16.mxu0 0
      %1544 = vmatpush1.bf16.msra.mxu0 0
      %1545 = vmatprep.subr.bf16.mxu0 0
      %1546 = vmatpush1.bf16.msra.mxu0 0
      %1547 = vmatprep.subr.bf16.mxu0 0
      %1548 = vmatpush1.bf16.msra.mxu0 0
      %1549 = vmatprep.subr.bf16.mxu0 0
      %1550 = vmatpush1.bf16.msra.mxu0 0
      %1551 = vmatprep.subr.bf16.mxu0 0
      %1552 = vmatpush1.bf16.msra.mxu0 0
      %1553 = vmatprep.subr.bf16.mxu0 0
      %1554 = vmatpush1.bf16.msra.mxu0 0
      %1555 = vmatprep.subr.bf16.mxu0 0
      %1556 = vmatpush1.bf16.msra.mxu0 0
      %1557 = vmatprep.subr.bf16.mxu0 0
      %1558 = vmatpush1.bf16.msra.mxu0 0
      %1559 = vmatprep.subr.bf16.mxu0 0
      %1560 = vmatpush1.bf16.msra.mxu0 0
      %1561 = vmatprep.subr.bf16.mxu0 0
      %1562 = vmatpush1.bf16.msra.mxu0 0
      %1563 = vmatprep.subr.bf16.mxu0 0
      %1564 = vmatpush1.bf16.msra.mxu0 0
      %1565 = vmatprep.subr.bf16.mxu0 0
      %1566 = vmatpush1.bf16.msra.mxu0 0
      %1567 = vmatprep.subr.bf16.mxu0 0
      %1568 = vmatpush1.bf16.msra.mxu0 0
      %1569 = vmatprep.subr.bf16.mxu0 0
      %1570 = vmatpush1.bf16.msra.mxu0 0
      %1571 = vmatprep.subr.bf16.mxu0 0
      %1572 = vmatpush1.bf16.msra.mxu0 0
      %1573 = vmatprep.mubr.bf16.mxu0 0
      %1574 = vmatmul.mubr.bf16.gmra.mrb[0].mxu0 %v1527
      %v1575 = vpop.f32.mrb[0].mxu0
      %v1576 = vadd.f32 0.0, %v1575
      %v1577 = vpop.f32.mrb[0].mxu0
      %v1578 = vpop.f32.mrb[0].mxu0
      %v1579 = vadd.f32 0.0, %v1578
      %v1580 = vpop.f32.mrb[0].mxu0
      %1581 = vmatprep.mubr.bf16.mxu0 0
      %1582 = vmatmul.mubr.bf16.gmra.mrb[0].mxu0 %v1530
      %v1583 = vpop.f32.mrb[0].mxu0
      %v1584 = vadd.f32 0.0, %v1583
      %v1585 = vpop.f32.mrb[0].mxu0
      %v1586 = vpop.f32.mrb[0].mxu0
      %v1587 = vadd.f32 0.0, %v1586
      %v1588 = vpop.f32.mrb[0].mxu0
      %1589 = vmatprep.mubr.bf16.mxu0 0
      %1590 = vmatmul.mubr.bf16.gmra.mrb[0].mxu0 %v1533
      %v1591 = vpop.f32.mrb[0].mxu0
      %v1592 = vadd.f32 0.0, %v1591
      %v1593 = vpop.f32.mrb[0].mxu0
      %v1594 = vpop.f32.mrb[0].mxu0
      %v1595 = vadd.f32 0.0, %v1594
      %v1596 = vpop.f32.mrb[0].mxu0
      %1597 = vmatprep.mubr.bf16.mxu0 0
      %1598 = vmatmul.mubr.bf16.gmra.mrb[0].mxu0 %v1536
      %v1599 = vpop.f32.mrb[0].mxu0
      %v1600 = vadd.f32 0.0, %v1599
      %v1601 = vpop.f32.mrb[0].mxu0
      %v1602 = vpop.f32.mrb[0].mxu0
      %v1603 = vadd.f32 0.0, %v1602
      %v1604 = vpop.f32.mrb[0].mxu0
      %1605 = vdwg.mxu0
      %v1606 = vld [vmem:[%s322] sm:$0xff]
      %v1607 = vld [vmem:[%s322 + $0x8] sm:$0xff]
      %v1608 = vld [vmem:[%s322 + $0x10] sm:$0xff]
      %v1609 = vld [vmem:[%s322 + $0x18] sm:$0xff]
      %v1610 = vld [vmem:[%s322 + $0x20] sm:$0xff]
      %v1611 = vld [vmem:[%s322 + $0x28] sm:$0xff]
      %v1612 = vld [vmem:[%s322 + $0x30] sm:$0xff]
      %v1613 = vld [vmem:[%s322 + $0x38] sm:$0xff]
      %v1614 = vadd.f32 %v1606, %v1576
      %v1615 = vadd.f32 %v1607, %v1579
      %v1616 = vadd.f32 %v1608, %v1584
      %v1617 = vadd.f32 %v1609, %v1587
      %v1618 = vadd.f32 %v1610, %v1592
      %v1619 = vadd.f32 %v1611, %v1595
      %v1620 = vadd.f32 %v1612, %v1600
      %v1621 = vadd.f32 %v1613, %v1603
      %1622 = vst [vmem:[%s322] sm:$0xff] %v1614
      %1623 = vst [vmem:[%s322 + $0x8] sm:$0xff] %v1615
      %1624 = vst [vmem:[%s322 + $0x10] sm:$0xff] %v1616
      %1625 = vst [vmem:[%s322 + $0x18] sm:$0xff] %v1617
      %1626 = vst [vmem:[%s322 + $0x20] sm:$0xff] %v1618
      %1627 = vst [vmem:[%s322 + $0x28] sm:$0xff] %v1619
      %1628 = vst [vmem:[%s322 + $0x30] sm:$0xff] %v1620
      %1629 = vst [vmem:[%s322 + $0x38] sm:$0xff] %v1621
      %v1630 = vld [vmem:[%s1495] sm:$0xf]
      %v1631 = vld [vmem:[%s1495 + $0x4] sm:$0x1]
      %v1632 = vld [vmem:[%s1495 + $0x8] sm:$0xf]
      %v1633 = vld [vmem:[%s1495 + $0xc] sm:$0x1]
      %v1634 = vld [vmem:[%s1495 + $0x10] sm:$0xf]
      %v1635 = vld [vmem:[%s1495 + $0x14] sm:$0x1]
      %v1636 = vld [vmem:[%s1495 + $0x18] sm:$0xf]
      %v1637 = vld [vmem:[%s1495 + $0x1c] sm:$0x1]
      %v1638 = vld [vmem:[%s1495 + $0x20] sm:$0xf]
      %v1639 = vld [vmem:[%s1495 + $0x24] sm:$0x1]
      %v1640 = vld [vmem:[%s1495 + $0x28] sm:$0xf]
      %v1641 = vld [vmem:[%s1495 + $0x2c] sm:$0x1]
      %v1642 = vld [vmem:[%s1495 + $0x30] sm:$0xf]
      %v1643 = vld [vmem:[%s1495 + $0x34] sm:$0x1]
      %v1644 = vld [vmem:[%s1495 + $0x38] sm:$0xf]
      %v1645 = vld [vmem:[%s1495 + $0x3c] sm:$0x1]
      %v1647 = vshrl.u32 %v1630, 16
      %v1649 = vrot.slane %v1647, 4
      %v1650 = vshll.u32 %v1630, 16
      %v1652 = vrot.slane %v1650, 5
      %v1653 = vor.u32 %v1649, %v1652
      %v1654 = vrot.slane %v1653, 4
      %v1656 = vshll.u32 %v1631, 16
      %v1658 = vrot.slane %v1656, 5
      %v1659 = vsel %vm516, %v1654, %v1658
      %v1661 = vshrl.u32 %v1632, 16
      %v1663 = vrot.slane %v1661, 4
      %v1664 = vshll.u32 %v1632, 16
      %v1666 = vrot.slane %v1664, 5
      %v1667 = vor.u32 %v1663, %v1666
      %v1668 = vrot.slane %v1667, 4
      %v1670 = vshll.u32 %v1633, 16
      %v1672 = vrot.slane %v1670, 5
      %v1673 = vsel %vm516, %v1668, %v1672
      %v1675 = vshrl.u32 %v1634, 16
      %v1677 = vrot.slane %v1675, 4
      %v1678 = vshll.u32 %v1634, 16
      %v1680 = vrot.slane %v1678, 5
      %v1681 = vor.u32 %v1677, %v1680
      %v1682 = vrot.slane %v1681, 4
      %v1684 = vshll.u32 %v1635, 16
      %v1686 = vrot.slane %v1684, 5
      %v1687 = vsel %vm516, %v1682, %v1686
      %v1689 = vshrl.u32 %v1636, 16
      %v1691 = vrot.slane %v1689, 4
      %v1692 = vshll.u32 %v1636, 16
      %v1694 = vrot.slane %v1692, 5
      %v1695 = vor.u32 %v1691, %v1694
      %v1696 = vrot.slane %v1695, 4
      %v1698 = vshll.u32 %v1637, 16
      %v1700 = vrot.slane %v1698, 5
      %v1701 = vsel %vm516, %v1696, %v1700
      %v1703 = vshrl.u32 %v1638, 16
      %v1705 = vrot.slane %v1703, 4
      %v1706 = vshll.u32 %v1638, 16
      %v1708 = vrot.slane %v1706, 5
      %v1709 = vor.u32 %v1705, %v1708
      %v1710 = vrot.slane %v1709, 4
      %v1712 = vshll.u32 %v1639, 16
      %v1714 = vrot.slane %v1712, 5
      %v1715 = vsel %vm516, %v1710, %v1714
      %v1717 = vshrl.u32 %v1640, 16
      %v1719 = vrot.slane %v1717, 4
      %v1720 = vshll.u32 %v1640, 16
      %v1722 = vrot.slane %v1720, 5
      %v1723 = vor.u32 %v1719, %v1722
      %v1724 = vrot.slane %v1723, 4
      %v1726 = vshll.u32 %v1641, 16
      %v1728 = vrot.slane %v1726, 5
      %v1729 = vsel %vm516, %v1724, %v1728
      %v1731 = vshrl.u32 %v1642, 16
      %v1733 = vrot.slane %v1731, 4
      %v1734 = vshll.u32 %v1642, 16
      %v1736 = vrot.slane %v1734, 5
      %v1737 = vor.u32 %v1733, %v1736
      %v1738 = vrot.slane %v1737, 4
      %v1740 = vshll.u32 %v1643, 16
      %v1742 = vrot.slane %v1740, 5
      %v1743 = vsel %vm516, %v1738, %v1742
      %v1745 = vshrl.u32 %v1644, 16
      %v1747 = vrot.slane %v1745, 4
      %v1748 = vshll.u32 %v1644, 16
      %v1750 = vrot.slane %v1748, 5
      %v1751 = vor.u32 %v1747, %v1750
      %v1752 = vrot.slane %v1751, 4
      %v1754 = vshll.u32 %v1645, 16
      %v1756 = vrot.slane %v1754, 5
      %v1757 = vsel %vm516, %v1752, %v1756
      %s1758 = scalar_lea.vmem %s2, 14
      %v1759 = vld [vmem:[%s1758] sm:$0x3]
      %v1760 = vunpack.c.l.b16 %v1659
      %v1761 = vunpack.c.l.b16 %v1673
      %v1762 = vunpack.c.l.b16 %v1687
      %v1763 = vunpack.c.l.b16 %v1701
      %v1764 = vunpack.c.l.b16 %v1715
      %v1765 = vunpack.c.l.b16 %v1729
      %v1766 = vunpack.c.l.b16 %v1743
      %v1767 = vunpack.c.l.b16 %v1757
      %v1768 = vpack.c.b16 %v1761, %v1760
      %v1769 = vpack.c.b16 %v1763, %v1762
      %v1770 = vpack.c.b16 %v1765, %v1764
      %v1771 = vpack.c.b16 %v1767, %v1766
      %v1773 = vsel %vm408, %v1768, 0
      %v1776 = vsel %vm408, %v1769, 0
      %v1779 = vsel %vm408, %v1770, 0
      %v1782 = vsel %vm408, %v1771, 0
      %v1785 = vsel %vm421, %v1759, 0
      %1787 = vmatprep.subr.bf16.mxu0 0
      %1788 = vmatpush1.bf16.msra.mxu0 %v1785
      %1789 = vmatprep.subr.bf16.mxu0 0
      %1790 = vmatpush1.bf16.msra.mxu0 0
      %1791 = vmatprep.subr.bf16.mxu0 0
      %1792 = vmatpush1.bf16.msra.mxu0 0
      %1793 = vmatprep.subr.bf16.mxu0 0
      %1794 = vmatpush1.bf16.msra.mxu0 0
      %1795 = vmatprep.subr.bf16.mxu0 0
      %1796 = vmatpush1.bf16.msra.mxu0 0
      %1797 = vmatprep.subr.bf16.mxu0 0
      %1798 = vmatpush1.bf16.msra.mxu0 0
      %1799 = vmatprep.subr.bf16.mxu0 0
      %1800 = vmatpush1.bf16.msra.mxu0 0
      %1801 = vmatprep.subr.bf16.mxu0 0
      %1802 = vmatpush1.bf16.msra.mxu0 0
      %1803 = vmatprep.subr.bf16.mxu0 0
      %1804 = vmatpush1.bf16.msra.mxu0 0
      %1805 = vmatprep.subr.bf16.mxu0 0
      %1806 = vmatpush1.bf16.msra.mxu0 0
      %1807 = vmatprep.subr.bf16.mxu0 0
      %1808 = vmatpush1.bf16.msra.mxu0 0
      %1809 = vmatprep.subr.bf16.mxu0 0
      %1810 = vmatpush1.bf16.msra.mxu0 0
      %1811 = vmatprep.subr.bf16.mxu0 0
      %1812 = vmatpush1.bf16.msra.mxu0 0
      %1813 = vmatprep.subr.bf16.mxu0 0
      %1814 = vmatpush1.bf16.msra.mxu0 0
      %1815 = vmatprep.subr.bf16.mxu0 0
      %1816 = vmatpush1.bf16.msra.mxu0 0
      %1817 = vmatprep.subr.bf16.mxu0 0
      %1818 = vmatpush1.bf16.msra.mxu0 0
      %1819 = vmatprep.mubr.bf16.mxu0 0
      %1820 = vmatmul.mubr.bf16.gmra.mrb[0].mxu0 %v1773
      %v1821 = vpop.f32.mrb[0].mxu0
      %v1822 = vadd.f32 0.0, %v1821
      %v1823 = vpop.f32.mrb[0].mxu0
      %v1824 = vpop.f32.mrb[0].mxu0
      %v1825 = vadd.f32 0.0, %v1824
      %v1826 = vpop.f32.mrb[0].mxu0
      %1827 = vmatprep.mubr.bf16.mxu0 0
      %1828 = vmatmul.mubr.bf16.gmra.mrb[0].mxu0 %v1776
      %v1829 = vpop.f32.mrb[0].mxu0
      %v1830 = vadd.f32 0.0, %v1829
      %v1831 = vpop.f32.mrb[0].mxu0
      %v1832 = vpop.f32.mrb[0].mxu0
      %v1833 = vadd.f32 0.0, %v1832
      %v1834 = vpop.f32.mrb[0].mxu0
      %1835 = vmatprep.mubr.bf16.mxu0 0
      %1836 = vmatmul.mubr.bf16.gmra.mrb[0].mxu0 %v1779
      %v1837 = vpop.f32.mrb[0].mxu0
      %v1838 = vadd.f32 0.0, %v1837
      %v1839 = vpop.f32.mrb[0].mxu0
      %v1840 = vpop.f32.mrb[0].mxu0
      %v1841 = vadd.f32 0.0, %v1840
      %v1842 = vpop.f32.mrb[0].mxu0
      %1843 = vmatprep.mubr.bf16.mxu0 0
      %1844 = vmatmul.mubr.bf16.gmra.mrb[0].mxu0 %v1782
      %v1845 = vpop.f32.mrb[0].mxu0
      %v1846 = vadd.f32 0.0, %v1845
      %v1847 = vpop.f32.mrb[0].mxu0
      %v1848 = vpop.f32.mrb[0].mxu0
      %v1849 = vadd.f32 0.0, %v1848
      %v1850 = vpop.f32.mrb[0].mxu0
      %1851 = vdwg.mxu0
      %v1852 = vld [vmem:[%s322] sm:$0xff]
      %v1853 = vld [vmem:[%s322 + $0x8] sm:$0xff]
      %v1854 = vld [vmem:[%s322 + $0x10] sm:$0xff]
      %v1855 = vld [vmem:[%s322 + $0x18] sm:$0xff]
      %v1856 = vld [vmem:[%s322 + $0x20] sm:$0xff]
      %v1857 = vld [vmem:[%s322 + $0x28] sm:$0xff]
      %v1858 = vld [vmem:[%s322 + $0x30] sm:$0xff]
      %v1859 = vld [vmem:[%s322 + $0x38] sm:$0xff]
      %v1860 = vadd.f32 %v1852, %v1822
      %v1861 = vadd.f32 %v1853, %v1825
      %v1862 = vadd.f32 %v1854, %v1830
      %v1863 = vadd.f32 %v1855, %v1833
      %v1864 = vadd.f32 %v1856, %v1838
      %v1865 = vadd.f32 %v1857, %v1841
      %v1866 = vadd.f32 %v1858, %v1846
      %v1867 = vadd.f32 %v1859, %v1849
      %1868 = vst [vmem:[%s322] sm:$0xff] %v1860
      %1869 = vst [vmem:[%s322 + $0x8] sm:$0xff] %v1861
      %1870 = vst [vmem:[%s322 + $0x10] sm:$0xff] %v1862
      %1871 = vst [vmem:[%s322 + $0x18] sm:$0xff] %v1863
      %1872 = vst [vmem:[%s322 + $0x20] sm:$0xff] %v1864
      %1873 = vst [vmem:[%s322 + $0x28] sm:$0xff] %v1865
      %1874 = vst [vmem:[%s322 + $0x30] sm:$0xff] %v1866
      %1875 = vst [vmem:[%s322 + $0x38] sm:$0xff] %v1867
      %v1876 = vld [vmem:[%s1495] sm:$0xe]
      %v1877 = vld [vmem:[%s1495 + $0x4] sm:$0x1]
      %v1878 = vld [vmem:[%s1495 + $0x8] sm:$0xe]
      %v1879 = vld [vmem:[%s1495 + $0xc] sm:$0x1]
      %v1880 = vld [vmem:[%s1495 + $0x10] sm:$0xe]
      %v1881 = vld [vmem:[%s1495 + $0x14] sm:$0x1]
      %v1882 = vld [vmem:[%s1495 + $0x18] sm:$0xe]
      %v1883 = vld [vmem:[%s1495 + $0x1c] sm:$0x1]
      %v1884 = vld [vmem:[%s1495 + $0x20] sm:$0xe]
      %v1885 = vld [vmem:[%s1495 + $0x24] sm:$0x1]
      %v1886 = vld [vmem:[%s1495 + $0x28] sm:$0xe]
      %v1887 = vld [vmem:[%s1495 + $0x2c] sm:$0x1]
      %v1888 = vld [vmem:[%s1495 + $0x30] sm:$0xe]
      %v1889 = vld [vmem:[%s1495 + $0x34] sm:$0x1]
      %v1890 = vld [vmem:[%s1495 + $0x38] sm:$0xe]
      %v1891 = vld [vmem:[%s1495 + $0x3c] sm:$0x1]
      %v1908 = vrot.slane %v1876, 5
      %v1909 = vrot.slane %v1908, 4
      %v1910 = vrot.slane %v1877, 5
      %v1911 = vsel %vm781, %v1909, %v1910
      %v1912 = vrot.slane %v1878, 5
      %v1913 = vrot.slane %v1912, 4
      %v1914 = vrot.slane %v1879, 5
      %v1915 = vsel %vm781, %v1913, %v1914
      %v1916 = vrot.slane %v1880, 5
      %v1917 = vrot.slane %v1916, 4
      %v1918 = vrot.slane %v1881, 5
      %v1919 = vsel %vm781, %v1917, %v1918
      %v1920 = vrot.slane %v1882, 5
      %v1921 = vrot.slane %v1920, 4
      %v1922 = vrot.slane %v1883, 5
      %v1923 = vsel %vm781, %v1921, %v1922
      %v1924 = vrot.slane %v1884, 5
      %v1925 = vrot.slane %v1924, 4
      %v1926 = vrot.slane %v1885, 5
      %v1927 = vsel %vm781, %v1925, %v1926
      %v1928 = vrot.slane %v1886, 5
      %v1929 = vrot.slane %v1928, 4
      %v1930 = vrot.slane %v1887, 5
      %v1931 = vsel %vm781, %v1929, %v1930
      %v1932 = vrot.slane %v1888, 5
      %v1933 = vrot.slane %v1932, 4
      %v1934 = vrot.slane %v1889, 5
      %v1935 = vsel %vm781, %v1933, %v1934
      %v1936 = vrot.slane %v1890, 5
      %v1937 = vrot.slane %v1936, 4
      %v1938 = vrot.slane %v1891, 5
      %v1939 = vsel %vm781, %v1937, %v1938
      %s1940 = scalar_lea.vmem %s2, 16
      %v1941 = vld [vmem:[%s1940] sm:$0x3]
      %v1942 = vunpack.c.l.b16 %v1911
      %v1943 = vunpack.c.l.b16 %v1915
      %v1944 = vunpack.c.l.b16 %v1919
      %v1945 = vunpack.c.l.b16 %v1923
      %v1946 = vunpack.c.l.b16 %v1927
      %v1947 = vunpack.c.l.b16 %v1931
      %v1948 = vunpack.c.l.b16 %v1935
      %v1949 = vunpack.c.l.b16 %v1939
      %v1950 = vpack.c.b16 %v1943, %v1942
      %v1951 = vpack.c.b16 %v1945, %v1944
      %v1952 = vpack.c.b16 %v1947, %v1946
      %v1953 = vpack.c.b16 %v1949, %v1948
      %v1955 = vsel %vm408, %v1950, 0
      %v1958 = vsel %vm408, %v1951, 0
      %v1961 = vsel %vm408, %v1952, 0
      %v1964 = vsel %vm408, %v1953, 0
      %v1967 = vsel %vm421, %v1941, 0
      %1969 = vmatprep.subr.bf16.mxu0 0
      %1970 = vmatpush1.bf16.msra.mxu0 %v1967
      %1971 = vmatprep.subr.bf16.mxu0 0
      %1972 = vmatpush1.bf16.msra.mxu0 0
      %1973 = vmatprep.subr.bf16.mxu0 0
      %1974 = vmatpush1.bf16.msra.mxu0 0
      %1975 = vmatprep.subr.bf16.mxu0 0
      %1976 = vmatpush1.bf16.msra.mxu0 0
      %1977 = vmatprep.subr.bf16.mxu0 0
      %1978 = vmatpush1.bf16.msra.mxu0 0
      %1979 = vmatprep.subr.bf16.mxu0 0
      %1980 = vmatpush1.bf16.msra.mxu0 0
      %1981 = vmatprep.subr.bf16.mxu0 0
      %1982 = vmatpush1.bf16.msra.mxu0 0
      %1983 = vmatprep.subr.bf16.mxu0 0
      %1984 = vmatpush1.bf16.msra.mxu0 0
      %1985 = vmatprep.subr.bf16.mxu0 0
      %1986 = vmatpush1.bf16.msra.mxu0 0
      %1987 = vmatprep.subr.bf16.mxu0 0
      %1988 = vmatpush1.bf16.msra.mxu0 0
      %1989 = vmatprep.subr.bf16.mxu0 0
      %1990 = vmatpush1.bf16.msra.mxu0 0
      %1991 = vmatprep.subr.bf16.mxu0 0
      %1992 = vmatpush1.bf16.msra.mxu0 0
      %1993 = vmatprep.subr.bf16.mxu0 0
      %1994 = vmatpush1.bf16.msra.mxu0 0
      %1995 = vmatprep.subr.bf16.mxu0 0
      %1996 = vmatpush1.bf16.msra.mxu0 0
      %1997 = vmatprep.subr.bf16.mxu0 0
      %1998 = vmatpush1.bf16.msra.mxu0 0
      %1999 = vmatprep.subr.bf16.mxu0 0
      %2000 = vmatpush1.bf16.msra.mxu0 0
      %2001 = vmatprep.mubr.bf16.mxu0 0
      %2002 = vmatmul.mubr.bf16.gmra.mrb[0].mxu0 %v1955
      %v2003 = vpop.f32.mrb[0].mxu0
      %v2004 = vadd.f32 0.0, %v2003
      %v2005 = vpop.f32.mrb[0].mxu0
      %v2006 = vpop.f32.mrb[0].mxu0
      %v2007 = vadd.f32 0.0, %v2006
      %v2008 = vpop.f32.mrb[0].mxu0
      %2009 = vmatprep.mubr.bf16.mxu0 0
      %2010 = vmatmul.mubr.bf16.gmra.mrb[0].mxu0 %v1958
      %v2011 = vpop.f32.mrb[0].mxu0
      %v2012 = vadd.f32 0.0, %v2011
      %v2013 = vpop.f32.mrb[0].mxu0
      %v2014 = vpop.f32.mrb[0].mxu0
      %v2015 = vadd.f32 0.0, %v2014
      %v2016 = vpop.f32.mrb[0].mxu0
      %2017 = vmatprep.mubr.bf16.mxu0 0
      %2018 = vmatmul.mubr.bf16.gmra.mrb[0].mxu0 %v1961
      %v2019 = vpop.f32.mrb[0].mxu0
      %v2020 = vadd.f32 0.0, %v2019
      %v2021 = vpop.f32.mrb[0].mxu0
      %v2022 = vpop.f32.mrb[0].mxu0
      %v2023 = vadd.f32 0.0, %v2022
      %v2024 = vpop.f32.mrb[0].mxu0
      %2025 = vmatprep.mubr.bf16.mxu0 0
      %2026 = vmatmul.mubr.bf16.gmra.mrb[0].mxu0 %v1964
      %v2027 = vpop.f32.mrb[0].mxu0
      %v2028 = vadd.f32 0.0, %v2027
      %v2029 = vpop.f32.mrb[0].mxu0
      %v2030 = vpop.f32.mrb[0].mxu0
      %v2031 = vadd.f32 0.0, %v2030
      %v2032 = vpop.f32.mrb[0].mxu0
      %2033 = vdwg.mxu0
      %v2034 = vld [vmem:[%s322] sm:$0xff]
      %v2035 = vld [vmem:[%s322 + $0x8] sm:$0xff]
      %v2036 = vld [vmem:[%s322 + $0x10] sm:$0xff]
      %v2037 = vld [vmem:[%s322 + $0x18] sm:$0xff]
      %v2038 = vld [vmem:[%s322 + $0x20] sm:$0xff]
      %v2039 = vld [vmem:[%s322 + $0x28] sm:$0xff]
      %v2040 = vld [vmem:[%s322 + $0x30] sm:$0xff]
      %v2041 = vld [vmem:[%s322 + $0x38] sm:$0xff]
      %v2042 = vadd.f32 %v2034, %v2004
      %v2043 = vadd.f32 %v2035, %v2007
      %v2044 = vadd.f32 %v2036, %v2012
      %v2045 = vadd.f32 %v2037, %v2015
      %v2046 = vadd.f32 %v2038, %v2020
      %v2047 = vadd.f32 %v2039, %v2023
      %v2048 = vadd.f32 %v2040, %v2028
      %v2049 = vadd.f32 %v2041, %v2031
      %2050 = vst [vmem:[%s322] sm:$0xff] %v2042
      %2051 = vst [vmem:[%s322 + $0x8] sm:$0xff] %v2043
      %2052 = vst [vmem:[%s322 + $0x10] sm:$0xff] %v2044
      %2053 = vst [vmem:[%s322 + $0x18] sm:$0xff] %v2045
      %2054 = vst [vmem:[%s322 + $0x20] sm:$0xff] %v2046
      %2055 = vst [vmem:[%s322 + $0x28] sm:$0xff] %v2047
      %2056 = vst [vmem:[%s322 + $0x30] sm:$0xff] %v2048
      %2057 = vst [vmem:[%s322 + $0x38] sm:$0xff] %v2049
      %v2058 = vld [vmem:[%s322] sm:$0xff]
      %v2059 = vld [vmem:[%s322 + $0x8] sm:$0xff]
      %v2060 = vld [vmem:[%s322 + $0x10] sm:$0xff]
      %v2061 = vld [vmem:[%s322 + $0x18] sm:$0xff]
      %v2062 = vld [vmem:[%s322 + $0x20] sm:$0xff]
      %v2063 = vld [vmem:[%s322 + $0x28] sm:$0xff]
      %v2064 = vld [vmem:[%s322 + $0x30] sm:$0xff]
      %v2065 = vld [vmem:[%s322 + $0x38] sm:$0xff]
      %v2066 = vadd.f32 %v2058, %v2059
      %v2067 = vadd.f32 %v2066, %v2060
      %v2068 = vadd.f32 %v2067, %v2061
      %v2069 = vadd.f32 %v2068, %v2062
      %v2070 = vadd.f32 %v2069, %v2063
      %v2071 = vadd.f32 %v2070, %v2064
      %v2072 = vadd.f32 %v2071, %v2065
      %v2073 = vrot.slane %v2072, 4
      %v2074 = vadd.f32 %v2072, %v2073
      %v2075 = vrot.slane %v2074, 2
      %v2076 = vadd.f32 %v2074, %v2075
      %v2077 = vrot.slane %v2076, 1
      %v2078 = vadd.f32 %v2076, %v2077
      %2079 = vst [vmem:[%s328] sm:$0x1] %v2078
      %v2080 = vmul.f32 %v2058, %v2058
      %v2081 = vmul.f32 %v2059, %v2059
      %v2082 = vmul.f32 %v2060, %v2060
      %v2083 = vmul.f32 %v2061, %v2061
      %v2084 = vmul.f32 %v2062, %v2062
      %v2085 = vmul.f32 %v2063, %v2063
      %v2086 = vmul.f32 %v2064, %v2064
      %v2087 = vmul.f32 %v2065, %v2065
      %v2088 = vadd.f32 %v2080, %v2081
      %v2089 = vadd.f32 %v2088, %v2082
      %v2090 = vadd.f32 %v2089, %v2083
      %v2091 = vadd.f32 %v2090, %v2084
      %v2092 = vadd.f32 %v2091, %v2085
      %v2093 = vadd.f32 %v2092, %v2086
      %v2094 = vadd.f32 %v2093, %v2087
      %v2095 = vrot.slane %v2094, 4
      %v2096 = vadd.f32 %v2094, %v2095
      %v2097 = vrot.slane %v2096, 2
      %v2098 = vadd.f32 %v2096, %v2097
      %v2099 = vrot.slane %v2098, 1
      %v2100 = vadd.f32 %v2098, %v2099
      %2101 = vst [vmem:[%s333] sm:$0x1] %v2100
      %s2102 = sadd.s32 %s21, %s22
      %s2103 = smul.u32 8, %s2102
      %p2104 = scmp.lt.s32.totalorder %s2103, 15
      %s2105 = scalar_select %p2104, %s2103, 15
      %s2106 = smul.addr %s2105, 8
      %s2107 = scalar_lea.vmem %s3, %s2106
      %s2108 = sadd.s32 %s21, %s22
      %p2109 = scmp.lt.s32.totalorder %s2108, 1
      %s2110 = scalar_select %p2109, %s2108, 1
      %s2111 = scalar_lea.vmem %s4, %s2110
      %s2112 = sadd.s32 %s21, %s22
      %p2113 = scmp.lt.s32.totalorder %s2112, 1
      %s2114 = scalar_select %p2113, %s2112, 1
      %s2115 = scalar_lea.vmem %s5, %s2114
      // Predicated region
      $region33: #{downsample_forward.6} parent=31 // pred_check
        %p2116 = pneg %p128
      $region34: #{downsample_forward.6} parent=31 // pred_check_branch
        %2118 = sbr.rel (%p2116) target = $region36
      $region35: #{downsample_forward.6} parent=31 // pred_region
        %s2119 = sadd.s32 %s21, %s22
        %s2120 = smul.u32 8, %s2119
      $region36: #{downsample_forward.6} parent=31 // pred_fallthru
        _
      // Predicated region
      $region37: #{downsample_forward.6} parent=31 // pred_check
        %p2121 = pneg %p156
      $region38: #{downsample_forward.6} parent=31 // pred_check_branch
        %2123 = sbr.rel (%p2121) target = $region40
      $region39: #{downsample_forward.6} parent=31 // pred_region
        %s2124 = sadd.s32 %s21, %s22
      $region40: #{downsample_forward.6} parent=31 // pred_fallthru
        _
      // Predicated region
      $region41: #{downsample_forward.6} parent=31 // pred_check
        %p2125 = pneg %p184
      $region42: #{downsample_forward.6} parent=31 // pred_check_branch
        %2127 = sbr.rel (%p2125) target = $region44
      $region43: #{downsample_forward.6} parent=31 // pred_region
        %s2128 = sadd.s32 %s21, %s22
      $region44: #{downsample_forward.6} parent=31 // pred_fallthru
        _
    $region32: #{downsample_forward.6} parent=5 // pred_fallthru
      _
    %p2129 = scmp.le.s32.totalorder 2, %s12
    // Predicated region
    $region45: #{downsample_forward.6} parent=5 // pred_check
      %p2130 = pneg %p2129
    $region46: #{downsample_forward.6} parent=5 // pred_check_branch
      %2132 = sbr.rel (%p2130) target = $region48
    $region47: #{downsample_forward.6} parent=5 // pred_region
      %s2133 = ssub.s32 %s12, 2
      // Predicated region
      $region49: #{downsample_forward.6} parent=47 // pred_check
        %p2134 = pneg %p134
      $region50: #{downsample_forward.6} parent=47 // pred_check_branch
        %2136 = sbr.rel (%p2134) target = $region52
      $region51: #{downsample_forward.6} parent=47 // pred_region
        %s2137 = sadd.s32 %s23, %s24
        %s2138 = smul.u32 8, %s2137
        %p2139 = scmp.lt.s32.totalorder %s2138, 15
        %s2140 = scalar_select %p2139, %s2138, 15
        %s2141 = smul.addr %s2140, 8
        %s2142 = scalar_lea.vmem %s3, %s2141
      $region52: #{downsample_forward.6} parent=47 // pred_fallthru
        _
      // Predicated region
      $region53: #{downsample_forward.6} parent=47 // pred_check
        %p2143 = pneg %p162
      $region54: #{downsample_forward.6} parent=47 // pred_check_branch
        %2145 = sbr.rel (%p2143) target = $region56
      $region55: #{downsample_forward.6} parent=47 // pred_region
        %s2146 = sadd.s32 %s23, %s24
        %p2147 = scmp.lt.s32.totalorder %s2146, 1
        %s2148 = scalar_select %p2147, %s2146, 1
        %s2149 = scalar_lea.vmem %s4, %s2148
      $region56: #{downsample_forward.6} parent=47 // pred_fallthru
        _
      // Predicated region
      $region57: #{downsample_forward.6} parent=47 // pred_check
        %p2150 = pneg %p190
      $region58: #{downsample_forward.6} parent=47 // pred_check_branch
        %2152 = sbr.rel (%p2150) target = $region60
      $region59: #{downsample_forward.6} parent=47 // pred_region
        %s2153 = sadd.s32 %s23, %s24
        %p2154 = scmp.lt.s32.totalorder %s2153, 1
        %s2155 = scalar_select %p2154, %s2153, 1
        %s2156 = scalar_lea.vmem %s5, %s2155
      $region60: #{downsample_forward.6} parent=47 // pred_fallthru
        _
    $region48: #{downsample_forward.6} parent=5 // pred_fallthru
      _
  $region6: #{downsample_forward.6} parent=0 // loop_footer
    %s16 = sadd.s32 1, %s12
  $region7: #{downsample_forward.6} parent=0 // loop_footer_branch
    %11 = sbr.rel target = $region3
  $region8: #{downsample_forward.6} parent=0 // loop_exit
    _

// kernel: downsample_forward.8
$region0: #{downsample_forward.8}
  #allocation0 [shape = 'u32[]', space=smem, size = 0x4, offset = 0x4, fixed_abs, tag = 'smem constant byte address 0x4 - core index']
  #allocation1 [shape = 'u32[144,128]{1,0:T(1,128)}', space=vmem, size = 0x12000, scoped, tag = 'internal scratch']
  #allocation2 [shape = 'bf16[10,10,128]{2,1,0:T(8,128)(2,1)}', space=vmem, size = 0xa000, scoped, tag = 'scratch operand']
  %s0 = inlined_call_operand.vmem [shape: bf16[2,16,10,128], index: 0, kind: input, shape index: {}, may-alias: {0,1}]
  %s1 = inlined_call_operand.vmem [shape: bf16[2,16,10,128], index: 1, kind: input, shape index: {}, may-alias: {0,1}]
  %s2 = inlined_call_operand.vmem [shape: bf16[9,128,128], index: 2, kind: input, shape index: {}]
  %s3 = inlined_call_operand.vmem [shape: f32[128,128], index: 3, kind: output, shape index: {0}]
  %s4 = inlined_call_operand.vmem [shape: f32[2,1,128], index: 4, kind: output, shape index: {1}]
  %s5 = inlined_call_operand.vmem [shape: f32[2,1,128], index: 5, kind: output, shape index: {2}]
  %6 = xla_tuple %s3, %s4, %s5
  %s7 = sld [smem:[#allocation0]]
  $region61: #{downsample_forward.8} parent=0
    _
  %s9 = ssub.s32 1, %s7
  %s10 = scalar_select 0, %s9, %s7
  loop: start=0, step=1, limit=4
  $region2: #{downsample_forward.8} parent=0 // loop_pre_header
    _
  $region3: #{downsample_forward.8} parent=0 // loop_header
    %s12 = sphi 0, %s16
    %p13 = scmp.ge.s32.totalorder %s12, 4
    %s19 = sphi 0, %s31
    %s20 = sphi 0, %s27
    %s21 = sphi 0, %s19
    %s22 = sphi 0, %s20
    %s23 = sphi 0, %s21
    %s24 = sphi 0, %s22
    %s36 = sphi 0, %s38
    %s39 = sphi 0, %s36
    %s40 = sphi 0, %s39
    %s56 = sphi 0, %s40
    %s66 = sphi 0, %s68
    %s69 = sphi 0, %s66
    %s70 = sphi 0, %s69
    %s86 = sphi 0, %s70
    %s90 = sphi 0, %s90
    %s92 = sphi 0, %s90
    %s93 = sphi 0, %s92
    %s107 = sphi 0, %s93
    %s115 = sphi 0, %s117
    %s118 = sphi 0, %s115
    %s119 = sphi 0, %s118
    %s135 = sphi 0, %s119
    %s143 = sphi 0, %s145
    %s146 = sphi 0, %s143
    %s147 = sphi 0, %s146
    %s163 = sphi 0, %s147
    %s171 = sphi 0, %s173
    %s174 = sphi 0, %s171
    %s175 = sphi 0, %s174
    %s191 = sphi 0, %s175
  $region4: #{downsample_forward.8} parent=0 // loop_header_branch
    %15 = sbr.rel (%p13) target = $region8
  $region5: #{downsample_forward.8} parent=0 // loop_body
    %s17 = ssub.s32 %s12, 1
    %s18 = ssub.s32 %s12, 2
    %s25 = sadd.s32 1, %s20
    %p26 = scmp.ge.s32.totalorder %s25, 1
    %s27 = scalar_select %p26, 0, %s25
    %s28 = sadd.s32 1, %s19
    %s29 = scalar_select %p26, %s28, %s19
    %p30 = scmp.ge.s32.totalorder %s29, 2
    %s31 = scalar_select %p30, 0, %s29
    %s32 = ssub.s32 %s19, %s31
    %s33 = ssub.s32 %s20, %s27
    %s34 = sor.u32 %s32, %s33
    %p35 = scmp.eq.s32.totalorder %s34, 0
    %s37 = sadd.s32 %s36, 1
    %s38 = scalar_select %p35, %s36, %s37
    %p41 = pneg %p35
    %p42 = scmp.eq.s32.totalorder %s12, 1
    %p43 = por %p41, %p42
    %p44 = scmp.ne.s32.totalorder %s36, %s39
    %p45 = scmp.eq.s32.totalorder %s12, 0
    %p46 = por %p44, %p45
    %p47 = scmp.ne.s32.totalorder %s36, %s39
    %p48 = scmp.eq.s32.totalorder %s17, 1
    %p49 = por %p47, %p48
    %p50 = scmp.ne.s32.totalorder %s39, %s40
    %p51 = scmp.eq.s32.totalorder %s17, 0
    %p52 = por %p50, %p51
    %p53 = scmp.ne.s32.totalorder %s39, %s40
    %p54 = scmp.eq.s32.totalorder %s18, 1
    %p55 = por %p53, %p54
    %p57 = scmp.ne.s32.totalorder %s40, %s56
    %p58 = scmp.eq.s32.totalorder %s18, 0
    %p59 = por %p57, %p58
    %s60 = sadd.s32 %s20, 1
    %s61 = sadd.s32 %s27, 1
    %s62 = ssub.s32 %s19, %s31
    %s63 = ssub.s32 %s60, %s61
    %s64 = sor.u32 %s62, %s63
    %p65 = scmp.eq.s32.totalorder %s64, 0
    %s67 = sadd.s32 %s66, 1
    %s68 = scalar_select %p65, %s66, %s67
    %p71 = pneg %p65
    %p72 = scmp.eq.s32.totalorder %s12, 1
    %p73 = por %p71, %p72
    %p74 = scmp.ne.s32.totalorder %s66, %s69
    %p75 = scmp.eq.s32.totalorder %s12, 0
    %p76 = por %p74, %p75
    %p77 = scmp.ne.s32.totalorder %s66, %s69
    %p78 = scmp.eq.s32.totalorder %s17, 1
    %p79 = por %p77, %p78
    %p80 = scmp.ne.s32.totalorder %s69, %s70
    %p81 = scmp.eq.s32.totalorder %s17, 0
    %p82 = por %p80, %p81
    %p83 = scmp.ne.s32.totalorder %s69, %s70
    %p84 = scmp.eq.s32.totalorder %s18, 1
    %p85 = por %p83, %p84
    %p87 = scmp.ne.s32.totalorder %s70, %s86
    %p88 = scmp.eq.s32.totalorder %s18, 0
    %p89 = por %p87, %p88
    %s91 = sadd.s32 %s90, 1
    %p94 = scmp.eq.s32.totalorder %s12, 1
    %p95 = scmp.ne.s32.totalorder %s90, %s92
    %p96 = scmp.eq.s32.totalorder %s12, 0
    %p97 = por %p95, %p96
    %p98 = scmp.ne.s32.totalorder %s90, %s92
    %p99 = scmp.eq.s32.totalorder %s17, 1
    %p100 = por %p98, %p99
    %p101 = scmp.ne.s32.totalorder %s92, %s93
    %p102 = scmp.eq.s32.totalorder %s17, 0
    %p103 = por %p101, %p102
    %p104 = scmp.ne.s32.totalorder %s92, %s93
    %p105 = scmp.eq.s32.totalorder %s18, 1
    %p106 = por %p104, %p105
    %p108 = scmp.ne.s32.totalorder %s93, %s107
    %p109 = scmp.eq.s32.totalorder %s18, 0
    %p110 = por %p108, %p109
    %s111 = sadd.s32 %s19, %s20
    %s112 = sadd.s32 %s31, %s27
    %s113 = ssub.s32 %s111, %s112
    %p114 = scmp.eq.s32.totalorder %s113, 0
    %s116 = sadd.s32 %s115, 1
    %s117 = scalar_select %p114, %s115, %s116
    %p120 = pneg %p114
    %p121 = scmp.eq.s32.totalorder %s12, 1
    %p122 = por %p120, %p121
    %p123 = scmp.ne.s32.totalorder %s115, %s118
    %p124 = scmp.eq.s32.totalorder %s12, 0
    %p125 = por %p123, %p124
    %p126 = scmp.ne.s32.totalorder %s115, %s118
    %p127 = scmp.eq.s32.totalorder %s17, 1
    %p128 = por %p126, %p127
    %p129 = scmp.ne.s32.totalorder %s118, %s119
    %p130 = scmp.eq.s32.totalorder %s17, 0
    %p131 = por %p129, %p130
    %p132 = scmp.ne.s32.totalorder %s118, %s119
    %p133 = scmp.eq.s32.totalorder %s18, 1
    %p134 = por %p132, %p133
    %p136 = scmp.ne.s32.totalorder %s119, %s135
    %p137 = scmp.eq.s32.totalorder %s18, 0
    %p138 = por %p136, %p137
    %s139 = sadd.s32 %s19, %s20
    %s140 = sadd.s32 %s31, %s27
    %s141 = ssub.s32 %s139, %s140
    %p142 = scmp.eq.s32.totalorder %s141, 0
    %s144 = sadd.s32 %s143, 1
    %s145 = scalar_select %p142, %s143, %s144
    %p148 = pneg %p142
    %p149 = scmp.eq.s32.totalorder %s12, 1
    %p150 = por %p148, %p149
    %p151 = scmp.ne.s32.totalorder %s143, %s146
    %p152 = scmp.eq.s32.totalorder %s12, 0
    %p153 = por %p151, %p152
    %p154 = scmp.ne.s32.totalorder %s143, %s146
    %p155 = scmp.eq.s32.totalorder %s17, 1
    %p156 = por %p154, %p155
    %p157 = scmp.ne.s32.totalorder %s146, %s147
    %p158 = scmp.eq.s32.totalorder %s17, 0
    %p159 = por %p157, %p158
    %p160 = scmp.ne.s32.totalorder %s146, %s147
    %p161 = scmp.eq.s32.totalorder %s18, 1
    %p162 = por %p160, %p161
    %p164 = scmp.ne.s32.totalorder %s147, %s163
    %p165 = scmp.eq.s32.totalorder %s18, 0
    %p166 = por %p164, %p165
    %s167 = sadd.s32 %s19, %s20
    %s168 = sadd.s32 %s31, %s27
    %s169 = ssub.s32 %s167, %s168
    %p170 = scmp.eq.s32.totalorder %s169, 0
    %s172 = sadd.s32 %s171, 1
    %s173 = scalar_select %p170, %s171, %s172
    %p176 = pneg %p170
    %p177 = scmp.eq.s32.totalorder %s12, 1
    %p178 = por %p176, %p177
    %p179 = scmp.ne.s32.totalorder %s171, %s174
    %p180 = scmp.eq.s32.totalorder %s12, 0
    %p181 = por %p179, %p180
    %p182 = scmp.ne.s32.totalorder %s171, %s174
    %p183 = scmp.eq.s32.totalorder %s17, 1
    %p184 = por %p182, %p183
    %p185 = scmp.ne.s32.totalorder %s174, %s175
    %p186 = scmp.eq.s32.totalorder %s17, 0
    %p187 = por %p185, %p186
    %p188 = scmp.ne.s32.totalorder %s174, %s175
    %p189 = scmp.eq.s32.totalorder %s18, 1
    %p190 = por %p188, %p189
    %p192 = scmp.ne.s32.totalorder %s175, %s191
    %p193 = scmp.eq.s32.totalorder %s18, 0
    %p194 = por %p192, %p193
    %p195 = scmp.le.s32.totalorder 1, %s12
    %p196 = scmp.lt.s32.totalorder %s12, 3
    %p197 = pnand %p195, %p196
    %p198 = pneg %p197
    // Predicated region
    $region9: #{downsample_forward.8} parent=5 // pred_check
      _
    $region10: #{downsample_forward.8} parent=5 // pred_check_branch
      %200 = sbr.rel (%p197) target = $region12
    $region11: #{downsample_forward.8} parent=5 // pred_region
      %s201 = ssub.s32 %s12, 1
      // Predicated region
      $region13: #{downsample_forward.8} parent=11 // pred_check
        %p202 = pneg %p103
      $region14: #{downsample_forward.8} parent=11 // pred_check_branch
        %204 = sbr.rel (%p202) target = $region16
      $region15: #{downsample_forward.8} parent=11 // pred_region
        _
      $region16: #{downsample_forward.8} parent=11 // pred_fallthru
        _
    $region12: #{downsample_forward.8} parent=5 // pred_fallthru
      _
    %p205 = scmp.lt.s32.totalorder %s12, 2
    // Predicated region
    $region17: #{downsample_forward.8} parent=5 // pred_check
      %p206 = pneg %p205
    $region18: #{downsample_forward.8} parent=5 // pred_check_branch
      %208 = sbr.rel (%p206) target = $region20
    $region19: #{downsample_forward.8} parent=5 // pred_region
      // Predicated region
      $region21: #{downsample_forward.8} parent=19 // pred_check
        %p209 = pneg %p46
      $region22: #{downsample_forward.8} parent=19 // pred_check_branch
        %211 = sbr.rel (%p209) target = $region24
      $region23: #{downsample_forward.8} parent=19 // pred_region
        %s212 = smul.u32 8, %s20
        %p213 = scmp.lt.s32.totalorder %s19, 1
        %s214 = scalar_select %p213, %s19, 1
        %p215 = scmp.lt.s32.totalorder %s212, 15
        %s216 = scalar_select %p215, %s212, 15
        %s217 = smul.addr %s216, 2
        %s218 = smul.addr %s214, 32
        %s219 = sadd.s32 %s217, %s218
        %s220 = smul.addr %s219, 4
        %s221 = scalar_lea.vmem %s0, %s220
        %s222 = smul.u32 8, %s20
      $region24: #{downsample_forward.8} parent=19 // pred_fallthru
        _
      // Predicated region
      $region25: #{downsample_forward.8} parent=19 // pred_check
        %p223 = pneg %p76
      $region26: #{downsample_forward.8} parent=19 // pred_check_branch
        %225 = sbr.rel (%p223) target = $region28
      $region27: #{downsample_forward.8} parent=19 // pred_region
        %s226 = sadd.s32 %s20, 1
        %s227 = smul.u32 8, %s226
        %p228 = scmp.lt.s32.totalorder %s19, 1
        %s229 = scalar_select %p228, %s19, 1
        %p230 = scmp.lt.s32.totalorder %s227, 15
        %s231 = scalar_select %p230, %s227, 15
        %s232 = smul.addr %s231, 2
        %s233 = smul.addr %s229, 32
        %s234 = sadd.s32 %s232, %s233
        %s235 = smul.addr %s234, 4
        %s236 = scalar_lea.vmem %s1, %s235
        %s237 = sadd.s32 %s20, 1
        %s238 = smul.u32 8, %s237
      $region28: #{downsample_forward.8} parent=19 // pred_fallthru
        _
    $region20: #{downsample_forward.8} parent=5 // pred_fallthru
      _
    %p239 = scmp.le.s32.totalorder 1, %s12
    %p240 = scmp.lt.s32.totalorder %s12, 3
    %p241 = pnand %p239, %p240
    %p242 = pneg %p241
    // Predicated region
    $region29: #{downsample_forward.8} parent=5 // pred_check
      _
    $region30: #{downsample_forward.8} parent=5 // pred_check_branch
      %244 = sbr.rel (%p241) target = $region32
    $region31: #{downsample_forward.8} parent=5 // pred_region
      %s245 = ssub.s32 %s12, 1
      %s246 = smul.u32 8, %s22
      %p247 = scmp.lt.s32.totalorder %s21, 1
      %s248 = scalar_select %p247, %s21, 1
      %p249 = scmp.lt.s32.totalorder %s246, 15
      %s250 = scalar_select %p249, %s246, 15
      %s251 = smul.addr %s250, 2
      %s252 = smul.addr %s248, 32
      %s253 = sadd.s32 %s251, %s252
      %s254 = smul.addr %s253, 4
      %s255 = scalar_lea.vmem %s0, %s254
      %p256 = pneg %p52
      %p257 = pneg %p49
      %s258 = sadd.s32 %s22, 1
      %s259 = smul.u32 8, %s258
      %p260 = scmp.lt.s32.totalorder %s21, 1
      %s261 = scalar_select %p260, %s21, 1
      %p262 = scmp.lt.s32.totalorder %s259, 15
      %s263 = scalar_select %p262, %s259, 15
      %s264 = smul.addr %s263, 2
      %s265 = smul.addr %s261, 32
      %s266 = sadd.s32 %s264, %s265
      %s267 = smul.addr %s266, 4
      %s268 = scalar_lea.vmem %s1, %s267
      %p269 = pneg %p82
      %p270 = pneg %p79
      %p271 = pneg %p103
      %p272 = pneg %p100
      %p273 = pneg %p131
      %p274 = pneg %p128
      %s275 = sadd.s32 %s21, %s22
      %s276 = smul.u32 8, %s275
      %p277 = scmp.lt.s32.totalorder %s276, 15
      %s278 = scalar_select %p277, %s276, 15
      %s279 = smul.addr %s278, 8
      %s280 = scalar_lea.vmem %s3, %s279
      %p281 = pneg %p159
      %p282 = pneg %p156
      %s283 = sadd.s32 %s21, %s22
      %p284 = scmp.lt.s32.totalorder %s283, 1
      %s285 = scalar_select %p284, %s283, 1
      %s286 = scalar_lea.vmem %s4, %s285
      %p287 = pneg %p187
      %p288 = pneg %p184
      %s289 = sadd.s32 %s21, %s22
      %p290 = scmp.lt.s32.totalorder %s289, 1
      %s291 = scalar_select %p290, %s289, 1
      %s292 = scalar_lea.vmem %s5, %s291
      %s293 = smul.u32 8, %s22
      %p294 = scmp.lt.s32.totalorder %s21, 1
      %s295 = scalar_select %p294, %s21, 1
      %p296 = scmp.lt.s32.totalorder %s293, 15
      %s297 = scalar_select %p296, %s293, 15
      %s298 = smul.addr %s297, 2
      %s299 = smul.addr %s295, 32
      %s300 = sadd.s32 %s298, %s299
      %s301 = smul.addr %s300, 4
      %s302 = scalar_lea.vmem %s0, %s301
      %s303 = smul.u32 8, %s22
      %s304 = sadd.s32 %s22, 1
      %s305 = smul.u32 8, %s304
      %p306 = scmp.lt.s32.totalorder %s21, 1
      %s307 = scalar_select %p306, %s21, 1
      %p308 = scmp.lt.s32.totalorder %s305, 15
      %s309 = scalar_select %p308, %s305, 15
      %s310 = smul.addr %s309, 2
      %s311 = smul.addr %s307, 32
      %s312 = sadd.s32 %s310, %s311
      %s313 = smul.addr %s312, 4
      %s314 = scalar_lea.vmem %s1, %s313
      %s315 = sadd.s32 %s22, 1
      %s316 = smul.u32 8, %s315
      %s317 = sadd.s32 %s21, %s22
      %s318 = smul.u32 8, %s317
      %p319 = scmp.lt.s32.totalorder %s318, 15
      %s320 = scalar_select %p319, %s318, 15
      %s321 = smul.addr %s320, 8
      %s322 = scalar_lea.vmem %s3, %s321
      %s323 = sadd.s32 %s21, %s22
      %s324 = smul.u32 8, %s323
      %s325 = sadd.s32 %s21, %s22
      %p326 = scmp.lt.s32.totalorder %s325, 1
      %s327 = scalar_select %p326, %s325, 1
      %s328 = scalar_lea.vmem %s4, %s327
      %s329 = sadd.s32 %s21, %s22
      %s330 = sadd.s32 %s21, %s22
      %p331 = scmp.lt.s32.totalorder %s330, 1
      %s332 = scalar_select %p331, %s330, 1
      %s333 = scalar_lea.vmem %s5, %s332
      %s334 = sadd.s32 %s21, %s22
      %v336 = vld [vmem:[%s302] sm:$0xf]
      %v337 = vld [vmem:[%s302 + $0x4] sm:$0x1]
      %v338 = vld [vmem:[%s302 + $0x8] sm:$0xf]
      %v339 = vld [vmem:[%s302 + $0xc] sm:$0x1]
      %v340 = vld [vmem:[%s302 + $0x10] sm:$0xf]
      %v341 = vld [vmem:[%s302 + $0x14] sm:$0x1]
      %v342 = vld [vmem:[%s302 + $0x18] sm:$0xf]
      %v343 = vld [vmem:[%s302 + $0x1c] sm:$0x1]
      %v344 = vld [vmem:[%s302 + $0x20] sm:$0xf]
      %v345 = vld [vmem:[%s302 + $0x24] sm:$0x1]
      %v346 = vld [vmem:[%s302 + $0x28] sm:$0xf]
      %v347 = vld [vmem:[%s302 + $0x2c] sm:$0x1]
      %v348 = vld [vmem:[%s302 + $0x30] sm:$0xf]
      %v349 = vld [vmem:[%s302 + $0x34] sm:$0x1]
      %v350 = vld [vmem:[%s302 + $0x38] sm:$0xf]
      %v351 = vld [vmem:[%s302 + $0x3c] sm:$0x1]
      %352 = vst [vmem:[#allocation2] sm:$0xf] %v336
      %353 = vst [vmem:[#allocation2 + $0x4] sm:$0x1] %v337
      %354 = vst [vmem:[#allocation2 + $0x8] sm:$0xf] %v338
      %355 = vst [vmem:[#allocation2 + $0xc] sm:$0x1] %v339
      %356 = vst [vmem:[#allocation2 + $0x10] sm:$0xf] %v340
      %357 = vst [vmem:[#allocation2 + $0x14] sm:$0x1] %v341
      %358 = vst [vmem:[#allocation2 + $0x18] sm:$0xf] %v342
      %359 = vst [vmem:[#allocation2 + $0x1c] sm:$0x1] %v343
      %360 = vst [vmem:[#allocation2 + $0x20] sm:$0xf] %v344
      %361 = vst [vmem:[#allocation2 + $0x24] sm:$0x1] %v345
      %362 = vst [vmem:[#allocation2 + $0x28] sm:$0xf] %v346
      %363 = vst [vmem:[#allocation2 + $0x2c] sm:$0x1] %v347
      %364 = vst [vmem:[#allocation2 + $0x30] sm:$0xf] %v348
      %365 = vst [vmem:[#allocation2 + $0x34] sm:$0x1] %v349
      %366 = vst [vmem:[#allocation2 + $0x38] sm:$0xf] %v350
      %367 = vst [vmem:[#allocation2 + $0x3c] sm:$0x1] %v351
      %v368 = vld [vmem:[%s314] sm:$0xf]
      %v369 = vld [vmem:[%s314 + $0x4] sm:$0x1]
      %v370 = vld [vmem:[%s314 + $0x8] sm:$0xf]
      %v371 = vld [vmem:[%s314 + $0xc] sm:$0x1]
      %s372 = scalar_lea.vmem [#allocation2], 64
      %373 = vst [vmem:[%s372] sm:$0xf] %v368
      %374 = vst [vmem:[%s372 + $0x4] sm:$0x1] %v369
      %375 = vst [vmem:[%s372 + $0x8] sm:$0xf] %v370
      %376 = vst [vmem:[%s372 + $0xc] sm:$0x1] %v371
      %v377 = vld [vmem:[#allocation2] sm:$0xf]
      %v378 = vld [vmem:[#allocation2 + $0x8] sm:$0xf]
      %v379 = vld [vmem:[#allocation2 + $0x10] sm:$0xf]
      %v380 = vld [vmem:[#allocation2 + $0x18] sm:$0xf]
      %v381 = vld [vmem:[#allocation2 + $0x20] sm:$0xf]
      %v382 = vld [vmem:[#allocation2 + $0x28] sm:$0xf]
      %v383 = vld [vmem:[#allocation2 + $0x30] sm:$0xf]
      %v384 = vld [vmem:[#allocation2 + $0x38] sm:$0xf]
      %v385 = vld [vmem:[%s2] sm:$0xf]
      %v386 = vld [vmem:[%s2 + $0x4] sm:$0xf]
      %v387 = vld [vmem:[%s2 + $0x8] sm:$0xf]
      %v388 = vld [vmem:[%s2 + $0xc] sm:$0xf]
      %v389 = vld [vmem:[%s2 + $0x10] sm:$0xf]
      %v390 = vld [vmem:[%s2 + $0x14] sm:$0xf]
      %v391 = vld [vmem:[%s2 + $0x18] sm:$0xf]
      %v392 = vld [vmem:[%s2 + $0x1c] sm:$0xf]
      %v393 = vld [vmem:[%s2 + $0x20] sm:$0xf]
      %v394 = vld [vmem:[%s2 + $0x24] sm:$0xf]
      %v395 = vld [vmem:[%s2 + $0x28] sm:$0xf]
      %v396 = vld [vmem:[%s2 + $0x2c] sm:$0xf]
      %v397 = vld [vmem:[%s2 + $0x30] sm:$0xf]
      %v398 = vld [vmem:[%s2 + $0x34] sm:$0xf]
      %v399 = vld [vmem:[%s2 + $0x38] sm:$0xf]
      %v400 = vld [vmem:[%s2 + $0x3c] sm:$0xf]
      %v409 = vunpack.c.l.b16 %v377
      %v410 = vunpack.c.l.b16 %v378
      %v411 = vunpack.c.l.b16 %v379
      %v412 = vunpack.c.l.b16 %v380
      %v413 = vunpack.c.l.b16 %v381
      %v414 = vunpack.c.l.b16 %v382
      %v415 = vunpack.c.l.b16 %v383
      %v416 = vunpack.c.l.b16 %v384
      %v417 = vpack.c.b16 %v410, %v409
      %v418 = vpack.c.b16 %v412, %v411
      %v419 = vpack.c.b16 %v414, %v413
      %v420 = vpack.c.b16 %v416, %v415
      %v441 = vunpack.c.l.b16 %v385
      %v442 = vunpack.c.l.b16 %v386
      %v443 = vunpack.c.l.b16 %v387
      %v444 = vunpack.c.l.b16 %v388
      %v445 = vunpack.c.l.b16 %v389
      %v446 = vunpack.c.l.b16 %v390
      %v447 = vunpack.c.l.b16 %v391
      %v448 = vunpack.c.l.b16 %v392
      %v449 = vunpack.c.l.b16 %v393
      %v450 = vunpack.c.l.b16 %v394
      %v451 = vunpack.c.l.b16 %v395
      %v452 = vunpack.c.l.b16 %v396
      %v453 = vunpack.c.l.b16 %v397
      %v454 = vunpack.c.l.b16 %v398
      %v455 = vunpack.c.l.b16 %v399
      %v456 = vunpack.c.l.b16 %v400
      %v457 = vpack.c.b16 %v442, %v441
      %v458 = vpack.c.b16 %v444, %v443
      %v459 = vpack.c.b16 %v446, %v445
      %v460 = vpack.c.b16 %v448, %v447
      %v461 = vpack.c.b16 %v450, %v449
      %v462 = vpack.c.b16 %v452, %v451
      %v463 = vpack.c.b16 %v454, %v453
      %v464 = vpack.c.b16 %v456, %v455
      %473 = vmatprep.subr.bf16.mxu0 0
      %474 = vmatpush1.bf16.msra.mxu0 %v457
      %475 = vmatprep.subr.bf16.mxu0 0
      %476 = vmatpush1.bf16.msra.mxu0 %v458
      %477 = vmatprep.subr.bf16.mxu0 0
      %478 = vmatpush1.bf16.msra.mxu0 %v459
      %479 = vmatprep.subr.bf16.mxu0 0
      %480 = vmatpush1.bf16.msra.mxu0 %v460
      %481 = vmatprep.subr.bf16.mxu0 0
      %482 = vmatpush1.bf16.msra.mxu0 %v461
      %483 = vmatprep.subr.bf16.mxu0 0
      %484 = vmatpush1.bf16.msra.mxu0 %v462
      %485 = vmatprep.subr.bf16.mxu0 0
      %486 = vmatpush1.bf16.msra.mxu0 %v463
      %487 = vmatprep.subr.bf16.mxu0 0
      %488 = vmatpush1.bf16.msra.mxu0 %v464
      %489 = vmatprep.subr.bf16.mxu0 0
      %490 = vmatpush1.bf16.msra.mxu0 0
      %491 = vmatprep.subr.bf16.mxu0 0
      %492 = vmatpush1.bf16.msra.mxu0 0
      %493 = vmatprep.subr.bf16.mxu0 0
      %494 = vmatpush1.bf16.msra.mxu0 0
      %495 = vmatprep.subr.bf16.mxu0 0
      %496 = vmatpush1.bf16.msra.mxu0 0
      %497 = vmatprep.subr.bf16.mxu0 0
      %498 = vmatpush1.bf16.msra.mxu0 0
      %499 = vmatprep.subr.bf16.mxu0 0
      %500 = vmatpush1.bf16.msra.mxu0 0
      %501 = vmatprep.subr.bf16.mxu0 0
      %502 = vmatpush1.bf16.msra.mxu0 0
      %503 = vmatprep.subr.bf16.mxu0 0
      %504 = vmatpush1.bf16.msra.mxu0 0
      %505 = vmatprep.mubr.bf16.mxu0 0
      %506 = vmatmul.mubr.bf16.gmra.mrb[0].mxu0 %v417
      %v507 = vpop.f32.mrb[0].mxu0
      %v508 = vadd.f32 0.0, %v507
      %v509 = vpop.f32.mrb[0].mxu0
      %v510 = vpop.f32.mrb[0].mxu0
      %v511 = vadd.f32 0.0, %v510
      %v512 = vpop.f32.mrb[0].mxu0
      %513 = vmatprep.mubr.bf16.mxu0 0
      %514 = vmatmul.mubr.bf16.gmra.mrb[0].mxu0 %v418
      %v515 = vpop.f32.mrb[0].mxu0
      %v516 = vadd.f32 0.0, %v515
      %v517 = vpop.f32.mrb[0].mxu0
      %v518 = vpop.f32.mrb[0].mxu0
      %v519 = vadd.f32 0.0, %v518
      %v520 = vpop.f32.mrb[0].mxu0
      %521 = vmatprep.mubr.bf16.mxu0 0
      %522 = vmatmul.mubr.bf16.gmra.mrb[0].mxu0 %v419
      %v523 = vpop.f32.mrb[0].mxu0
      %v524 = vadd.f32 0.0, %v523
      %v525 = vpop.f32.mrb[0].mxu0
      %v526 = vpop.f32.mrb[0].mxu0
      %v527 = vadd.f32 0.0, %v526
      %v528 = vpop.f32.mrb[0].mxu0
      %529 = vmatprep.mubr.bf16.mxu0 0
      %530 = vmatmul.mubr.bf16.gmra.mrb[0].mxu0 %v420
      %v531 = vpop.f32.mrb[0].mxu0
      %v532 = vadd.f32 0.0, %v531
      %v533 = vpop.f32.mrb[0].mxu0
      %v534 = vpop.f32.mrb[0].mxu0
      %v535 = vadd.f32 0.0, %v534
      %v536 = vpop.f32.mrb[0].mxu0
      %537 = vdwg.mxu0
      %538 = vst [vmem:[%s322] sm:$0xff] %v508
      %539 = vst [vmem:[%s322 + $0x8] sm:$0xff] %v511
      %540 = vst [vmem:[%s322 + $0x10] sm:$0xff] %v516
      %541 = vst [vmem:[%s322 + $0x18] sm:$0xff] %v519
      %542 = vst [vmem:[%s322 + $0x20] sm:$0xff] %v524
      %543 = vst [vmem:[%s322 + $0x28] sm:$0xff] %v527
      %544 = vst [vmem:[%s322 + $0x30] sm:$0xff] %v532
      %545 = vst [vmem:[%s322 + $0x38] sm:$0xff] %v535
      %v546 = vld [vmem:[#allocation2] sm:$0xf]
      %v547 = vld [vmem:[#allocation2 + $0x4] sm:$0x1]
      %v548 = vld [vmem:[#allocation2 + $0x8] sm:$0xf]
      %v549 = vld [vmem:[#allocation2 + $0xc] sm:$0x1]
      %v550 = vld [vmem:[#allocation2 + $0x10] sm:$0xf]
      %v551 = vld [vmem:[#allocation2 + $0x14] sm:$0x1]
      %v552 = vld [vmem:[#allocation2 + $0x18] sm:$0xf]
      %v553 = vld [vmem:[#allocation2 + $0x1c] sm:$0x1]
      %v554 = vld [vmem:[#allocation2 + $0x20] sm:$0xf]
      %v555 = vld [vmem:[#allocation2 + $0x24] sm:$0x1]
      %v556 = vld [vmem:[#allocation2 + $0x28] sm:$0xf]
      %v557 = vld [vmem:[#allocation2 + $0x2c] sm:$0x1]
      %v558 = vld [vmem:[#allocation2 + $0x30] sm:$0xf]
      %v559 = vld [vmem:[#allocation2 + $0x34] sm:$0x1]
      %v560 = vld [vmem:[#allocation2 + $0x38] sm:$0xf]
      %v561 = vld [vmem:[#allocation2 + $0x3c] sm:$0x1]
      %vm562 = vsmask.f32 3328
      %vm563 = vsmask.f32 7440
      %vm564 = vmor %vm562, %vm563
      %v566 = vshrl.u32 %v546, 16
      %v568 = vrot.slane %v566, 4
      %v569 = vshll.u32 %v546, 16
      %v571 = vrot.slane %v569, 5
      %v572 = vor.u32 %v568, %v571
      %v573 = vrot.slane %v572, 4
      %v575 = vshll.u32 %v547, 16
      %v577 = vrot.slane %v575, 5
      %v578 = vsel %vm564, %v573, %v577
      %v580 = vshrl.u32 %v548, 16
      %v582 = vrot.slane %v580, 4
      %v583 = vshll.u32 %v548, 16
      %v585 = vrot.slane %v583, 5
      %v586 = vor.u32 %v582, %v585
      %v587 = vrot.slane %v586, 4
      %v589 = vshll.u32 %v549, 16
      %v591 = vrot.slane %v589, 5
      %v592 = vsel %vm564, %v587, %v591
      %v594 = vshrl.u32 %v550, 16
      %v596 = vrot.slane %v594, 4
      %v597 = vshll.u32 %v550, 16
      %v599 = vrot.slane %v597, 5
      %v600 = vor.u32 %v596, %v599
      %v601 = vrot.slane %v600, 4
      %v603 = vshll.u32 %v551, 16
      %v605 = vrot.slane %v603, 5
      %v606 = vsel %vm564, %v601, %v605
      %v608 = vshrl.u32 %v552, 16
      %v610 = vrot.slane %v608, 4
      %v611 = vshll.u32 %v552, 16
      %v613 = vrot.slane %v611, 5
      %v614 = vor.u32 %v610, %v613
      %v615 = vrot.slane %v614, 4
      %v617 = vshll.u32 %v553, 16
      %v619 = vrot.slane %v617, 5
      %v620 = vsel %vm564, %v615, %v619
      %v622 = vshrl.u32 %v554, 16
      %v624 = vrot.slane %v622, 4
      %v625 = vshll.u32 %v554, 16
      %v627 = vrot.slane %v625, 5
      %v628 = vor.u32 %v624, %v627
      %v629 = vrot.slane %v628, 4
      %v631 = vshll.u32 %v555, 16
      %v633 = vrot.slane %v631, 5
      %v634 = vsel %vm564, %v629, %v633
      %v636 = vshrl.u32 %v556, 16
      %v638 = vrot.slane %v636, 4
      %v639 = vshll.u32 %v556, 16
      %v641 = vrot.slane %v639, 5
      %v642 = vor.u32 %v638, %v641
      %v643 = vrot.slane %v642, 4
      %v645 = vshll.u32 %v557, 16
      %v647 = vrot.slane %v645, 5
      %v648 = vsel %vm564, %v643, %v647
      %v650 = vshrl.u32 %v558, 16
      %v652 = vrot.slane %v650, 4
      %v653 = vshll.u32 %v558, 16
      %v655 = vrot.slane %v653, 5
      %v656 = vor.u32 %v652, %v655
      %v657 = vrot.slane %v656, 4
      %v659 = vshll.u32 %v559, 16
      %v661 = vrot.slane %v659, 5
      %v662 = vsel %vm564, %v657, %v661
      %v664 = vshrl.u32 %v560, 16
      %v666 = vrot.slane %v664, 4
      %v667 = vshll.u32 %v560, 16
      %v669 = vrot.slane %v667, 5
      %v670 = vor.u32 %v666, %v669
      %v671 = vrot.slane %v670, 4
      %v673 = vshll.u32 %v561, 16
      %v675 = vrot.slane %v673, 5
      %v676 = vsel %vm564, %v671, %v675
      %s677 = scalar_lea.vmem %s2, 64
      %v678 = vld [vmem:[%s677] sm:$0xf]
      %v679 = vld [vmem:[%s677 + $0x4] sm:$0xf]
      %v680 = vld [vmem:[%s677 + $0x8] sm:$0xf]
      %v681 = vld [vmem:[%s677 + $0xc] sm:$0xf]
      %v682 = vld [vmem:[%s677 + $0x10] sm:$0xf]
      %v683 = vld [vmem:[%s677 + $0x14] sm:$0xf]
      %v684 = vld [vmem:[%s677 + $0x18] sm:$0xf]
      %v685 = vld [vmem:[%s677 + $0x1c] sm:$0xf]
      %v686 = vld [vmem:[%s677 + $0x20] sm:$0xf]
      %v687 = vld [vmem:[%s677 + $0x24] sm:$0xf]
      %v688 = vld [vmem:[%s677 + $0x28] sm:$0xf]
      %v689 = vld [vmem:[%s677 + $0x2c] sm:$0xf]
      %v690 = vld [vmem:[%s677 + $0x30] sm:$0xf]
      %v691 = vld [vmem:[%s677 + $0x34] sm:$0xf]
      %v692 = vld [vmem:[%s677 + $0x38] sm:$0xf]
      %v693 = vld [vmem:[%s677 + $0x3c] sm:$0xf]
      %v694 = vunpack.c.l.b16 %v578
      %v695 = vunpack.c.l.b16 %v592
      %v696 = vunpack.c.l.b16 %v606
      %v697 = vunpack.c.l.b16 %v620
      %v698 = vunpack.c.l.b16 %v634
      %v699 = vunpack.c.l.b16 %v648
      %v700 = vunpack.c.l.b16 %v662
      %v701 = vunpack.c.l.b16 %v676
      %v702 = vpack.c.b16 %v695, %v694
      %v703 = vpack.c.b16 %v697, %v696
      %v704 = vpack.c.b16 %v699, %v698
      %v705 = vpack.c.b16 %v701, %v700
      %v726 = vunpack.c.l.b16 %v678
      %v727 = vunpack.c.l.b16 %v679
      %v728 = vunpack.c.l.b16 %v680
      %v729 = vunpack.c.l.b16 %v681
      %v730 = vunpack.c.l.b16 %v682
      %v731 = vunpack.c.l.b16 %v683
      %v732 = vunpack.c.l.b16 %v684
      %v733 = vunpack.c.l.b16 %v685
      %v734 = vunpack.c.l.b16 %v686
      %v735 = vunpack.c.l.b16 %v687
      %v736 = vunpack.c.l.b16 %v688
      %v737 = vunpack.c.l.b16 %v689
      %v738 = vunpack.c.l.b16 %v690
      %v739 = vunpack.c.l.b16 %v691
      %v740 = vunpack.c.l.b16 %v692
      %v741 = vunpack.c.l.b16 %v693
      %v742 = vpack.c.b16 %v727, %v726
      %v743 = vpack.c.b16 %v729, %v728
      %v744 = vpack.c.b16 %v731, %v730
      %v745 = vpack.c.b16 %v733, %v732
      %v746 = vpack.c.b16 %v735, %v734
      %v747 = vpack.c.b16 %v737, %v736
      %v748 = vpack.c.b16 %v739, %v738
      %v749 = vpack.c.b16 %v741, %v740
      %758 = vmatprep.subr.bf16.mxu0 0
      %759 = vmatpush1.bf16.msra.mxu0 %v742
      %760 = vmatprep.subr.bf16.mxu0 0
      %761 = vmatpush1.bf16.msra.mxu0 %v743
      %762 = vmatprep.subr.bf16.mxu0 0
      %763 = vmatpush1.bf16.msra.mxu0 %v744
      %764 = vmatprep.subr.bf16.mxu0 0
      %765 = vmatpush1.bf16.msra.mxu0 %v745
      %766 = vmatprep.subr.bf16.mxu0 0
      %767 = vmatpush1.bf16.msra.mxu0 %v746
      %768 = vmatprep.subr.bf16.mxu0 0
      %769 = vmatpush1.bf16.msra.mxu0 %v747
      %770 = vmatprep.subr.bf16.mxu0 0
      %771 = vmatpush1.bf16.msra.mxu0 %v748
      %772 = vmatprep.subr.bf16.mxu0 0
      %773 = vmatpush1.bf16.msra.mxu0 %v749
      %774 = vmatprep.subr.bf16.mxu0 0
      %775 = vmatpush1.bf16.msra.mxu0 0
      %776 = vmatprep.subr.bf16.mxu0 0
      %777 = vmatpush1.bf16.msra.mxu0 0
      %778 = vmatprep.subr.bf16.mxu0 0
      %779 = vmatpush1.bf16.msra.mxu0 0
      %780 = vmatprep.subr.bf16.mxu0 0
      %781 = vmatpush1.bf16.msra.mxu0 0
      %782 = vmatprep.subr.bf16.mxu0 0
      %783 = vmatpush1.bf16.msra.mxu0 0
      %784 = vmatprep.subr.bf16.mxu0 0
      %785 = vmatpush1.bf16.msra.mxu0 0
      %786 = vmatprep.subr.bf16.mxu0 0
      %787 = vmatpush1.bf16.msra.mxu0 0
      %788 = vmatprep.subr.bf16.mxu0 0
      %789 = vmatpush1.bf16.msra.mxu0 0
      %790 = vmatprep.mubr.bf16.mxu0 0
      %791 = vmatmul.mubr.bf16.gmra.mrb[0].mxu0 %v702
      %v792 = vpop.f32.mrb[0].mxu0
      %v793 = vadd.f32 0.0, %v792
      %v794 = vpop.f32.mrb[0].mxu0
      %v795 = vpop.f32.mrb[0].mxu0
      %v796 = vadd.f32 0.0, %v795
      %v797 = vpop.f32.mrb[0].mxu0
      %798 = vmatprep.mubr.bf16.mxu0 0
      %799 = vmatmul.mubr.bf16.gmra.mrb[0].mxu0 %v703
      %v800 = vpop.f32.mrb[0].mxu0
      %v801 = vadd.f32 0.0, %v800
      %v802 = vpop.f32.mrb[0].mxu0
      %v803 = vpop.f32.mrb[0].mxu0
      %v804 = vadd.f32 0.0, %v803
      %v805 = vpop.f32.mrb[0].mxu0
      %806 = vmatprep.mubr.bf16.mxu0 0
      %807 = vmatmul.mubr.bf16.gmra.mrb[0].mxu0 %v704
      %v808 = vpop.f32.mrb[0].mxu0
      %v809 = vadd.f32 0.0, %v808
      %v810 = vpop.f32.mrb[0].mxu0
      %v811 = vpop.f32.mrb[0].mxu0
      %v812 = vadd.f32 0.0, %v811
      %v813 = vpop.f32.mrb[0].mxu0
      %814 = vmatprep.mubr.bf16.mxu0 0
      %815 = vmatmul.mubr.bf16.gmra.mrb[0].mxu0 %v705
      %v816 = vpop.f32.mrb[0].mxu0
      %v817 = vadd.f32 0.0, %v816
      %v818 = vpop.f32.mrb[0].mxu0
      %v819 = vpop.f32.mrb[0].mxu0
      %v820 = vadd.f32 0.0, %v819
      %v821 = vpop.f32.mrb[0].mxu0
      %822 = vdwg.mxu0
      %v823 = vld [vmem:[%s322] sm:$0xff]
      %v824 = vld [vmem:[%s322 + $0x8] sm:$0xff]
      %v825 = vld [vmem:[%s322 + $0x10] sm:$0xff]
      %v826 = vld [vmem:[%s322 + $0x18] sm:$0xff]
      %v827 = vld [vmem:[%s322 + $0x20] sm:$0xff]
      %v828 = vld [vmem:[%s322 + $0x28] sm:$0xff]
      %v829 = vld [vmem:[%s322 + $0x30] sm:$0xff]
      %v830 = vld [vmem:[%s322 + $0x38] sm:$0xff]
      %v831 = vadd.f32 %v823, %v793
      %v832 = vadd.f32 %v824, %v796
      %v833 = vadd.f32 %v825, %v801
      %v834 = vadd.f32 %v826, %v804
      %v835 = vadd.f32 %v827, %v809
      %v836 = vadd.f32 %v828, %v812
      %v837 = vadd.f32 %v829, %v817
      %v838 = vadd.f32 %v830, %v820
      %839 = vst [vmem:[%s322] sm:$0xff] %v831
      %840 = vst [vmem:[%s322 + $0x8] sm:$0xff] %v832
      %841 = vst [vmem:[%s322 + $0x10] sm:$0xff] %v833
      %842 = vst [vmem:[%s322 + $0x18] sm:$0xff] %v834
      %843 = vst [vmem:[%s322 + $0x20] sm:$0xff] %v835
      %844 = vst [vmem:[%s322 + $0x28] sm:$0xff] %v836
      %845 = vst [vmem:[%s322 + $0x30] sm:$0xff] %v837
      %846 = vst [vmem:[%s322 + $0x38] sm:$0xff] %v838
      %v847 = vld [vmem:[#allocation2] sm:$0xe]
      %v848 = vld [vmem:[#allocation2 + $0x4] sm:$0x1]
      %v849 = vld [vmem:[#allocation2 + $0x8] sm:$0xe]
      %v850 = vld [vmem:[#allocation2 + $0xc] sm:$0x1]
      %v851 = vld [vmem:[#allocation2 + $0x10] sm:$0xe]
      %v852 = vld [vmem:[#allocation2 + $0x14] sm:$0x1]
      %v853 = vld [vmem:[#allocation2 + $0x18] sm:$0xe]
      %v854 = vld [vmem:[#allocation2 + $0x1c] sm:$0x1]
      %v855 = vld [vmem:[#allocation2 + $0x20] sm:$0xe]
      %v856 = vld [vmem:[#allocation2 + $0x24] sm:$0x1]
      %v857 = vld [vmem:[#allocation2 + $0x28] sm:$0xe]
      %v858 = vld [vmem:[#allocation2 + $0x2c] sm:$0x1]
      %v859 = vld [vmem:[#allocation2 + $0x30] sm:$0xe]
      %v860 = vld [vmem:[#allocation2 + $0x34] sm:$0x1]
      %v861 = vld [vmem:[#allocation2 + $0x38] sm:$0xe]
      %v862 = vld [vmem:[#allocation2 + $0x3c] sm:$0x1]
      %vm879 = vcmask 1042432
      %vm880 = vcmask 1046532
      %vm881 = vmor %vm879, %vm880
      %v882 = vrot.slane %v847, 5
      %v883 = vrot.slane %v882, 4
      %v884 = vrot.slane %v848, 5
      %v885 = vsel %vm881, %v883, %v884
      %v886 = vrot.slane %v849, 5
      %v887 = vrot.slane %v886, 4
      %v888 = vrot.slane %v850, 5
      %v889 = vsel %vm881, %v887, %v888
      %v890 = vrot.slane %v851, 5
      %v891 = vrot.slane %v890, 4
      %v892 = vrot.slane %v852, 5
      %v893 = vsel %vm881, %v891, %v892
      %v894 = vrot.slane %v853, 5
      %v895 = vrot.slane %v894, 4
      %v896 = vrot.slane %v854, 5
      %v897 = vsel %vm881, %v895, %v896
      %v898 = vrot.slane %v855, 5
      %v899 = vrot.slane %v898, 4
      %v900 = vrot.slane %v856, 5
      %v901 = vsel %vm881, %v899, %v900
      %v902 = vrot.slane %v857, 5
      %v903 = vrot.slane %v902, 4
      %v904 = vrot.slane %v858, 5
      %v905 = vsel %vm881, %v903, %v904
      %v906 = vrot.slane %v859, 5
      %v907 = vrot.slane %v906, 4
      %v908 = vrot.slane %v860, 5
      %v909 = vsel %vm881, %v907, %v908
      %v910 = vrot.slane %v861, 5
      %v911 = vrot.slane %v910, 4
      %v912 = vrot.slane %v862, 5
      %v913 = vsel %vm881, %v911, %v912
      %s914 = scalar_lea.vmem %s2, 128
      %v915 = vld [vmem:[%s914] sm:$0xf]
      %v916 = vld [vmem:[%s914 + $0x4] sm:$0xf]
      %v917 = vld [vmem:[%s914 + $0x8] sm:$0xf]
      %v918 = vld [vmem:[%s914 + $0xc] sm:$0xf]
      %v919 = vld [vmem:[%s914 + $0x10] sm:$0xf]
      %v920 = vld [vmem:[%s914 + $0x14] sm:$0xf]
      %v921 = vld [vmem:[%s914 + $0x18] sm:$0xf]
      %v922 = vld [vmem:[%s914 + $0x1c] sm:$0xf]
      %v923 = vld [vmem:[%s914 + $0x20] sm:$0xf]
      %v924 = vld [vmem:[%s914 + $0x24] sm:$0xf]
      %v925 = vld [vmem:[%s914 + $0x28] sm:$0xf]
      %v926 = vld [vmem:[%s914 + $0x2c] sm:$0xf]
      %v927 = vld [vmem:[%s914 + $0x30] sm:$0xf]
      %v928 = vld [vmem:[%s914 + $0x34] sm:$0xf]
      %v929 = vld [vmem:[%s914 + $0x38] sm:$0xf]
      %v930 = vld [vmem:[%s914 + $0x3c] sm:$0xf]
      %v931 = vunpack.c.l.b16 %v885
      %v932 = vunpack.c.l.b16 %v889
      %v933 = vunpack.c.l.b16 %v893
      %v934 = vunpack.c.l.b16 %v897
      %v935 = vunpack.c.l.b16 %v901
      %v936 = vunpack.c.l.b16 %v905
      %v937 = vunpack.c.l.b16 %v909
      %v938 = vunpack.c.l.b16 %v913
      %v939 = vpack.c.b16 %v932, %v931
      %v940 = vpack.c.b16 %v934, %v933
      %v941 = vpack.c.b16 %v936, %v935
      %v942 = vpack.c.b16 %v938, %v937
      %v963 = vunpack.c.l.b16 %v915
      %v964 = vunpack.c.l.b16 %v916
      %v965 = vunpack.c.l.b16 %v917
      %v966 = vunpack.c.l.b16 %v918
      %v967 = vunpack.c.l.b16 %v919
      %v968 = vunpack.c.l.b16 %v920
      %v969 = vunpack.c.l.b16 %v921
      %v970 = vunpack.c.l.b16 %v922
      %v971 = vunpack.c.l.b16 %v923
      %v972 = vunpack.c.l.b16 %v924
      %v973 = vunpack.c.l.b16 %v925
      %v974 = vunpack.c.l.b16 %v926
      %v975 = vunpack.c.l.b16 %v927
      %v976 = vunpack.c.l.b16 %v928
      %v977 = vunpack.c.l.b16 %v929
      %v978 = vunpack.c.l.b16 %v930
      %v979 = vpack.c.b16 %v964, %v963
      %v980 = vpack.c.b16 %v966, %v965
      %v981 = vpack.c.b16 %v968, %v967
      %v982 = vpack.c.b16 %v970, %v969
      %v983 = vpack.c.b16 %v972, %v971
      %v984 = vpack.c.b16 %v974, %v973
      %v985 = vpack.c.b16 %v976, %v975
      %v986 = vpack.c.b16 %v978, %v977
      %995 = vmatprep.subr.bf16.mxu0 0
      %996 = vmatpush1.bf16.msra.mxu0 %v979
      %997 = vmatprep.subr.bf16.mxu0 0
      %998 = vmatpush1.bf16.msra.mxu0 %v980
      %999 = vmatprep.subr.bf16.mxu0 0
      %1000 = vmatpush1.bf16.msra.mxu0 %v981
      %1001 = vmatprep.subr.bf16.mxu0 0
      %1002 = vmatpush1.bf16.msra.mxu0 %v982
      %1003 = vmatprep.subr.bf16.mxu0 0
      %1004 = vmatpush1.bf16.msra.mxu0 %v983
      %1005 = vmatprep.subr.bf16.mxu0 0
      %1006 = vmatpush1.bf16.msra.mxu0 %v984
      %1007 = vmatprep.subr.bf16.mxu0 0
      %1008 = vmatpush1.bf16.msra.mxu0 %v985
      %1009 = vmatprep.subr.bf16.mxu0 0
      %1010 = vmatpush1.bf16.msra.mxu0 %v986
      %1011 = vmatprep.subr.bf16.mxu0 0
      %1012 = vmatpush1.bf16.msra.mxu0 0
      %1013 = vmatprep.subr.bf16.mxu0 0
      %1014 = vmatpush1.bf16.msra.mxu0 0
      %1015 = vmatprep.subr.bf16.mxu0 0
      %1016 = vmatpush1.bf16.msra.mxu0 0
      %1017 = vmatprep.subr.bf16.mxu0 0
      %1018 = vmatpush1.bf16.msra.mxu0 0
      %1019 = vmatprep.subr.bf16.mxu0 0
      %1020 = vmatpush1.bf16.msra.mxu0 0
      %1021 = vmatprep.subr.bf16.mxu0 0
      %1022 = vmatpush1.bf16.msra.mxu0 0
      %1023 = vmatprep.subr.bf16.mxu0 0
      %1024 = vmatpush1.bf16.msra.mxu0 0
      %1025 = vmatprep.subr.bf16.mxu0 0
      %1026 = vmatpush1.bf16.msra.mxu0 0
      %1027 = vmatprep.mubr.bf16.mxu0 0
      %1028 = vmatmul.mubr.bf16.gmra.mrb[0].mxu0 %v939
      %v1029 = vpop.f32.mrb[0].mxu0
      %v1030 = vadd.f32 0.0, %v1029
      %v1031 = vpop.f32.mrb[0].mxu0
      %v1032 = vpop.f32.mrb[0].mxu0
      %v1033 = vadd.f32 0.0, %v1032
      %v1034 = vpop.f32.mrb[0].mxu0
      %1035 = vmatprep.mubr.bf16.mxu0 0
      %1036 = vmatmul.mubr.bf16.gmra.mrb[0].mxu0 %v940
      %v1037 = vpop.f32.mrb[0].mxu0
      %v1038 = vadd.f32 0.0, %v1037
      %v1039 = vpop.f32.mrb[0].mxu0
      %v1040 = vpop.f32.mrb[0].mxu0
      %v1041 = vadd.f32 0.0, %v1040
      %v1042 = vpop.f32.mrb[0].mxu0
      %1043 = vmatprep.mubr.bf16.mxu0 0
      %1044 = vmatmul.mubr.bf16.gmra.mrb[0].mxu0 %v941
      %v1045 = vpop.f32.mrb[0].mxu0
      %v1046 = vadd.f32 0.0, %v1045
      %v1047 = vpop.f32.mrb[0].mxu0
      %v1048 = vpop.f32.mrb[0].mxu0
      %v1049 = vadd.f32 0.0, %v1048
      %v1050 = vpop.f32.mrb[0].mxu0
      %1051 = vmatprep.mubr.bf16.mxu0 0
      %1052 = vmatmul.mubr.bf16.gmra.mrb[0].mxu0 %v942
      %v1053 = vpop.f32.mrb[0].mxu0
      %v1054 = vadd.f32 0.0, %v1053
      %v1055 = vpop.f32.mrb[0].mxu0
      %v1056 = vpop.f32.mrb[0].mxu0
      %v1057 = vadd.f32 0.0, %v1056
      %v1058 = vpop.f32.mrb[0].mxu0
      %1059 = vdwg.mxu0
      %v1060 = vld [vmem:[%s322] sm:$0xff]
      %v1061 = vld [vmem:[%s322 + $0x8] sm:$0xff]
      %v1062 = vld [vmem:[%s322 + $0x10] sm:$0xff]
      %v1063 = vld [vmem:[%s322 + $0x18] sm:$0xff]
      %v1064 = vld [vmem:[%s322 + $0x20] sm:$0xff]
      %v1065 = vld [vmem:[%s322 + $0x28] sm:$0xff]
      %v1066 = vld [vmem:[%s322 + $0x30] sm:$0xff]
      %v1067 = vld [vmem:[%s322 + $0x38] sm:$0xff]
      %v1068 = vadd.f32 %v1060, %v1030
      %v1069 = vadd.f32 %v1061, %v1033
      %v1070 = vadd.f32 %v1062, %v1038
      %v1071 = vadd.f32 %v1063, %v1041
      %v1072 = vadd.f32 %v1064, %v1046
      %v1073 = vadd.f32 %v1065, %v1049
      %v1074 = vadd.f32 %v1066, %v1054
      %v1075 = vadd.f32 %v1067, %v1057
      %1076 = vst [vmem:[%s322] sm:$0xff] %v1068
      %1077 = vst [vmem:[%s322 + $0x8] sm:$0xff] %v1069
      %1078 = vst [vmem:[%s322 + $0x10] sm:$0xff] %v1070
      %1079 = vst [vmem:[%s322 + $0x18] sm:$0xff] %v1071
      %1080 = vst [vmem:[%s322 + $0x20] sm:$0xff] %v1072
      %1081 = vst [vmem:[%s322 + $0x28] sm:$0xff] %v1073
      %1082 = vst [vmem:[%s322 + $0x30] sm:$0xff] %v1074
      %1083 = vst [vmem:[%s322 + $0x38] sm:$0xff] %v1075
      %s1084 = scalar_lea.vmem [#allocation2], 8
      %v1085 = vld [vmem:[%s1084] sm:$0xf]
      %v1086 = vld [vmem:[%s1084 + $0x8] sm:$0xf]
      %v1087 = vld [vmem:[%s1084 + $0x10] sm:$0xf]
      %v1088 = vld [vmem:[%s1084 + $0x18] sm:$0xf]
      %v1089 = vld [vmem:[%s1084 + $0x20] sm:$0xf]
      %v1090 = vld [vmem:[%s1084 + $0x28] sm:$0xf]
      %v1091 = vld [vmem:[%s1084 + $0x30] sm:$0xf]
      %v1092 = vld [vmem:[%s1084 + $0x38] sm:$0xf]
      %s1093 = scalar_lea.vmem %s2, 192
      %v1094 = vld [vmem:[%s1093] sm:$0xf]
      %v1095 = vld [vmem:[%s1093 + $0x4] sm:$0xf]
      %v1096 = vld [vmem:[%s1093 + $0x8] sm:$0xf]
      %v1097 = vld [vmem:[%s1093 + $0xc] sm:$0xf]
      %v1098 = vld [vmem:[%s1093 + $0x10] sm:$0xf]
      %v1099 = vld [vmem:[%s1093 + $0x14] sm:$0xf]
      %v1100 = vld [vmem:[%s1093 + $0x18] sm:$0xf]
      %v1101 = vld [vmem:[%s1093 + $0x1c] sm:$0xf]
      %v1102 = vld [vmem:[%s1093 + $0x20] sm:$0xf]
      %v1103 = vld [vmem:[%s1093 + $0x24] sm:$0xf]
      %v1104 = vld [vmem:[%s1093 + $0x28] sm:$0xf]
      %v1105 = vld [vmem:[%s1093 + $0x2c] sm:$0xf]
      %v1106 = vld [vmem:[%s1093 + $0x30] sm:$0xf]
      %v1107 = vld [vmem:[%s1093 + $0x34] sm:$0xf]
      %v1108 = vld [vmem:[%s1093 + $0x38] sm:$0xf]
      %v1109 = vld [vmem:[%s1093 + $0x3c] sm:$0xf]
      %v1118 = vunpack.c.l.b16 %v1085
      %v1119 = vunpack.c.l.b16 %v1086
      %v1120 = vunpack.c.l.b16 %v1087
      %v1121 = vunpack.c.l.b16 %v1088
      %v1122 = vunpack.c.l.b16 %v1089
      %v1123 = vunpack.c.l.b16 %v1090
      %v1124 = vunpack.c.l.b16 %v1091
      %v1125 = vunpack.c.l.b16 %v1092
      %v1126 = vpack.c.b16 %v1119, %v1118
      %v1127 = vpack.c.b16 %v1121, %v1120
      %v1128 = vpack.c.b16 %v1123, %v1122
      %v1129 = vpack.c.b16 %v1125, %v1124
      %v1150 = vunpack.c.l.b16 %v1094
      %v1151 = vunpack.c.l.b16 %v1095
      %v1152 = vunpack.c.l.b16 %v1096
      %v1153 = vunpack.c.l.b16 %v1097
      %v1154 = vunpack.c.l.b16 %v1098
      %v1155 = vunpack.c.l.b16 %v1099
      %v1156 = vunpack.c.l.b16 %v1100
      %v1157 = vunpack.c.l.b16 %v1101
      %v1158 = vunpack.c.l.b16 %v1102
      %v1159 = vunpack.c.l.b16 %v1103
      %v1160 = vunpack.c.l.b16 %v1104
      %v1161 = vunpack.c.l.b16 %v1105
      %v1162 = vunpack.c.l.b16 %v1106
      %v1163 = vunpack.c.l.b16 %v1107
      %v1164 = vunpack.c.l.b16 %v1108
      %v1165 = vunpack.c.l.b16 %v1109
      %v1166 = vpack.c.b16 %v1151, %v1150
      %v1167 = vpack.c.b16 %v1153, %v1152
      %v1168 = vpack.c.b16 %v1155, %v1154
      %v1169 = vpack.c.b16 %v1157, %v1156
      %v1170 = vpack.c.b16 %v1159, %v1158
      %v1171 = vpack.c.b16 %v1161, %v1160
      %v1172 = vpack.c.b16 %v1163, %v1162
      %v1173 = vpack.c.b16 %v1165, %v1164
      %1182 = vmatprep.subr.bf16.mxu0 0
      %1183 = vmatpush1.bf16.msra.mxu0 %v1166
      %1184 = vmatprep.subr.bf16.mxu0 0
      %1185 = vmatpush1.bf16.msra.mxu0 %v1167
      %1186 = vmatprep.subr.bf16.mxu0 0
      %1187 = vmatpush1.bf16.msra.mxu0 %v1168
      %1188 = vmatprep.subr.bf16.mxu0 0
      %1189 = vmatpush1.bf16.msra.mxu0 %v1169
      %1190 = vmatprep.subr.bf16.mxu0 0
      %1191 = vmatpush1.bf16.msra.mxu0 %v1170
      %1192 = vmatprep.subr.bf16.mxu0 0
      %1193 = vmatpush1.bf16.msra.mxu0 %v1171
      %1194 = vmatprep.subr.bf16.mxu0 0
      %1195 = vmatpush1.bf16.msra.mxu0 %v1172
      %1196 = vmatprep.subr.bf16.mxu0 0
      %1197 = vmatpush1.bf16.msra.mxu0 %v1173
      %1198 = vmatprep.subr.bf16.mxu0 0
      %1199 = vmatpush1.bf16.msra.mxu0 0
      %1200 = vmatprep.subr.bf16.mxu0 0
      %1201 = vmatpush1.bf16.msra.mxu0 0
      %1202 = vmatprep.subr.bf16.mxu0 0
      %1203 = vmatpush1.bf16.msra.mxu0 0
      %1204 = vmatprep.subr.bf16.mxu0 0
      %1205 = vmatpush1.bf16.msra.mxu0 0
      %1206 = vmatprep.subr.bf16.mxu0 0
      %1207 = vmatpush1.bf16.msra.mxu0 0
      %1208 = vmatprep.subr.bf16.mxu0 0
      %1209 = vmatpush1.bf16.msra.mxu0 0
      %1210 = vmatprep.subr.bf16.mxu0 0
      %1211 = vmatpush1.bf16.msra.mxu0 0
      %1212 = vmatprep.subr.bf16.mxu0 0
      %1213 = vmatpush1.bf16.msra.mxu0 0
      %1214 = vmatprep.mubr.bf16.mxu0 0
      %1215 = vmatmul.mubr.bf16.gmra.mrb[0].mxu0 %v1126
      %v1216 = vpop.f32.mrb[0].mxu0
      %v1217 = vadd.f32 0.0, %v1216
      %v1218 = vpop.f32.mrb[0].mxu0
      %v1219 = vpop.f32.mrb[0].mxu0
      %v1220 = vadd.f32 0.0, %v1219
      %v1221 = vpop.f32.mrb[0].mxu0
      %1222 = vmatprep.mubr.bf16.mxu0 0
      %1223 = vmatmul.mubr.bf16.gmra.mrb[0].mxu0 %v1127
      %v1224 = vpop.f32.mrb[0].mxu0
      %v1225 = vadd.f32 0.0, %v1224
      %v1226 = vpop.f32.mrb[0].mxu0
      %v1227 = vpop.f32.mrb[0].mxu0
      %v1228 = vadd.f32 0.0, %v1227
      %v1229 = vpop.f32.mrb[0].mxu0
      %1230 = vmatprep.mubr.bf16.mxu0 0
      %1231 = vmatmul.mubr.bf16.gmra.mrb[0].mxu0 %v1128
      %v1232 = vpop.f32.mrb[0].mxu0
      %v1233 = vadd.f32 0.0, %v1232
      %v1234 = vpop.f32.mrb[0].mxu0
      %v1235 = vpop.f32.mrb[0].mxu0
      %v1236 = vadd.f32 0.0, %v1235
      %v1237 = vpop.f32.mrb[0].mxu0
      %1238 = vmatprep.mubr.bf16.mxu0 0
      %1239 = vmatmul.mubr.bf16.gmra.mrb[0].mxu0 %v1129
      %v1240 = vpop.f32.mrb[0].mxu0
      %v1241 = vadd.f32 0.0, %v1240
      %v1242 = vpop.f32.mrb[0].mxu0
      %v1243 = vpop.f32.mrb[0].mxu0
      %v1244 = vadd.f32 0.0, %v1243
      %v1245 = vpop.f32.mrb[0].mxu0
      %1246 = vdwg.mxu0
      %v1247 = vld [vmem:[%s322] sm:$0xff]
      %v1248 = vld [vmem:[%s322 + $0x8] sm:$0xff]
      %v1249 = vld [vmem:[%s322 + $0x10] sm:$0xff]
      %v1250 = vld [vmem:[%s322 + $0x18] sm:$0xff]
      %v1251 = vld [vmem:[%s322 + $0x20] sm:$0xff]
      %v1252 = vld [vmem:[%s322 + $0x28] sm:$0xff]
      %v1253 = vld [vmem:[%s322 + $0x30] sm:$0xff]
      %v1254 = vld [vmem:[%s322 + $0x38] sm:$0xff]
      %v1255 = vadd.f32 %v1247, %v1217
      %v1256 = vadd.f32 %v1248, %v1220
      %v1257 = vadd.f32 %v1249, %v1225
      %v1258 = vadd.f32 %v1250, %v1228
      %v1259 = vadd.f32 %v1251, %v1233
      %v1260 = vadd.f32 %v1252, %v1236
      %v1261 = vadd.f32 %v1253, %v1241
      %v1262 = vadd.f32 %v1254, %v1244
      %1263 = vst [vmem:[%s322] sm:$0xff] %v1255
      %1264 = vst [vmem:[%s322 + $0x8] sm:$0xff] %v1256
      %1265 = vst [vmem:[%s322 + $0x10] sm:$0xff] %v1257
      %1266 = vst [vmem:[%s322 + $0x18] sm:$0xff] %v1258
      %1267 = vst [vmem:[%s322 + $0x20] sm:$0xff] %v1259
      %1268 = vst [vmem:[%s322 + $0x28] sm:$0xff] %v1260
      %1269 = vst [vmem:[%s322 + $0x30] sm:$0xff] %v1261
      %1270 = vst [vmem:[%s322 + $0x38] sm:$0xff] %v1262
      %v1271 = vld [vmem:[%s1084] sm:$0xf]
      %v1272 = vld [vmem:[%s1084 + $0x4] sm:$0x1]
      %v1273 = vld [vmem:[%s1084 + $0x8] sm:$0xf]
      %v1274 = vld [vmem:[%s1084 + $0xc] sm:$0x1]
      %v1275 = vld [vmem:[%s1084 + $0x10] sm:$0xf]
      %v1276 = vld [vmem:[%s1084 + $0x14] sm:$0x1]
      %v1277 = vld [vmem:[%s1084 + $0x18] sm:$0xf]
      %v1278 = vld [vmem:[%s1084 + $0x1c] sm:$0x1]
      %v1279 = vld [vmem:[%s1084 + $0x20] sm:$0xf]
      %v1280 = vld [vmem:[%s1084 + $0x24] sm:$0x1]
      %v1281 = vld [vmem:[%s1084 + $0x28] sm:$0xf]
      %v1282 = vld [vmem:[%s1084 + $0x2c] sm:$0x1]
      %v1283 = vld [vmem:[%s1084 + $0x30] sm:$0xf]
      %v1284 = vld [vmem:[%s1084 + $0x34] sm:$0x1]
      %v1285 = vld [vmem:[%s1084 + $0x38] sm:$0xf]
      %v1286 = vld [vmem:[%s1084 + $0x3c] sm:$0x1]
      %v1288 = vshrl.u32 %v1271, 16
      %v1290 = vrot.slane %v1288, 4
      %v1291 = vshll.u32 %v1271, 16
      %v1293 = vrot.slane %v1291, 5
      %v1294 = vor.u32 %v1290, %v1293
      %v1295 = vrot.slane %v1294, 4
      %v1297 = vshll.u32 %v1272, 16
      %v1299 = vrot.slane %v1297, 5
      %v1300 = vsel %vm564, %v1295, %v1299
      %v1302 = vshrl.u32 %v1273, 16
      %v1304 = vrot.slane %v1302, 4
      %v1305 = vshll.u32 %v1273, 16
      %v1307 = vrot.slane %v1305, 5
      %v1308 = vor.u32 %v1304, %v1307
      %v1309 = vrot.slane %v1308, 4
      %v1311 = vshll.u32 %v1274, 16
      %v1313 = vrot.slane %v1311, 5
      %v1314 = vsel %vm564, %v1309, %v1313
      %v1316 = vshrl.u32 %v1275, 16
      %v1318 = vrot.slane %v1316, 4
      %v1319 = vshll.u32 %v1275, 16
      %v1321 = vrot.slane %v1319, 5
      %v1322 = vor.u32 %v1318, %v1321
      %v1323 = vrot.slane %v1322, 4
      %v1325 = vshll.u32 %v1276, 16
      %v1327 = vrot.slane %v1325, 5
      %v1328 = vsel %vm564, %v1323, %v1327
      %v1330 = vshrl.u32 %v1277, 16
      %v1332 = vrot.slane %v1330, 4
      %v1333 = vshll.u32 %v1277, 16
      %v1335 = vrot.slane %v1333, 5
      %v1336 = vor.u32 %v1332, %v1335
      %v1337 = vrot.slane %v1336, 4
      %v1339 = vshll.u32 %v1278, 16
      %v1341 = vrot.slane %v1339, 5
      %v1342 = vsel %vm564, %v1337, %v1341
      %v1344 = vshrl.u32 %v1279, 16
      %v1346 = vrot.slane %v1344, 4
      %v1347 = vshll.u32 %v1279, 16
      %v1349 = vrot.slane %v1347, 5
      %v1350 = vor.u32 %v1346, %v1349
      %v1351 = vrot.slane %v1350, 4
      %v1353 = vshll.u32 %v1280, 16
      %v1355 = vrot.slane %v1353, 5
      %v1356 = vsel %vm564, %v1351, %v1355
      %v1358 = vshrl.u32 %v1281, 16
      %v1360 = vrot.slane %v1358, 4
      %v1361 = vshll.u32 %v1281, 16
      %v1363 = vrot.slane %v1361, 5
      %v1364 = vor.u32 %v1360, %v1363
      %v1365 = vrot.slane %v1364, 4
      %v1367 = vshll.u32 %v1282, 16
      %v1369 = vrot.slane %v1367, 5
      %v1370 = vsel %vm564, %v1365, %v1369
      %v1372 = vshrl.u32 %v1283, 16
      %v1374 = vrot.slane %v1372, 4
      %v1375 = vshll.u32 %v1283, 16
      %v1377 = vrot.slane %v1375, 5
      %v1378 = vor.u32 %v1374, %v1377
      %v1379 = vrot.slane %v1378, 4
      %v1381 = vshll.u32 %v1284, 16
      %v1383 = vrot.slane %v1381, 5
      %v1384 = vsel %vm564, %v1379, %v1383
      %v1386 = vshrl.u32 %v1285, 16
      %v1388 = vrot.slane %v1386, 4
      %v1389 = vshll.u32 %v1285, 16
      %v1391 = vrot.slane %v1389, 5
      %v1392 = vor.u32 %v1388, %v1391
      %v1393 = vrot.slane %v1392, 4
      %v1395 = vshll.u32 %v1286, 16
      %v1397 = vrot.slane %v1395, 5
      %v1398 = vsel %vm564, %v1393, %v1397
      %s1399 = scalar_lea.vmem %s2, 256
      %v1400 = vld [vmem:[%s1399] sm:$0xf]
      %v1401 = vld [vmem:[%s1399 + $0x4] sm:$0xf]
      %v1402 = vld [vmem:[%s1399 + $0x8] sm:$0xf]
      %v1403 = vld [vmem:[%s1399 + $0xc] sm:$0xf]
      %v1404 = vld [vmem:[%s1399 + $0x10] sm:$0xf]
      %v1405 = vld [vmem:[%s1399 + $0x14] sm:$0xf]
      %v1406 = vld [vmem:[%s1399 + $0x18] sm:$0xf]
      %v1407 = vld [vmem:[%s1399 + $0x1c] sm:$0xf]
      %v1408 = vld [vmem:[%s1399 + $0x20] sm:$0xf]
      %v1409 = vld [vmem:[%s1399 + $0x24] sm:$0xf]
      %v1410 = vld [vmem:[%s1399 + $0x28] sm:$0xf]
      %v1411 = vld [vmem:[%s1399 + $0x2c] sm:$0xf]
      %v1412 = vld [vmem:[%s1399 + $0x30] sm:$0xf]
      %v1413 = vld [vmem:[%s1399 + $0x34] sm:$0xf]
      %v1414 = vld [vmem:[%s1399 + $0x38] sm:$0xf]
      %v1415 = vld [vmem:[%s1399 + $0x3c] sm:$0xf]
      %v1416 = vunpack.c.l.b16 %v1300
      %v1417 = vunpack.c.l.b16 %v1314
      %v1418 = vunpack.c.l.b16 %v1328
      %v1419 = vunpack.c.l.b16 %v1342
      %v1420 = vunpack.c.l.b16 %v1356
      %v1421 = vunpack.c.l.b16 %v1370
      %v1422 = vunpack.c.l.b16 %v1384
      %v1423 = vunpack.c.l.b16 %v1398
      %v1424 = vpack.c.b16 %v1417, %v1416
      %v1425 = vpack.c.b16 %v1419, %v1418
      %v1426 = vpack.c.b16 %v1421, %v1420
      %v1427 = vpack.c.b16 %v1423, %v1422
      %v1448 = vunpack.c.l.b16 %v1400
      %v1449 = vunpack.c.l.b16 %v1401
      %v1450 = vunpack.c.l.b16 %v1402
      %v1451 = vunpack.c.l.b16 %v1403
      %v1452 = vunpack.c.l.b16 %v1404
      %v1453 = vunpack.c.l.b16 %v1405
      %v1454 = vunpack.c.l.b16 %v1406
      %v1455 = vunpack.c.l.b16 %v1407
      %v1456 = vunpack.c.l.b16 %v1408
      %v1457 = vunpack.c.l.b16 %v1409
      %v1458 = vunpack.c.l.b16 %v1410
      %v1459 = vunpack.c.l.b16 %v1411
      %v1460 = vunpack.c.l.b16 %v1412
      %v1461 = vunpack.c.l.b16 %v1413
      %v1462 = vunpack.c.l.b16 %v1414
      %v1463 = vunpack.c.l.b16 %v1415
      %v1464 = vpack.c.b16 %v1449, %v1448
      %v1465 = vpack.c.b16 %v1451, %v1450
      %v1466 = vpack.c.b16 %v1453, %v1452
      %v1467 = vpack.c.b16 %v1455, %v1454
      %v1468 = vpack.c.b16 %v1457, %v1456
      %v1469 = vpack.c.b16 %v1459, %v1458
      %v1470 = vpack.c.b16 %v1461, %v1460
      %v1471 = vpack.c.b16 %v1463, %v1462
      %1480 = vmatprep.subr.bf16.mxu0 0
      %1481 = vmatpush1.bf16.msra.mxu0 %v1464
      %1482 = vmatprep.subr.bf16.mxu0 0
      %1483 = vmatpush1.bf16.msra.mxu0 %v1465
      %1484 = vmatprep.subr.bf16.mxu0 0
      %1485 = vmatpush1.bf16.msra.mxu0 %v1466
      %1486 = vmatprep.subr.bf16.mxu0 0
      %1487 = vmatpush1.bf16.msra.mxu0 %v1467
      %1488 = vmatprep.subr.bf16.mxu0 0
      %1489 = vmatpush1.bf16.msra.mxu0 %v1468
      %1490 = vmatprep.subr.bf16.mxu0 0
      %1491 = vmatpush1.bf16.msra.mxu0 %v1469
      %1492 = vmatprep.subr.bf16.mxu0 0
      %1493 = vmatpush1.bf16.msra.mxu0 %v1470
      %1494 = vmatprep.subr.bf16.mxu0 0
      %1495 = vmatpush1.bf16.msra.mxu0 %v1471
      %1496 = vmatprep.subr.bf16.mxu0 0
      %1497 = vmatpush1.bf16.msra.mxu0 0
      %1498 = vmatprep.subr.bf16.mxu0 0
      %1499 = vmatpush1.bf16.msra.mxu0 0
      %1500 = vmatprep.subr.bf16.mxu0 0
      %1501 = vmatpush1.bf16.msra.mxu0 0
      %1502 = vmatprep.subr.bf16.mxu0 0
      %1503 = vmatpush1.bf16.msra.mxu0 0
      %1504 = vmatprep.subr.bf16.mxu0 0
      %1505 = vmatpush1.bf16.msra.mxu0 0
      %1506 = vmatprep.subr.bf16.mxu0 0
      %1507 = vmatpush1.bf16.msra.mxu0 0
      %1508 = vmatprep.subr.bf16.mxu0 0
      %1509 = vmatpush1.bf16.msra.mxu0 0
      %1510 = vmatprep.subr.bf16.mxu0 0
      %1511 = vmatpush1.bf16.msra.mxu0 0
      %1512 = vmatprep.mubr.bf16.mxu0 0
      %1513 = vmatmul.mubr.bf16.gmra.mrb[0].mxu0 %v1424
      %v1514 = vpop.f32.mrb[0].mxu0
      %v1515 = vadd.f32 0.0, %v1514
      %v1516 = vpop.f32.mrb[0].mxu0
      %v1517 = vpop.f32.mrb[0].mxu0
      %v1518 = vadd.f32 0.0, %v1517
      %v1519 = vpop.f32.mrb[0].mxu0
      %1520 = vmatprep.mubr.bf16.mxu0 0
      %1521 = vmatmul.mubr.bf16.gmra.mrb[0].mxu0 %v1425
      %v1522 = vpop.f32.mrb[0].mxu0
      %v1523 = vadd.f32 0.0, %v1522
      %v1524 = vpop.f32.mrb[0].mxu0
      %v1525 = vpop.f32.mrb[0].mxu0
      %v1526 = vadd.f32 0.0, %v1525
      %v1527 = vpop.f32.mrb[0].mxu0
      %1528 = vmatprep.mubr.bf16.mxu0 0
      %1529 = vmatmul.mubr.bf16.gmra.mrb[0].mxu0 %v1426
      %v1530 = vpop.f32.mrb[0].mxu0
      %v1531 = vadd.f32 0.0, %v1530
      %v1532 = vpop.f32.mrb[0].mxu0
      %v1533 = vpop.f32.mrb[0].mxu0
      %v1534 = vadd.f32 0.0, %v1533
      %v1535 = vpop.f32.mrb[0].mxu0
      %1536 = vmatprep.mubr.bf16.mxu0 0
      %1537 = vmatmul.mubr.bf16.gmra.mrb[0].mxu0 %v1427
      %v1538 = vpop.f32.mrb[0].mxu0
      %v1539 = vadd.f32 0.0, %v1538
      %v1540 = vpop.f32.mrb[0].mxu0
      %v1541 = vpop.f32.mrb[0].mxu0
      %v1542 = vadd.f32 0.0, %v1541
      %v1543 = vpop.f32.mrb[0].mxu0
      %1544 = vdwg.mxu0
      %v1545 = vld [vmem:[%s322] sm:$0xff]
      %v1546 = vld [vmem:[%s322 + $0x8] sm:$0xff]
      %v1547 = vld [vmem:[%s322 + $0x10] sm:$0xff]
      %v1548 = vld [vmem:[%s322 + $0x18] sm:$0xff]
      %v1549 = vld [vmem:[%s322 + $0x20] sm:$0xff]
      %v1550 = vld [vmem:[%s322 + $0x28] sm:$0xff]
      %v1551 = vld [vmem:[%s322 + $0x30] sm:$0xff]
      %v1552 = vld [vmem:[%s322 + $0x38] sm:$0xff]
      %v1553 = vadd.f32 %v1545, %v1515
      %v1554 = vadd.f32 %v1546, %v1518
      %v1555 = vadd.f32 %v1547, %v1523
      %v1556 = vadd.f32 %v1548, %v1526
      %v1557 = vadd.f32 %v1549, %v1531
      %v1558 = vadd.f32 %v1550, %v1534
      %v1559 = vadd.f32 %v1551, %v1539
      %v1560 = vadd.f32 %v1552, %v1542
      %1561 = vst [vmem:[%s322] sm:$0xff] %v1553
      %1562 = vst [vmem:[%s322 + $0x8] sm:$0xff] %v1554
      %1563 = vst [vmem:[%s322 + $0x10] sm:$0xff] %v1555
      %1564 = vst [vmem:[%s322 + $0x18] sm:$0xff] %v1556
      %1565 = vst [vmem:[%s322 + $0x20] sm:$0xff] %v1557
      %1566 = vst [vmem:[%s322 + $0x28] sm:$0xff] %v1558
      %1567 = vst [vmem:[%s322 + $0x30] sm:$0xff] %v1559
      %1568 = vst [vmem:[%s322 + $0x38] sm:$0xff] %v1560
      %v1569 = vld [vmem:[%s1084] sm:$0xe]
      %v1570 = vld [vmem:[%s1084 + $0x4] sm:$0x1]
      %v1571 = vld [vmem:[%s1084 + $0x8] sm:$0xe]
      %v1572 = vld [vmem:[%s1084 + $0xc] sm:$0x1]
      %v1573 = vld [vmem:[%s1084 + $0x10] sm:$0xe]
      %v1574 = vld [vmem:[%s1084 + $0x14] sm:$0x1]
      %v1575 = vld [vmem:[%s1084 + $0x18] sm:$0xe]
      %v1576 = vld [vmem:[%s1084 + $0x1c] sm:$0x1]
      %v1577 = vld [vmem:[%s1084 + $0x20] sm:$0xe]
      %v1578 = vld [vmem:[%s1084 + $0x24] sm:$0x1]
      %v1579 = vld [vmem:[%s1084 + $0x28] sm:$0xe]
      %v1580 = vld [vmem:[%s1084 + $0x2c] sm:$0x1]
      %v1581 = vld [vmem:[%s1084 + $0x30] sm:$0xe]
      %v1582 = vld [vmem:[%s1084 + $0x34] sm:$0x1]
      %v1583 = vld [vmem:[%s1084 + $0x38] sm:$0xe]
      %v1584 = vld [vmem:[%s1084 + $0x3c] sm:$0x1]
      %v1601 = vrot.slane %v1569, 5
      %v1602 = vrot.slane %v1601, 4
      %v1603 = vrot.slane %v1570, 5
      %v1604 = vsel %vm881, %v1602, %v1603
      %v1605 = vrot.slane %v1571, 5
      %v1606 = vrot.slane %v1605, 4
      %v1607 = vrot.slane %v1572, 5
      %v1608 = vsel %vm881, %v1606, %v1607
      %v1609 = vrot.slane %v1573, 5
      %v1610 = vrot.slane %v1609, 4
      %v1611 = vrot.slane %v1574, 5
      %v1612 = vsel %vm881, %v1610, %v1611
      %v1613 = vrot.slane %v1575, 5
      %v1614 = vrot.slane %v1613, 4
      %v1615 = vrot.slane %v1576, 5
      %v1616 = vsel %vm881, %v1614, %v1615
      %v1617 = vrot.slane %v1577, 5
      %v1618 = vrot.slane %v1617, 4
      %v1619 = vrot.slane %v1578, 5
      %v1620 = vsel %vm881, %v1618, %v1619
      %v1621 = vrot.slane %v1579, 5
      %v1622 = vrot.slane %v1621, 4
      %v1623 = vrot.slane %v1580, 5
      %v1624 = vsel %vm881, %v1622, %v1623
      %v1625 = vrot.slane %v1581, 5
      %v1626 = vrot.slane %v1625, 4
      %v1627 = vrot.slane %v1582, 5
      %v1628 = vsel %vm881, %v1626, %v1627
      %v1629 = vrot.slane %v1583, 5
      %v1630 = vrot.slane %v1629, 4
      %v1631 = vrot.slane %v1584, 5
      %v1632 = vsel %vm881, %v1630, %v1631
      %s1633 = scalar_lea.vmem %s2, 320
      %v1634 = vld [vmem:[%s1633] sm:$0xf]
      %v1635 = vld [vmem:[%s1633 + $0x4] sm:$0xf]
      %v1636 = vld [vmem:[%s1633 + $0x8] sm:$0xf]
      %v1637 = vld [vmem:[%s1633 + $0xc] sm:$0xf]
      %v1638 = vld [vmem:[%s1633 + $0x10] sm:$0xf]
      %v1639 = vld [vmem:[%s1633 + $0x14] sm:$0xf]
      %v1640 = vld [vmem:[%s1633 + $0x18] sm:$0xf]
      %v1641 = vld [vmem:[%s1633 + $0x1c] sm:$0xf]
      %v1642 = vld [vmem:[%s1633 + $0x20] sm:$0xf]
      %v1643 = vld [vmem:[%s1633 + $0x24] sm:$0xf]
      %v1644 = vld [vmem:[%s1633 + $0x28] sm:$0xf]
      %v1645 = vld [vmem:[%s1633 + $0x2c] sm:$0xf]
      %v1646 = vld [vmem:[%s1633 + $0x30] sm:$0xf]
      %v1647 = vld [vmem:[%s1633 + $0x34] sm:$0xf]
      %v1648 = vld [vmem:[%s1633 + $0x38] sm:$0xf]
      %v1649 = vld [vmem:[%s1633 + $0x3c] sm:$0xf]
      %v1650 = vunpack.c.l.b16 %v1604
      %v1651 = vunpack.c.l.b16 %v1608
      %v1652 = vunpack.c.l.b16 %v1612
      %v1653 = vunpack.c.l.b16 %v1616
      %v1654 = vunpack.c.l.b16 %v1620
      %v1655 = vunpack.c.l.b16 %v1624
      %v1656 = vunpack.c.l.b16 %v1628
      %v1657 = vunpack.c.l.b16 %v1632
      %v1658 = vpack.c.b16 %v1651, %v1650
      %v1659 = vpack.c.b16 %v1653, %v1652
      %v1660 = vpack.c.b16 %v1655, %v1654
      %v1661 = vpack.c.b16 %v1657, %v1656
      %v1682 = vunpack.c.l.b16 %v1634
      %v1683 = vunpack.c.l.b16 %v1635
      %v1684 = vunpack.c.l.b16 %v1636
      %v1685 = vunpack.c.l.b16 %v1637
      %v1686 = vunpack.c.l.b16 %v1638
      %v1687 = vunpack.c.l.b16 %v1639
      %v1688 = vunpack.c.l.b16 %v1640
      %v1689 = vunpack.c.l.b16 %v1641
      %v1690 = vunpack.c.l.b16 %v1642
      %v1691 = vunpack.c.l.b16 %v1643
      %v1692 = vunpack.c.l.b16 %v1644
      %v1693 = vunpack.c.l.b16 %v1645
      %v1694 = vunpack.c.l.b16 %v1646
      %v1695 = vunpack.c.l.b16 %v1647
      %v1696 = vunpack.c.l.b16 %v1648
      %v1697 = vunpack.c.l.b16 %v1649
      %v1698 = vpack.c.b16 %v1683, %v1682
      %v1699 = vpack.c.b16 %v1685, %v1684
      %v1700 = vpack.c.b16 %v1687, %v1686
      %v1701 = vpack.c.b16 %v1689, %v1688
      %v1702 = vpack.c.b16 %v1691, %v1690
      %v1703 = vpack.c.b16 %v1693, %v1692
      %v1704 = vpack.c.b16 %v1695, %v1694
      %v1705 = vpack.c.b16 %v1697, %v1696
      %1714 = vmatprep.subr.bf16.mxu0 0
      %1715 = vmatpush1.bf16.msra.mxu0 %v1698
      %1716 = vmatprep.subr.bf16.mxu0 0
      %1717 = vmatpush1.bf16.msra.mxu0 %v1699
      %1718 = vmatprep.subr.bf16.mxu0 0
      %1719 = vmatpush1.bf16.msra.mxu0 %v1700
      %1720 = vmatprep.subr.bf16.mxu0 0
      %1721 = vmatpush1.bf16.msra.mxu0 %v1701
      %1722 = vmatprep.subr.bf16.mxu0 0
      %1723 = vmatpush1.bf16.msra.mxu0 %v1702
      %1724 = vmatprep.subr.bf16.mxu0 0
      %1725 = vmatpush1.bf16.msra.mxu0 %v1703
      %1726 = vmatprep.subr.bf16.mxu0 0
      %1727 = vmatpush1.bf16.msra.mxu0 %v1704
      %1728 = vmatprep.subr.bf16.mxu0 0
      %1729 = vmatpush1.bf16.msra.mxu0 %v1705
      %1730 = vmatprep.subr.bf16.mxu0 0
      %1731 = vmatpush1.bf16.msra.mxu0 0
      %1732 = vmatprep.subr.bf16.mxu0 0
      %1733 = vmatpush1.bf16.msra.mxu0 0
      %1734 = vmatprep.subr.bf16.mxu0 0
      %1735 = vmatpush1.bf16.msra.mxu0 0
      %1736 = vmatprep.subr.bf16.mxu0 0
      %1737 = vmatpush1.bf16.msra.mxu0 0
      %1738 = vmatprep.subr.bf16.mxu0 0
      %1739 = vmatpush1.bf16.msra.mxu0 0
      %1740 = vmatprep.subr.bf16.mxu0 0
      %1741 = vmatpush1.bf16.msra.mxu0 0
      %1742 = vmatprep.subr.bf16.mxu0 0
      %1743 = vmatpush1.bf16.msra.mxu0 0
      %1744 = vmatprep.subr.bf16.mxu0 0
      %1745 = vmatpush1.bf16.msra.mxu0 0
      %1746 = vmatprep.mubr.bf16.mxu0 0
      %1747 = vmatmul.mubr.bf16.gmra.mrb[0].mxu0 %v1658
      %v1748 = vpop.f32.mrb[0].mxu0
      %v1749 = vadd.f32 0.0, %v1748
      %v1750 = vpop.f32.mrb[0].mxu0
      %v1751 = vpop.f32.mrb[0].mxu0
      %v1752 = vadd.f32 0.0, %v1751
      %v1753 = vpop.f32.mrb[0].mxu0
      %1754 = vmatprep.mubr.bf16.mxu0 0
      %1755 = vmatmul.mubr.bf16.gmra.mrb[0].mxu0 %v1659
      %v1756 = vpop.f32.mrb[0].mxu0
      %v1757 = vadd.f32 0.0, %v1756
      %v1758 = vpop.f32.mrb[0].mxu0
      %v1759 = vpop.f32.mrb[0].mxu0
      %v1760 = vadd.f32 0.0, %v1759
      %v1761 = vpop.f32.mrb[0].mxu0
      %1762 = vmatprep.mubr.bf16.mxu0 0
      %1763 = vmatmul.mubr.bf16.gmra.mrb[0].mxu0 %v1660
      %v1764 = vpop.f32.mrb[0].mxu0
      %v1765 = vadd.f32 0.0, %v1764
      %v1766 = vpop.f32.mrb[0].mxu0
      %v1767 = vpop.f32.mrb[0].mxu0
      %v1768 = vadd.f32 0.0, %v1767
      %v1769 = vpop.f32.mrb[0].mxu0
      %1770 = vmatprep.mubr.bf16.mxu0 0
      %1771 = vmatmul.mubr.bf16.gmra.mrb[0].mxu0 %v1661
      %v1772 = vpop.f32.mrb[0].mxu0
      %v1773 = vadd.f32 0.0, %v1772
      %v1774 = vpop.f32.mrb[0].mxu0
      %v1775 = vpop.f32.mrb[0].mxu0
      %v1776 = vadd.f32 0.0, %v1775
      %v1777 = vpop.f32.mrb[0].mxu0
      %1778 = vdwg.mxu0
      %v1779 = vld [vmem:[%s322] sm:$0xff]
      %v1780 = vld [vmem:[%s322 + $0x8] sm:$0xff]
      %v1781 = vld [vmem:[%s322 + $0x10] sm:$0xff]
      %v1782 = vld [vmem:[%s322 + $0x18] sm:$0xff]
      %v1783 = vld [vmem:[%s322 + $0x20] sm:$0xff]
      %v1784 = vld [vmem:[%s322 + $0x28] sm:$0xff]
      %v1785 = vld [vmem:[%s322 + $0x30] sm:$0xff]
      %v1786 = vld [vmem:[%s322 + $0x38] sm:$0xff]
      %v1787 = vadd.f32 %v1779, %v1749
      %v1788 = vadd.f32 %v1780, %v1752
      %v1789 = vadd.f32 %v1781, %v1757
      %v1790 = vadd.f32 %v1782, %v1760
      %v1791 = vadd.f32 %v1783, %v1765
      %v1792 = vadd.f32 %v1784, %v1768
      %v1793 = vadd.f32 %v1785, %v1773
      %v1794 = vadd.f32 %v1786, %v1776
      %1795 = vst [vmem:[%s322] sm:$0xff] %v1787
      %1796 = vst [vmem:[%s322 + $0x8] sm:$0xff] %v1788
      %1797 = vst [vmem:[%s322 + $0x10] sm:$0xff] %v1789
      %1798 = vst [vmem:[%s322 + $0x18] sm:$0xff] %v1790
      %1799 = vst [vmem:[%s322 + $0x20] sm:$0xff] %v1791
      %1800 = vst [vmem:[%s322 + $0x28] sm:$0xff] %v1792
      %1801 = vst [vmem:[%s322 + $0x30] sm:$0xff] %v1793
      %1802 = vst [vmem:[%s322 + $0x38] sm:$0xff] %v1794
      %s1803 = scalar_lea.vmem [#allocation2], 16
      %v1804 = vld [vmem:[%s1803] sm:$0xf]
      %v1805 = vld [vmem:[%s1803 + $0x8] sm:$0xf]
      %v1806 = vld [vmem:[%s1803 + $0x10] sm:$0xf]
      %v1807 = vld [vmem:[%s1803 + $0x18] sm:$0xf]
      %v1808 = vld [vmem:[%s1803 + $0x20] sm:$0xf]
      %v1809 = vld [vmem:[%s1803 + $0x28] sm:$0xf]
      %v1810 = vld [vmem:[%s1803 + $0x30] sm:$0xf]
      %v1811 = vld [vmem:[%s1803 + $0x38] sm:$0xf]
      %s1812 = scalar_lea.vmem %s2, 384
      %v1813 = vld [vmem:[%s1812] sm:$0xf]
      %v1814 = vld [vmem:[%s1812 + $0x4] sm:$0xf]
      %v1815 = vld [vmem:[%s1812 + $0x8] sm:$0xf]
      %v1816 = vld [vmem:[%s1812 + $0xc] sm:$0xf]
      %v1817 = vld [vmem:[%s1812 + $0x10] sm:$0xf]
      %v1818 = vld [vmem:[%s1812 + $0x14] sm:$0xf]
      %v1819 = vld [vmem:[%s1812 + $0x18] sm:$0xf]
      %v1820 = vld [vmem:[%s1812 + $0x1c] sm:$0xf]
      %v1821 = vld [vmem:[%s1812 + $0x20] sm:$0xf]
      %v1822 = vld [vmem:[%s1812 + $0x24] sm:$0xf]
      %v1823 = vld [vmem:[%s1812 + $0x28] sm:$0xf]
      %v1824 = vld [vmem:[%s1812 + $0x2c] sm:$0xf]
      %v1825 = vld [vmem:[%s1812 + $0x30] sm:$0xf]
      %v1826 = vld [vmem:[%s1812 + $0x34] sm:$0xf]
      %v1827 = vld [vmem:[%s1812 + $0x38] sm:$0xf]
      %v1828 = vld [vmem:[%s1812 + $0x3c] sm:$0xf]
      %v1837 = vunpack.c.l.b16 %v1804
      %v1838 = vunpack.c.l.b16 %v1805
      %v1839 = vunpack.c.l.b16 %v1806
      %v1840 = vunpack.c.l.b16 %v1807
      %v1841 = vunpack.c.l.b16 %v1808
      %v1842 = vunpack.c.l.b16 %v1809
      %v1843 = vunpack.c.l.b16 %v1810
      %v1844 = vunpack.c.l.b16 %v1811
      %v1845 = vpack.c.b16 %v1838, %v1837
      %v1846 = vpack.c.b16 %v1840, %v1839
      %v1847 = vpack.c.b16 %v1842, %v1841
      %v1848 = vpack.c.b16 %v1844, %v1843
      %v1869 = vunpack.c.l.b16 %v1813
      %v1870 = vunpack.c.l.b16 %v1814
      %v1871 = vunpack.c.l.b16 %v1815
      %v1872 = vunpack.c.l.b16 %v1816
      %v1873 = vunpack.c.l.b16 %v1817
      %v1874 = vunpack.c.l.b16 %v1818
      %v1875 = vunpack.c.l.b16 %v1819
      %v1876 = vunpack.c.l.b16 %v1820
      %v1877 = vunpack.c.l.b16 %v1821
      %v1878 = vunpack.c.l.b16 %v1822
      %v1879 = vunpack.c.l.b16 %v1823
      %v1880 = vunpack.c.l.b16 %v1824
      %v1881 = vunpack.c.l.b16 %v1825
      %v1882 = vunpack.c.l.b16 %v1826
      %v1883 = vunpack.c.l.b16 %v1827
      %v1884 = vunpack.c.l.b16 %v1828
      %v1885 = vpack.c.b16 %v1870, %v1869
      %v1886 = vpack.c.b16 %v1872, %v1871
      %v1887 = vpack.c.b16 %v1874, %v1873
      %v1888 = vpack.c.b16 %v1876, %v1875
      %v1889 = vpack.c.b16 %v1878, %v1877
      %v1890 = vpack.c.b16 %v1880, %v1879
      %v1891 = vpack.c.b16 %v1882, %v1881
      %v1892 = vpack.c.b16 %v1884, %v1883
      %1901 = vmatprep.subr.bf16.mxu0 0
      %1902 = vmatpush1.bf16.msra.mxu0 %v1885
      %1903 = vmatprep.subr.bf16.mxu0 0
      %1904 = vmatpush1.bf16.msra.mxu0 %v1886
      %1905 = vmatprep.subr.bf16.mxu0 0
      %1906 = vmatpush1.bf16.msra.mxu0 %v1887
      %1907 = vmatprep.subr.bf16.mxu0 0
      %1908 = vmatpush1.bf16.msra.mxu0 %v1888
      %1909 = vmatprep.subr.bf16.mxu0 0
      %1910 = vmatpush1.bf16.msra.mxu0 %v1889
      %1911 = vmatprep.subr.bf16.mxu0 0
      %1912 = vmatpush1.bf16.msra.mxu0 %v1890
      %1913 = vmatprep.subr.bf16.mxu0 0
      %1914 = vmatpush1.bf16.msra.mxu0 %v1891
      %1915 = vmatprep.subr.bf16.mxu0 0
      %1916 = vmatpush1.bf16.msra.mxu0 %v1892
      %1917 = vmatprep.subr.bf16.mxu0 0
      %1918 = vmatpush1.bf16.msra.mxu0 0
      %1919 = vmatprep.subr.bf16.mxu0 0
      %1920 = vmatpush1.bf16.msra.mxu0 0
      %1921 = vmatprep.subr.bf16.mxu0 0
      %1922 = vmatpush1.bf16.msra.mxu0 0
      %1923 = vmatprep.subr.bf16.mxu0 0
      %1924 = vmatpush1.bf16.msra.mxu0 0
      %1925 = vmatprep.subr.bf16.mxu0 0
      %1926 = vmatpush1.bf16.msra.mxu0 0
      %1927 = vmatprep.subr.bf16.mxu0 0
      %1928 = vmatpush1.bf16.msra.mxu0 0
      %1929 = vmatprep.subr.bf16.mxu0 0
      %1930 = vmatpush1.bf16.msra.mxu0 0
      %1931 = vmatprep.subr.bf16.mxu0 0
      %1932 = vmatpush1.bf16.msra.mxu0 0
      %1933 = vmatprep.mubr.bf16.mxu0 0
      %1934 = vmatmul.mubr.bf16.gmra.mrb[0].mxu0 %v1845
      %v1935 = vpop.f32.mrb[0].mxu0
      %v1936 = vadd.f32 0.0, %v1935
      %v1937 = vpop.f32.mrb[0].mxu0
      %v1938 = vpop.f32.mrb[0].mxu0
      %v1939 = vadd.f32 0.0, %v1938
      %v1940 = vpop.f32.mrb[0].mxu0
      %1941 = vmatprep.mubr.bf16.mxu0 0
      %1942 = vmatmul.mubr.bf16.gmra.mrb[0].mxu0 %v1846
      %v1943 = vpop.f32.mrb[0].mxu0
      %v1944 = vadd.f32 0.0, %v1943
      %v1945 = vpop.f32.mrb[0].mxu0
      %v1946 = vpop.f32.mrb[0].mxu0
      %v1947 = vadd.f32 0.0, %v1946
      %v1948 = vpop.f32.mrb[0].mxu0
      %1949 = vmatprep.mubr.bf16.mxu0 0
      %1950 = vmatmul.mubr.bf16.gmra.mrb[0].mxu0 %v1847
      %v1951 = vpop.f32.mrb[0].mxu0
      %v1952 = vadd.f32 0.0, %v1951
      %v1953 = vpop.f32.mrb[0].mxu0
      %v1954 = vpop.f32.mrb[0].mxu0
      %v1955 = vadd.f32 0.0, %v1954
      %v1956 = vpop.f32.mrb[0].mxu0
      %1957 = vmatprep.mubr.bf16.mxu0 0
      %1958 = vmatmul.mubr.bf16.gmra.mrb[0].mxu0 %v1848
      %v1959 = vpop.f32.mrb[0].mxu0
      %v1960 = vadd.f32 0.0, %v1959
      %v1961 = vpop.f32.mrb[0].mxu0
      %v1962 = vpop.f32.mrb[0].mxu0
      %v1963 = vadd.f32 0.0, %v1962
      %v1964 = vpop.f32.mrb[0].mxu0
      %1965 = vdwg.mxu0
      %v1966 = vld [vmem:[%s322] sm:$0xff]
      %v1967 = vld [vmem:[%s322 + $0x8] sm:$0xff]
      %v1968 = vld [vmem:[%s322 + $0x10] sm:$0xff]
      %v1969 = vld [vmem:[%s322 + $0x18] sm:$0xff]
      %v1970 = vld [vmem:[%s322 + $0x20] sm:$0xff]
      %v1971 = vld [vmem:[%s322 + $0x28] sm:$0xff]
      %v1972 = vld [vmem:[%s322 + $0x30] sm:$0xff]
      %v1973 = vld [vmem:[%s322 + $0x38] sm:$0xff]
      %v1974 = vadd.f32 %v1966, %v1936
      %v1975 = vadd.f32 %v1967, %v1939
      %v1976 = vadd.f32 %v1968, %v1944
      %v1977 = vadd.f32 %v1969, %v1947
      %v1978 = vadd.f32 %v1970, %v1952
      %v1979 = vadd.f32 %v1971, %v1955
      %v1980 = vadd.f32 %v1972, %v1960
      %v1981 = vadd.f32 %v1973, %v1963
      %1982 = vst [vmem:[%s322] sm:$0xff] %v1974
      %1983 = vst [vmem:[%s322 + $0x8] sm:$0xff] %v1975
      %1984 = vst [vmem:[%s322 + $0x10] sm:$0xff] %v1976
      %1985 = vst [vmem:[%s322 + $0x18] sm:$0xff] %v1977
      %1986 = vst [vmem:[%s322 + $0x20] sm:$0xff] %v1978
      %1987 = vst [vmem:[%s322 + $0x28] sm:$0xff] %v1979
      %1988 = vst [vmem:[%s322 + $0x30] sm:$0xff] %v1980
      %1989 = vst [vmem:[%s322 + $0x38] sm:$0xff] %v1981
      %v1990 = vld [vmem:[%s1803] sm:$0xf]
      %v1991 = vld [vmem:[%s1803 + $0x4] sm:$0x1]
      %v1992 = vld [vmem:[%s1803 + $0x8] sm:$0xf]
      %v1993 = vld [vmem:[%s1803 + $0xc] sm:$0x1]
      %v1994 = vld [vmem:[%s1803 + $0x10] sm:$0xf]
      %v1995 = vld [vmem:[%s1803 + $0x14] sm:$0x1]
      %v1996 = vld [vmem:[%s1803 + $0x18] sm:$0xf]
      %v1997 = vld [vmem:[%s1803 + $0x1c] sm:$0x1]
      %v1998 = vld [vmem:[%s1803 + $0x20] sm:$0xf]
      %v1999 = vld [vmem:[%s1803 + $0x24] sm:$0x1]
      %v2000 = vld [vmem:[%s1803 + $0x28] sm:$0xf]
      %v2001 = vld [vmem:[%s1803 + $0x2c] sm:$0x1]
      %v2002 = vld [vmem:[%s1803 + $0x30] sm:$0xf]
      %v2003 = vld [vmem:[%s1803 + $0x34] sm:$0x1]
      %v2004 = vld [vmem:[%s1803 + $0x38] sm:$0xf]
      %v2005 = vld [vmem:[%s1803 + $0x3c] sm:$0x1]
      %v2007 = vshrl.u32 %v1990, 16
      %v2009 = vrot.slane %v2007, 4
      %v2010 = vshll.u32 %v1990, 16
      %v2012 = vrot.slane %v2010, 5
      %v2013 = vor.u32 %v2009, %v2012
      %v2014 = vrot.slane %v2013, 4
      %v2016 = vshll.u32 %v1991, 16
      %v2018 = vrot.slane %v2016, 5
      %v2019 = vsel %vm564, %v2014, %v2018
      %v2021 = vshrl.u32 %v1992, 16
      %v2023 = vrot.slane %v2021, 4
      %v2024 = vshll.u32 %v1992, 16
      %v2026 = vrot.slane %v2024, 5
      %v2027 = vor.u32 %v2023, %v2026
      %v2028 = vrot.slane %v2027, 4
      %v2030 = vshll.u32 %v1993, 16
      %v2032 = vrot.slane %v2030, 5
      %v2033 = vsel %vm564, %v2028, %v2032
      %v2035 = vshrl.u32 %v1994, 16
      %v2037 = vrot.slane %v2035, 4
      %v2038 = vshll.u32 %v1994, 16
      %v2040 = vrot.slane %v2038, 5
      %v2041 = vor.u32 %v2037, %v2040
      %v2042 = vrot.slane %v2041, 4
      %v2044 = vshll.u32 %v1995, 16
      %v2046 = vrot.slane %v2044, 5
      %v2047 = vsel %vm564, %v2042, %v2046
      %v2049 = vshrl.u32 %v1996, 16
      %v2051 = vrot.slane %v2049, 4
      %v2052 = vshll.u32 %v1996, 16
      %v2054 = vrot.slane %v2052, 5
      %v2055 = vor.u32 %v2051, %v2054
      %v2056 = vrot.slane %v2055, 4
      %v2058 = vshll.u32 %v1997, 16
      %v2060 = vrot.slane %v2058, 5
      %v2061 = vsel %vm564, %v2056, %v2060
      %v2063 = vshrl.u32 %v1998, 16
      %v2065 = vrot.slane %v2063, 4
      %v2066 = vshll.u32 %v1998, 16
      %v2068 = vrot.slane %v2066, 5
      %v2069 = vor.u32 %v2065, %v2068
      %v2070 = vrot.slane %v2069, 4
      %v2072 = vshll.u32 %v1999, 16
      %v2074 = vrot.slane %v2072, 5
      %v2075 = vsel %vm564, %v2070, %v2074
      %v2077 = vshrl.u32 %v2000, 16
      %v2079 = vrot.slane %v2077, 4
      %v2080 = vshll.u32 %v2000, 16
      %v2082 = vrot.slane %v2080, 5
      %v2083 = vor.u32 %v2079, %v2082
      %v2084 = vrot.slane %v2083, 4
      %v2086 = vshll.u32 %v2001, 16
      %v2088 = vrot.slane %v2086, 5
      %v2089 = vsel %vm564, %v2084, %v2088
      %v2091 = vshrl.u32 %v2002, 16
      %v2093 = vrot.slane %v2091, 4
      %v2094 = vshll.u32 %v2002, 16
      %v2096 = vrot.slane %v2094, 5
      %v2097 = vor.u32 %v2093, %v2096
      %v2098 = vrot.slane %v2097, 4
      %v2100 = vshll.u32 %v2003, 16
      %v2102 = vrot.slane %v2100, 5
      %v2103 = vsel %vm564, %v2098, %v2102
      %v2105 = vshrl.u32 %v2004, 16
      %v2107 = vrot.slane %v2105, 4
      %v2108 = vshll.u32 %v2004, 16
      %v2110 = vrot.slane %v2108, 5
      %v2111 = vor.u32 %v2107, %v2110
      %v2112 = vrot.slane %v2111, 4
      %v2114 = vshll.u32 %v2005, 16
      %v2116 = vrot.slane %v2114, 5
      %v2117 = vsel %vm564, %v2112, %v2116
      %s2118 = scalar_lea.vmem %s2, 448
      %v2119 = vld [vmem:[%s2118] sm:$0xf]
      %v2120 = vld [vmem:[%s2118 + $0x4] sm:$0xf]
      %v2121 = vld [vmem:[%s2118 + $0x8] sm:$0xf]
      %v2122 = vld [vmem:[%s2118 + $0xc] sm:$0xf]
      %v2123 = vld [vmem:[%s2118 + $0x10] sm:$0xf]
      %v2124 = vld [vmem:[%s2118 + $0x14] sm:$0xf]
      %v2125 = vld [vmem:[%s2118 + $0x18] sm:$0xf]
      %v2126 = vld [vmem:[%s2118 + $0x1c] sm:$0xf]
      %v2127 = vld [vmem:[%s2118 + $0x20] sm:$0xf]
      %v2128 = vld [vmem:[%s2118 + $0x24] sm:$0xf]
      %v2129 = vld [vmem:[%s2118 + $0x28] sm:$0xf]
      %v2130 = vld [vmem:[%s2118 + $0x2c] sm:$0xf]
      %v2131 = vld [vmem:[%s2118 + $0x30] sm:$0xf]
      %v2132 = vld [vmem:[%s2118 + $0x34] sm:$0xf]
      %v2133 = vld [vmem:[%s2118 + $0x38] sm:$0xf]
      %v2134 = vld [vmem:[%s2118 + $0x3c] sm:$0xf]
      %v2135 = vunpack.c.l.b16 %v2019
      %v2136 = vunpack.c.l.b16 %v2033
      %v2137 = vunpack.c.l.b16 %v2047
      %v2138 = vunpack.c.l.b16 %v2061
      %v2139 = vunpack.c.l.b16 %v2075
      %v2140 = vunpack.c.l.b16 %v2089
      %v2141 = vunpack.c.l.b16 %v2103
      %v2142 = vunpack.c.l.b16 %v2117
      %v2143 = vpack.c.b16 %v2136, %v2135
      %v2144 = vpack.c.b16 %v2138, %v2137
      %v2145 = vpack.c.b16 %v2140, %v2139
      %v2146 = vpack.c.b16 %v2142, %v2141
      %v2167 = vunpack.c.l.b16 %v2119
      %v2168 = vunpack.c.l.b16 %v2120
      %v2169 = vunpack.c.l.b16 %v2121
      %v2170 = vunpack.c.l.b16 %v2122
      %v2171 = vunpack.c.l.b16 %v2123
      %v2172 = vunpack.c.l.b16 %v2124
      %v2173 = vunpack.c.l.b16 %v2125
      %v2174 = vunpack.c.l.b16 %v2126
      %v2175 = vunpack.c.l.b16 %v2127
      %v2176 = vunpack.c.l.b16 %v2128
      %v2177 = vunpack.c.l.b16 %v2129
      %v2178 = vunpack.c.l.b16 %v2130
      %v2179 = vunpack.c.l.b16 %v2131
      %v2180 = vunpack.c.l.b16 %v2132
      %v2181 = vunpack.c.l.b16 %v2133
      %v2182 = vunpack.c.l.b16 %v2134
      %v2183 = vpack.c.b16 %v2168, %v2167
      %v2184 = vpack.c.b16 %v2170, %v2169
      %v2185 = vpack.c.b16 %v2172, %v2171
      %v2186 = vpack.c.b16 %v2174, %v2173
      %v2187 = vpack.c.b16 %v2176, %v2175
      %v2188 = vpack.c.b16 %v2178, %v2177
      %v2189 = vpack.c.b16 %v2180, %v2179
      %v2190 = vpack.c.b16 %v2182, %v2181
      %2199 = vmatprep.subr.bf16.mxu0 0
      %2200 = vmatpush1.bf16.msra.mxu0 %v2183
      %2201 = vmatprep.subr.bf16.mxu0 0
      %2202 = vmatpush1.bf16.msra.mxu0 %v2184
      %2203 = vmatprep.subr.bf16.mxu0 0
      %2204 = vmatpush1.bf16.msra.mxu0 %v2185
      %2205 = vmatprep.subr.bf16.mxu0 0
      %2206 = vmatpush1.bf16.msra.mxu0 %v2186
      %2207 = vmatprep.subr.bf16.mxu0 0
      %2208 = vmatpush1.bf16.msra.mxu0 %v2187
      %2209 = vmatprep.subr.bf16.mxu0 0
      %2210 = vmatpush1.bf16.msra.mxu0 %v2188
      %2211 = vmatprep.subr.bf16.mxu0 0
      %2212 = vmatpush1.bf16.msra.mxu0 %v2189
      %2213 = vmatprep.subr.bf16.mxu0 0
      %2214 = vmatpush1.bf16.msra.mxu0 %v2190
      %2215 = vmatprep.subr.bf16.mxu0 0
      %2216 = vmatpush1.bf16.msra.mxu0 0
      %2217 = vmatprep.subr.bf16.mxu0 0
      %2218 = vmatpush1.bf16.msra.mxu0 0
      %2219 = vmatprep.subr.bf16.mxu0 0
      %2220 = vmatpush1.bf16.msra.mxu0 0
      %2221 = vmatprep.subr.bf16.mxu0 0
      %2222 = vmatpush1.bf16.msra.mxu0 0
      %2223 = vmatprep.subr.bf16.mxu0 0
      %2224 = vmatpush1.bf16.msra.mxu0 0
      %2225 = vmatprep.subr.bf16.mxu0 0
      %2226 = vmatpush1.bf16.msra.mxu0 0
      %2227 = vmatprep.subr.bf16.mxu0 0
      %2228 = vmatpush1.bf16.msra.mxu0 0
      %2229 = vmatprep.subr.bf16.mxu0 0
      %2230 = vmatpush1.bf16.msra.mxu0 0
      %2231 = vmatprep.mubr.bf16.mxu0 0
      %2232 = vmatmul.mubr.bf16.gmra.mrb[0].mxu0 %v2143
      %v2233 = vpop.f32.mrb[0].mxu0
      %v2234 = vadd.f32 0.0, %v2233
      %v2235 = vpop.f32.mrb[0].mxu0
      %v2236 = vpop.f32.mrb[0].mxu0
      %v2237 = vadd.f32 0.0, %v2236
      %v2238 = vpop.f32.mrb[0].mxu0
      %2239 = vmatprep.mubr.bf16.mxu0 0
      %2240 = vmatmul.mubr.bf16.gmra.mrb[0].mxu0 %v2144
      %v2241 = vpop.f32.mrb[0].mxu0
      %v2242 = vadd.f32 0.0, %v2241
      %v2243 = vpop.f32.mrb[0].mxu0
      %v2244 = vpop.f32.mrb[0].mxu0
      %v2245 = vadd.f32 0.0, %v2244
      %v2246 = vpop.f32.mrb[0].mxu0
      %2247 = vmatprep.mubr.bf16.mxu0 0
      %2248 = vmatmul.mubr.bf16.gmra.mrb[0].mxu0 %v2145
      %v2249 = vpop.f32.mrb[0].mxu0
      %v2250 = vadd.f32 0.0, %v2249
      %v2251 = vpop.f32.mrb[0].mxu0
      %v2252 = vpop.f32.mrb[0].mxu0
      %v2253 = vadd.f32 0.0, %v2252
      %v2254 = vpop.f32.mrb[0].mxu0
      %2255 = vmatprep.mubr.bf16.mxu0 0
      %2256 = vmatmul.mubr.bf16.gmra.mrb[0].mxu0 %v2146
      %v2257 = vpop.f32.mrb[0].mxu0
      %v2258 = vadd.f32 0.0, %v2257
      %v2259 = vpop.f32.mrb[0].mxu0
      %v2260 = vpop.f32.mrb[0].mxu0
      %v2261 = vadd.f32 0.0, %v2260
      %v2262 = vpop.f32.mrb[0].mxu0
      %2263 = vdwg.mxu0
      %v2264 = vld [vmem:[%s322] sm:$0xff]
      %v2265 = vld [vmem:[%s322 + $0x8] sm:$0xff]
      %v2266 = vld [vmem:[%s322 + $0x10] sm:$0xff]
      %v2267 = vld [vmem:[%s322 + $0x18] sm:$0xff]
      %v2268 = vld [vmem:[%s322 + $0x20] sm:$0xff]
      %v2269 = vld [vmem:[%s322 + $0x28] sm:$0xff]
      %v2270 = vld [vmem:[%s322 + $0x30] sm:$0xff]
      %v2271 = vld [vmem:[%s322 + $0x38] sm:$0xff]
      %v2272 = vadd.f32 %v2264, %v2234
      %v2273 = vadd.f32 %v2265, %v2237
      %v2274 = vadd.f32 %v2266, %v2242
      %v2275 = vadd.f32 %v2267, %v2245
      %v2276 = vadd.f32 %v2268, %v2250
      %v2277 = vadd.f32 %v2269, %v2253
      %v2278 = vadd.f32 %v2270, %v2258
      %v2279 = vadd.f32 %v2271, %v2261
      %2280 = vst [vmem:[%s322] sm:$0xff] %v2272
      %2281 = vst [vmem:[%s322 + $0x8] sm:$0xff] %v2273
      %2282 = vst [vmem:[%s322 + $0x10] sm:$0xff] %v2274
      %2283 = vst [vmem:[%s322 + $0x18] sm:$0xff] %v2275
      %2284 = vst [vmem:[%s322 + $0x20] sm:$0xff] %v2276
      %2285 = vst [vmem:[%s322 + $0x28] sm:$0xff] %v2277
      %2286 = vst [vmem:[%s322 + $0x30] sm:$0xff] %v2278
      %2287 = vst [vmem:[%s322 + $0x38] sm:$0xff] %v2279
      %v2288 = vld [vmem:[%s1803] sm:$0xe]
      %v2289 = vld [vmem:[%s1803 + $0x4] sm:$0x1]
      %v2290 = vld [vmem:[%s1803 + $0x8] sm:$0xe]
      %v2291 = vld [vmem:[%s1803 + $0xc] sm:$0x1]
      %v2292 = vld [vmem:[%s1803 + $0x10] sm:$0xe]
      %v2293 = vld [vmem:[%s1803 + $0x14] sm:$0x1]
      %v2294 = vld [vmem:[%s1803 + $0x18] sm:$0xe]
      %v2295 = vld [vmem:[%s1803 + $0x1c] sm:$0x1]
      %v2296 = vld [vmem:[%s1803 + $0x20] sm:$0xe]
      %v2297 = vld [vmem:[%s1803 + $0x24] sm:$0x1]
      %v2298 = vld [vmem:[%s1803 + $0x28] sm:$0xe]
      %v2299 = vld [vmem:[%s1803 + $0x2c] sm:$0x1]
      %v2300 = vld [vmem:[%s1803 + $0x30] sm:$0xe]
      %v2301 = vld [vmem:[%s1803 + $0x34] sm:$0x1]
      %v2302 = vld [vmem:[%s1803 + $0x38] sm:$0xe]
      %v2303 = vld [vmem:[%s1803 + $0x3c] sm:$0x1]
      %v2320 = vrot.slane %v2288, 5
      %v2321 = vrot.slane %v2320, 4
      %v2322 = vrot.slane %v2289, 5
      %v2323 = vsel %vm881, %v2321, %v2322
      %v2324 = vrot.slane %v2290, 5
      %v2325 = vrot.slane %v2324, 4
      %v2326 = vrot.slane %v2291, 5
      %v2327 = vsel %vm881, %v2325, %v2326
      %v2328 = vrot.slane %v2292, 5
      %v2329 = vrot.slane %v2328, 4
      %v2330 = vrot.slane %v2293, 5
      %v2331 = vsel %vm881, %v2329, %v2330
      %v2332 = vrot.slane %v2294, 5
      %v2333 = vrot.slane %v2332, 4
      %v2334 = vrot.slane %v2295, 5
      %v2335 = vsel %vm881, %v2333, %v2334
      %v2336 = vrot.slane %v2296, 5
      %v2337 = vrot.slane %v2336, 4
      %v2338 = vrot.slane %v2297, 5
      %v2339 = vsel %vm881, %v2337, %v2338
      %v2340 = vrot.slane %v2298, 5
      %v2341 = vrot.slane %v2340, 4
      %v2342 = vrot.slane %v2299, 5
      %v2343 = vsel %vm881, %v2341, %v2342
      %v2344 = vrot.slane %v2300, 5
      %v2345 = vrot.slane %v2344, 4
      %v2346 = vrot.slane %v2301, 5
      %v2347 = vsel %vm881, %v2345, %v2346
      %v2348 = vrot.slane %v2302, 5
      %v2349 = vrot.slane %v2348, 4
      %v2350 = vrot.slane %v2303, 5
      %v2351 = vsel %vm881, %v2349, %v2350
      %s2352 = scalar_lea.vmem %s2, 512
      %v2353 = vld [vmem:[%s2352] sm:$0xf]
      %v2354 = vld [vmem:[%s2352 + $0x4] sm:$0xf]
      %v2355 = vld [vmem:[%s2352 + $0x8] sm:$0xf]
      %v2356 = vld [vmem:[%s2352 + $0xc] sm:$0xf]
      %v2357 = vld [vmem:[%s2352 + $0x10] sm:$0xf]
      %v2358 = vld [vmem:[%s2352 + $0x14] sm:$0xf]
      %v2359 = vld [vmem:[%s2352 + $0x18] sm:$0xf]
      %v2360 = vld [vmem:[%s2352 + $0x1c] sm:$0xf]
      %v2361 = vld [vmem:[%s2352 + $0x20] sm:$0xf]
      %v2362 = vld [vmem:[%s2352 + $0x24] sm:$0xf]
      %v2363 = vld [vmem:[%s2352 + $0x28] sm:$0xf]
      %v2364 = vld [vmem:[%s2352 + $0x2c] sm:$0xf]
      %v2365 = vld [vmem:[%s2352 + $0x30] sm:$0xf]
      %v2366 = vld [vmem:[%s2352 + $0x34] sm:$0xf]
      %v2367 = vld [vmem:[%s2352 + $0x38] sm:$0xf]
      %v2368 = vld [vmem:[%s2352 + $0x3c] sm:$0xf]
      %v2369 = vunpack.c.l.b16 %v2323
      %v2370 = vunpack.c.l.b16 %v2327
      %v2371 = vunpack.c.l.b16 %v2331
      %v2372 = vunpack.c.l.b16 %v2335
      %v2373 = vunpack.c.l.b16 %v2339
      %v2374 = vunpack.c.l.b16 %v2343
      %v2375 = vunpack.c.l.b16 %v2347
      %v2376 = vunpack.c.l.b16 %v2351
      %v2377 = vpack.c.b16 %v2370, %v2369
      %v2378 = vpack.c.b16 %v2372, %v2371
      %v2379 = vpack.c.b16 %v2374, %v2373
      %v2380 = vpack.c.b16 %v2376, %v2375
      %v2401 = vunpack.c.l.b16 %v2353
      %v2402 = vunpack.c.l.b16 %v2354
      %v2403 = vunpack.c.l.b16 %v2355
      %v2404 = vunpack.c.l.b16 %v2356
      %v2405 = vunpack.c.l.b16 %v2357
      %v2406 = vunpack.c.l.b16 %v2358
      %v2407 = vunpack.c.l.b16 %v2359
      %v2408 = vunpack.c.l.b16 %v2360
      %v2409 = vunpack.c.l.b16 %v2361
      %v2410 = vunpack.c.l.b16 %v2362
      %v2411 = vunpack.c.l.b16 %v2363
      %v2412 = vunpack.c.l.b16 %v2364
      %v2413 = vunpack.c.l.b16 %v2365
      %v2414 = vunpack.c.l.b16 %v2366
      %v2415 = vunpack.c.l.b16 %v2367
      %v2416 = vunpack.c.l.b16 %v2368
      %v2417 = vpack.c.b16 %v2402, %v2401
      %v2418 = vpack.c.b16 %v2404, %v2403
      %v2419 = vpack.c.b16 %v2406, %v2405
      %v2420 = vpack.c.b16 %v2408, %v2407
      %v2421 = vpack.c.b16 %v2410, %v2409
      %v2422 = vpack.c.b16 %v2412, %v2411
      %v2423 = vpack.c.b16 %v2414, %v2413
      %v2424 = vpack.c.b16 %v2416, %v2415
      %2433 = vmatprep.subr.bf16.mxu0 0
      %2434 = vmatpush1.bf16.msra.mxu0 %v2417
      %2435 = vmatprep.subr.bf16.mxu0 0
      %2436 = vmatpush1.bf16.msra.mxu0 %v2418
      %2437 = vmatprep.subr.bf16.mxu0 0
      %2438 = vmatpush1.bf16.msra.mxu0 %v2419
      %2439 = vmatprep.subr.bf16.mxu0 0
      %2440 = vmatpush1.bf16.msra.mxu0 %v2420
      %2441 = vmatprep.subr.bf16.mxu0 0
      %2442 = vmatpush1.bf16.msra.mxu0 %v2421
      %2443 = vmatprep.subr.bf16.mxu0 0
      %2444 = vmatpush1.bf16.msra.mxu0 %v2422
      %2445 = vmatprep.subr.bf16.mxu0 0
      %2446 = vmatpush1.bf16.msra.mxu0 %v2423
      %2447 = vmatprep.subr.bf16.mxu0 0
      %2448 = vmatpush1.bf16.msra.mxu0 %v2424
      %2449 = vmatprep.subr.bf16.mxu0 0
      %2450 = vmatpush1.bf16.msra.mxu0 0
      %2451 = vmatprep.subr.bf16.mxu0 0
      %2452 = vmatpush1.bf16.msra.mxu0 0
      %2453 = vmatprep.subr.bf16.mxu0 0
      %2454 = vmatpush1.bf16.msra.mxu0 0
      %2455 = vmatprep.subr.bf16.mxu0 0
      %2456 = vmatpush1.bf16.msra.mxu0 0
      %2457 = vmatprep.subr.bf16.mxu0 0
      %2458 = vmatpush1.bf16.msra.mxu0 0
      %2459 = vmatprep.subr.bf16.mxu0 0
      %2460 = vmatpush1.bf16.msra.mxu0 0
      %2461 = vmatprep.subr.bf16.mxu0 0
      %2462 = vmatpush1.bf16.msra.mxu0 0
      %2463 = vmatprep.subr.bf16.mxu0 0
      %2464 = vmatpush1.bf16.msra.mxu0 0
      %2465 = vmatprep.mubr.bf16.mxu0 0
      %2466 = vmatmul.mubr.bf16.gmra.mrb[0].mxu0 %v2377
      %v2467 = vpop.f32.mrb[0].mxu0
      %v2468 = vadd.f32 0.0, %v2467
      %v2469 = vpop.f32.mrb[0].mxu0
      %v2470 = vpop.f32.mrb[0].mxu0
      %v2471 = vadd.f32 0.0, %v2470
      %v2472 = vpop.f32.mrb[0].mxu0
      %2473 = vmatprep.mubr.bf16.mxu0 0
      %2474 = vmatmul.mubr.bf16.gmra.mrb[0].mxu0 %v2378
      %v2475 = vpop.f32.mrb[0].mxu0
      %v2476 = vadd.f32 0.0, %v2475
      %v2477 = vpop.f32.mrb[0].mxu0
      %v2478 = vpop.f32.mrb[0].mxu0
      %v2479 = vadd.f32 0.0, %v2478
      %v2480 = vpop.f32.mrb[0].mxu0
      %2481 = vmatprep.mubr.bf16.mxu0 0
      %2482 = vmatmul.mubr.bf16.gmra.mrb[0].mxu0 %v2379
      %v2483 = vpop.f32.mrb[0].mxu0
      %v2484 = vadd.f32 0.0, %v2483
      %v2485 = vpop.f32.mrb[0].mxu0
      %v2486 = vpop.f32.mrb[0].mxu0
      %v2487 = vadd.f32 0.0, %v2486
      %v2488 = vpop.f32.mrb[0].mxu0
      %2489 = vmatprep.mubr.bf16.mxu0 0
      %2490 = vmatmul.mubr.bf16.gmra.mrb[0].mxu0 %v2380
      %v2491 = vpop.f32.mrb[0].mxu0
      %v2492 = vadd.f32 0.0, %v2491
      %v2493 = vpop.f32.mrb[0].mxu0
      %v2494 = vpop.f32.mrb[0].mxu0
      %v2495 = vadd.f32 0.0, %v2494
      %v2496 = vpop.f32.mrb[0].mxu0
      %2497 = vdwg.mxu0
      %v2498 = vld [vmem:[%s322] sm:$0xff]
      %v2499 = vld [vmem:[%s322 + $0x8] sm:$0xff]
      %v2500 = vld [vmem:[%s322 + $0x10] sm:$0xff]
      %v2501 = vld [vmem:[%s322 + $0x18] sm:$0xff]
      %v2502 = vld [vmem:[%s322 + $0x20] sm:$0xff]
      %v2503 = vld [vmem:[%s322 + $0x28] sm:$0xff]
      %v2504 = vld [vmem:[%s322 + $0x30] sm:$0xff]
      %v2505 = vld [vmem:[%s322 + $0x38] sm:$0xff]
      %v2506 = vadd.f32 %v2498, %v2468
      %v2507 = vadd.f32 %v2499, %v2471
      %v2508 = vadd.f32 %v2500, %v2476
      %v2509 = vadd.f32 %v2501, %v2479
      %v2510 = vadd.f32 %v2502, %v2484
      %v2511 = vadd.f32 %v2503, %v2487
      %v2512 = vadd.f32 %v2504, %v2492
      %v2513 = vadd.f32 %v2505, %v2495
      %2514 = vst [vmem:[%s322] sm:$0xff] %v2506
      %2515 = vst [vmem:[%s322 + $0x8] sm:$0xff] %v2507
      %2516 = vst [vmem:[%s322 + $0x10] sm:$0xff] %v2508
      %2517 = vst [vmem:[%s322 + $0x18] sm:$0xff] %v2509
      %2518 = vst [vmem:[%s322 + $0x20] sm:$0xff] %v2510
      %2519 = vst [vmem:[%s322 + $0x28] sm:$0xff] %v2511
      %2520 = vst [vmem:[%s322 + $0x30] sm:$0xff] %v2512
      %2521 = vst [vmem:[%s322 + $0x38] sm:$0xff] %v2513
      %v2522 = vld [vmem:[%s322] sm:$0xff]
      %v2523 = vld [vmem:[%s322 + $0x8] sm:$0xff]
      %v2524 = vld [vmem:[%s322 + $0x10] sm:$0xff]
      %v2525 = vld [vmem:[%s322 + $0x18] sm:$0xff]
      %v2526 = vld [vmem:[%s322 + $0x20] sm:$0xff]
      %v2527 = vld [vmem:[%s322 + $0x28] sm:$0xff]
      %v2528 = vld [vmem:[%s322 + $0x30] sm:$0xff]
      %v2529 = vld [vmem:[%s322 + $0x38] sm:$0xff]
      %v2530 = vadd.f32 %v2522, %v2523
      %v2531 = vadd.f32 %v2530, %v2524
      %v2532 = vadd.f32 %v2531, %v2525
      %v2533 = vadd.f32 %v2532, %v2526
      %v2534 = vadd.f32 %v2533, %v2527
      %v2535 = vadd.f32 %v2534, %v2528
      %v2536 = vadd.f32 %v2535, %v2529
      %v2537 = vrot.slane %v2536, 4
      %v2538 = vadd.f32 %v2536, %v2537
      %v2539 = vrot.slane %v2538, 2
      %v2540 = vadd.f32 %v2538, %v2539
      %v2541 = vrot.slane %v2540, 1
      %v2542 = vadd.f32 %v2540, %v2541
      %2543 = vst [vmem:[%s328] sm:$0x1] %v2542
      %v2544 = vmul.f32 %v2522, %v2522
      %v2545 = vmul.f32 %v2523, %v2523
      %v2546 = vmul.f32 %v2524, %v2524
      %v2547 = vmul.f32 %v2525, %v2525
      %v2548 = vmul.f32 %v2526, %v2526
      %v2549 = vmul.f32 %v2527, %v2527
      %v2550 = vmul.f32 %v2528, %v2528
      %v2551 = vmul.f32 %v2529, %v2529
      %v2552 = vadd.f32 %v2544, %v2545
      %v2553 = vadd.f32 %v2552, %v2546
      %v2554 = vadd.f32 %v2553, %v2547
      %v2555 = vadd.f32 %v2554, %v2548
      %v2556 = vadd.f32 %v2555, %v2549
      %v2557 = vadd.f32 %v2556, %v2550
      %v2558 = vadd.f32 %v2557, %v2551
      %v2559 = vrot.slane %v2558, 4
      %v2560 = vadd.f32 %v2558, %v2559
      %v2561 = vrot.slane %v2560, 2
      %v2562 = vadd.f32 %v2560, %v2561
      %v2563 = vrot.slane %v2562, 1
      %v2564 = vadd.f32 %v2562, %v2563
      %2565 = vst [vmem:[%s333] sm:$0x1] %v2564
      %s2566 = sadd.s32 %s21, %s22
      %s2567 = smul.u32 8, %s2566
      %p2568 = scmp.lt.s32.totalorder %s2567, 15
      %s2569 = scalar_select %p2568, %s2567, 15
      %s2570 = smul.addr %s2569, 8
      %s2571 = scalar_lea.vmem %s3, %s2570
      %s2572 = sadd.s32 %s21, %s22
      %p2573 = scmp.lt.s32.totalorder %s2572, 1
      %s2574 = scalar_select %p2573, %s2572, 1
      %s2575 = scalar_lea.vmem %s4, %s2574
      %s2576 = sadd.s32 %s21, %s22
      %p2577 = scmp.lt.s32.totalorder %s2576, 1
      %s2578 = scalar_select %p2577, %s2576, 1
      %s2579 = scalar_lea.vmem %s5, %s2578
      // Predicated region
      $region33: #{downsample_forward.8} parent=31 // pred_check
        %p2580 = pneg %p128
      $region34: #{downsample_forward.8} parent=31 // pred_check_branch
        %2582 = sbr.rel (%p2580) target = $region36
      $region35: #{downsample_forward.8} parent=31 // pred_region
        %s2583 = sadd.s32 %s21, %s22
        %s2584 = smul.u32 8, %s2583
      $region36: #{downsample_forward.8} parent=31 // pred_fallthru
        _
      // Predicated region
      $region37: #{downsample_forward.8} parent=31 // pred_check
        %p2585 = pneg %p156
      $region38: #{downsample_forward.8} parent=31 // pred_check_branch
        %2587 = sbr.rel (%p2585) target = $region40
      $region39: #{downsample_forward.8} parent=31 // pred_region
        %s2588 = sadd.s32 %s21, %s22
      $region40: #{downsample_forward.8} parent=31 // pred_fallthru
        _
      // Predicated region
      $region41: #{downsample_forward.8} parent=31 // pred_check
        %p2589 = pneg %p184
      $region42: #{downsample_forward.8} parent=31 // pred_check_branch
        %2591 = sbr.rel (%p2589) target = $region44
      $region43: #{downsample_forward.8} parent=31 // pred_region
        %s2592 = sadd.s32 %s21, %s22
      $region44: #{downsample_forward.8} parent=31 // pred_fallthru
        _
    $region32: #{downsample_forward.8} parent=5 // pred_fallthru
      _
    %p2593 = scmp.le.s32.totalorder 2, %s12
    // Predicated region
    $region45: #{downsample_forward.8} parent=5 // pred_check
      %p2594 = pneg %p2593
    $region46: #{downsample_forward.8} parent=5 // pred_check_branch
      %2596 = sbr.rel (%p2594) target = $region48
    $region47: #{downsample_forward.8} parent=5 // pred_region
      %s2597 = ssub.s32 %s12, 2
      // Predicated region
      $region49: #{downsample_forward.8} parent=47 // pred_check
        %p2598 = pneg %p134
      $region50: #{downsample_forward.8} parent=47 // pred_check_branch
        %2600 = sbr.rel (%p2598) target = $region52
      $region51: #{downsample_forward.8} parent=47 // pred_region
        %s2601 = sadd.s32 %s23, %s24
        %s2602 = smul.u32 8, %s2601
        %p2603 = scmp.lt.s32.totalorder %s2602, 15
        %s2604 = scalar_select %p2603, %s2602, 15
        %s2605 = smul.addr %s2604, 8
        %s2606 = scalar_lea.vmem %s3, %s2605
      $region52: #{downsample_forward.8} parent=47 // pred_fallthru
        _
      // Predicated region
      $region53: #{downsample_forward.8} parent=47 // pred_check
        %p2607 = pneg %p162
      $region54: #{downsample_forward.8} parent=47 // pred_check_branch
        %2609 = sbr.rel (%p2607) target = $region56
      $region55: #{downsample_forward.8} parent=47 // pred_region
        %s2610 = sadd.s32 %s23, %s24
        %p2611 = scmp.lt.s32.totalorder %s2610, 1
        %s2612 = scalar_select %p2611, %s2610, 1
        %s2613 = scalar_lea.vmem %s4, %s2612
      $region56: #{downsample_forward.8} parent=47 // pred_fallthru
        _
      // Predicated region
      $region57: #{downsample_forward.8} parent=47 // pred_check
        %p2614 = pneg %p190
      $region58: #{downsample_forward.8} parent=47 // pred_check_branch
        %2616 = sbr.rel (%p2614) target = $region60
      $region59: #{downsample_forward.8} parent=47 // pred_region
        %s2617 = sadd.s32 %s23, %s24
        %p2618 = scmp.lt.s32.totalorder %s2617, 1
        %s2619 = scalar_select %p2618, %s2617, 1
        %s2620 = scalar_lea.vmem %s5, %s2619
      $region60: #{downsample_forward.8} parent=47 // pred_fallthru
        _
    $region48: #{downsample_forward.8} parent=5 // pred_fallthru
      _
  $region6: #{downsample_forward.8} parent=0 // loop_footer
    %s16 = sadd.s32 1, %s12
  $region7: #{downsample_forward.8} parent=0 // loop_footer_branch
    %11 = sbr.rel target = $region3
  $region8: #{downsample_forward.8} parent=0 // loop_exit
    _

</llo_original>
